<compile_context>
chip_gen: v5e
topology: v5e:2x2
jax: 0.10.0
libtpu: 0.0.40
codegen_flags: <defaults>
</compile_context>

<pallas_src>
import jax
import jax.numpy as jnp
from jax.experimental import pallas as pl
from jax.experimental.pallas import tpu as pltpu


# ----------------------------------------------------------------------------
# Kernel 1: stand-in feature extractor (channels-major, lane-dense on H*W).
#   x_ref: (nb, Cin, HW)   w_ref: (Cin, C, 1)   o_ref: (nb, C, 1)
# ----------------------------------------------------------------------------
def _stem_kernel(x_ref, w_ref, o_ref):
    nb, cin, _ = x_ref.shape
    for b in range(nb):                                   # static unroll (nb <= 8)
        x = x_ref[b]                                      # (Cin, HW)
        h = w_ref[0] * x[0:1, :]                          # (C,1)*(1,HW) -> (C,HW)
        for ci in range(1, cin):                          # Cin is tiny (3): VPU MAC
            h = h + w_ref[ci] * x[ci:ci + 1, :]
        h = jnp.maximum(h, 0.0)                           # ReLU => feat >= 0
        o_ref[b] = jnp.mean(h, axis=1, keepdims=True)     # (C, 1)


def stem_forward(x_cmajor, stem_w3):
    # x_cmajor: (N, Cin, HW) f32, stem_w3: (Cin, C, 1) f32 -> (N, C, 1) f32
    n, cin, hw = x_cmajor.shape
    c = stem_w3.shape[1]
    nb = n if n <= 8 else 8
    assert n % nb == 0
    return pl.pallas_call(
        _stem_kernel,
        out_shape=jax.ShapeDtypeStruct((n, c, 1), jnp.float32),
        grid=(n // nb,),
        in_specs=[
            pl.BlockSpec((nb, cin, hw), lambda i: (i, 0, 0)),
            pl.BlockSpec((cin, c, 1), lambda i: (0, 0, 0)),
        ],
        out_specs=pl.BlockSpec((nb, c, 1), lambda i: (i, 0, 0)),
        compiler_params=pltpu.CompilerParams(
            dimension_semantics=("parallel",)),
    )(x_cmajor, stem_w3)


# ----------------------------------------------------------------------------
# Kernel 2: FUSED bilinear pooling + L2 normalization + FC.
#   feat_ref:  (nb, C)        f32   resident feature block
#   fcols_ref: (tr, nb, 1)    f32   row-factor slice for this k tile
#   w3_ref:    (tr, ncls, C)  bf16  FC weight tile (lane-dense on C)
#   b_ref:     (1, ncls)      f32   bias
#   o_ref:     (nb, ncls)     f32
#   acc_ref:   (nb, ncls)     f32   VMEM accumulator (persists over k)
# ----------------------------------------------------------------------------
def _fused_head_kernel(feat_ref, fcols_ref, w3_ref, b_ref, o_ref, acc_ref):
    k = pl.program_id(1)
    tr = fcols_ref.shape[0]
    c = feat_ref.shape[1]
    eps = 1e-5

    @pl.when(k == 0)
    def _():
        acc_ref[...] = jnp.zeros_like(acc_ref)

    f_full = feat_ref[...]                                # (nb, C)
    for r in range(tr):                                   # static unroll over rows
        f_col = fcols_ref[r]                              # (nb, 1)
        z_r = jnp.sqrt(f_col * f_full + eps)              # (nb, C) on-the-fly z slice
        w_r = w3_ref[r].astype(jnp.float32)               # (ncls, C) bf16 -> f32
        # NT matmul: contract the lane-dense C axis of both operands.
        acc_ref[...] += jax.lax.dot_general(
            z_r, w_r,
            dimension_numbers=(((1,), (1,)), ((), ())),
            preferred_element_type=jnp.float32)

    @pl.when(k == pl.num_programs(1) - 1)
    def _():
        # Closed-form ||z||: sum_ij (f_i f_j + eps) = (sum_i f_i)^2 + eps*C^2.
        s = jnp.sum(f_full, axis=1, keepdims=True)        # (nb, 1)
        nrm = jnp.sqrt(s * s + eps * float(c * c))
        inv = pl.reciprocal(jnp.maximum(nrm, 1e-12), approx=True)
        o_ref[...] = (acc_ref[...] * inv + b_ref[...]).astype(o_ref.dtype)


def fused_bilinear_fc(feat, feat_cols, w3_bf16, bias, *, tr=32):
    # feat: (N, C) f32, feat_cols: (C, N, 1) f32, w3_bf16: (C, ncls, C) bf16,
    # bias: (1, ncls) f32 -> (N, ncls) f32
    n, c = feat.shape
    ncls = w3_bf16.shape[1]
    nb = n if n <= 8 else 8
    assert n % nb == 0
    tr = min(tr, c)
    assert c % tr == 0
    return pl.pallas_call(
        _fused_head_kernel,
        out_shape=jax.ShapeDtypeStruct((n, ncls), jnp.float32),
        grid=(n // nb, c // tr),
        in_specs=[
            pl.BlockSpec((nb, c), lambda b, k: (b, 0)),
            pl.BlockSpec((tr, nb, 1), lambda b, k: (k, b, 0)),
            pl.BlockSpec((tr, ncls, c), lambda b, k: (k, 0, 0)),
            pl.BlockSpec((1, ncls), lambda b, k: (0, 0)),
        ],
        out_specs=pl.BlockSpec((nb, ncls), lambda b, k: (b, 0)),
        scratch_shapes=[pltpu.VMEM((nb, ncls), jnp.float32)],
        compiler_params=pltpu.CompilerParams(
            dimension_semantics=("parallel", "arbitrary"),
            vmem_limit_bytes=64 * 1024 * 1024),
    )(feat, feat_cols, w3_bf16, bias)


# ----------------------------------------------------------------------------
# Full forward (glue in plain JAX, hot path in Pallas).
# ----------------------------------------------------------------------------
@jax.jit
def classifier_forward(x_nchw, stem_w, fc_w3_bf16, fc_b):
    n, cin, h, w = x_nchw.shape
    c = stem_w.shape[1]
    # NCHW -> channels-major (N, Cin, H*W): H*W sits on the lane dimension.
    x_cmajor = x_nchw.reshape(n, cin, h * w)
    feat3 = stem_forward(x_cmajor, stem_w[:, :, None])     # (N, C, 1), feat >= 0
    feat = feat3.reshape(n, c)                             # (N, C)
    feat_cols = jnp.transpose(feat3, (1, 0, 2))            # (C, N, 1)  (tiny)
    return fused_bilinear_fc(feat, feat_cols, fc_w3_bf16, fc_b)


def reference_forward(x_nchw, stem_w, fc_w3_bf16, fc_b):
    n, cin, h, w = x_nchw.shape
    c = stem_w.shape[1]
    x_flat = x_nchw.reshape(n, cin, h * w)
    hproj = jnp.maximum(jnp.einsum("cd,nch->ndh", stem_w, x_flat), 0.0)
    feat = hproj.mean(axis=2)                                      # (N, C)
    g = feat[:, :, None] * feat[:, None, :]                        # (N, C, C)
    z = jnp.sqrt(g + 1e-5).reshape(n, c * c)
    nrm = jnp.maximum(jnp.linalg.norm(z, axis=1, keepdims=True), 1e-12)
    z = z / nrm
    w2d = jnp.transpose(fc_w3_bf16.astype(jnp.float32), (0, 2, 1)).reshape(c * c, -1)
    return z @ w2d + fc_b


if __name__ == "__main__":
    # Small shapes consistent with the module's forward:
    #   X: (N, 3, input_size, input_size); feature dim C stands in for 2048.
    N, CIN, INPUT_SIZE = 2, 3, 16
    C = 128                    # stand-in for ResNet-50's 2048 feature channels
    NUM_CLS = 8
    K = C * C

    key = jax.random.PRNGKey(0)
    kx, kstem, kfc = jax.random.split(key, 3)

    x = jax.random.normal(kx, (N, CIN, INPUT_SIZE, INPUT_SIZE), jnp.float32)

    # Deterministic parameter init.
    stem_w = jax.random.normal(kstem, (CIN, C), jnp.float32) * 0.1   # (Cin, C)

    # fc: kaiming_normal_(weight) with fan_in = C*C, bias = 0 (as in __init__).
    fc_w = jax.random.normal(kfc, (NUM_CLS, K), jnp.float32) * jnp.sqrt(2.0 / K)
    # Stored as (C_row, num_cls, C_col) bf16 so the fused kernel streams
    # lane-dense row-tiles directly; bf16 halves the dominant HBM traffic.
    fc_w3 = jnp.transpose(fc_w.reshape(NUM_CLS, C, C), (1, 0, 2)).astype(jnp.bfloat16)
    fc_b = jnp.zeros((1, NUM_CLS), jnp.float32)

    out = classifier_forward(x, stem_w, fc_w3, fc_b)
    out = jax.block_until_ready(out)
    assert out.shape == (N, NUM_CLS)

    ref = reference_forward(x, stem_w, fc_w3, fc_b)
    assert jnp.allclose(out, ref, rtol=1e-3, atol=1e-3), (out, ref)

    print("KERNEL_OK")
</pallas_src>

<mosaic_0001>
module attributes {stable_mosaic.version = 11 : i64} {
  func.func @_stem_kernel(%arg0: i32, %arg1: memref<2x3x256xf32, #tpu.memory_space<vmem>>, %arg2: memref<3x128x1xf32, #tpu.memory_space<vmem>>, %arg3: memref<2x128x1xf32, #tpu.memory_space<vmem>>) attributes {dimension_semantics = [#tpu.dimension_semantics<parallel>], iteration_bounds = array<i64: 1>, scalar_prefetch = 0 : i64, scratch_operands = 0 : i64, tpu.core_type = #tpu.core_type<tc>, window_params = [{transform_indices = @transform_0, window_bounds = array<i64: 2, 3, 256>}, {pipeline_mode = #tpu.pipeline_mode<synchronous>, transform_indices = @transform_1, window_bounds = array<i64: 3, 128, 1>}, {transform_indices = @transform_2, window_bounds = array<i64: 2, 128, 1>}]} {
    %c0 = arith.constant 0 : index
    %c0_0 = arith.constant 0 : index
    %c0_1 = arith.constant 0 : index
    %0 = vector.load %arg1[%c0, %c0_0, %c0_1] : memref<2x3x256xf32, #tpu.memory_space<vmem>>, vector<1x3x256xf32>
    %1 = vector.shape_cast %0 : vector<1x3x256xf32> to vector<3x256xf32>
    %c0_2 = arith.constant 0 : index
    %c0_3 = arith.constant 0 : index
    %c0_4 = arith.constant 0 : index
    %2 = vector.load %arg2[%c0_2, %c0_3, %c0_4] : memref<3x128x1xf32, #tpu.memory_space<vmem>>, vector<1x128x1xf32>
    %3 = vector.shape_cast %2 : vector<1x128x1xf32> to vector<128x1xf32>
    %4 = vector.extract_strided_slice %1 {offsets = [0, 0], sizes = [1, 256], strides = [1, 1]} : vector<3x256xf32> to vector<1x256xf32>
    %5 = vector.broadcast %3 : vector<128x1xf32> to vector<128x256xf32>
    %6 = vector.broadcast %4 : vector<1x256xf32> to vector<128x256xf32>
    %7 = arith.mulf %5, %6 : vector<128x256xf32>
    %c1 = arith.constant 1 : index
    %c0_5 = arith.constant 0 : index
    %c0_6 = arith.constant 0 : index
    %8 = vector.load %arg2[%c1, %c0_5, %c0_6] : memref<3x128x1xf32, #tpu.memory_space<vmem>>, vector<1x128x1xf32>
    %9 = vector.shape_cast %8 : vector<1x128x1xf32> to vector<128x1xf32>
    %10 = vector.extract_strided_slice %1 {offsets = [1, 0], sizes = [1, 256], strides = [1, 1]} : vector<3x256xf32> to vector<1x256xf32>
    %11 = vector.broadcast %9 : vector<128x1xf32> to vector<128x256xf32>
    %12 = vector.broadcast %10 : vector<1x256xf32> to vector<128x256xf32>
    %13 = arith.mulf %11, %12 : vector<128x256xf32>
    %14 = arith.addf %7, %13 : vector<128x256xf32>
    %c2 = arith.constant 2 : index
    %c0_7 = arith.constant 0 : index
    %c0_8 = arith.constant 0 : index
    %15 = vector.load %arg2[%c2, %c0_7, %c0_8] : memref<3x128x1xf32, #tpu.memory_space<vmem>>, vector<1x128x1xf32>
    %16 = vector.shape_cast %15 : vector<1x128x1xf32> to vector<128x1xf32>
    %17 = vector.extract_strided_slice %1 {offsets = [2, 0], sizes = [1, 256], strides = [1, 1]} : vector<3x256xf32> to vector<1x256xf32>
    %18 = vector.broadcast %16 : vector<128x1xf32> to vector<128x256xf32>
    %19 = vector.broadcast %17 : vector<1x256xf32> to vector<128x256xf32>
    %20 = arith.mulf %18, %19 : vector<128x256xf32>
    %21 = arith.addf %14, %20 : vector<128x256xf32>
    %cst = arith.constant 0.000000e+00 : f32
    %22 = vector.broadcast %cst : f32 to vector<128x256xf32>
    %23 = arith.maximumf %21, %22 : vector<128x256xf32>
    %cst_9 = arith.constant dense<0.000000e+00> : vector<128xf32>
    %24 = vector.multi_reduction <add>, %23, %cst_9 [1] : vector<128x256xf32> to vector<128xf32>
    %25 = vector.shape_cast %24 : vector<128xf32> to vector<128x1xf32>
    %cst_10 = arith.constant 2.560000e+02 : f32
    %26 = vector.broadcast %cst_10 : f32 to vector<128x1xf32>
    %27 = arith.divf %25, %26 : vector<128x1xf32>
    %c0_11 = arith.constant 0 : index
    %c0_12 = arith.constant 0 : index
    %c0_13 = arith.constant 0 : index
    %28 = vector.load %arg3[%c0_11, %c0_12, %c0_13] : memref<2x128x1xf32, #tpu.memory_space<vmem>>, vector<1x128x1xf32>
    %29 = vector.shape_cast %28 : vector<1x128x1xf32> to vector<128x1xf32>
    %30 = vector.shape_cast %27 : vector<128x1xf32> to vector<1x128x1xf32>
    tpu.vector_store %arg3[%c0_11, %c0_12, %c0_13], %30 {strides = array<i32>} : memref<2x128x1xf32, #tpu.memory_space<vmem>>, vector<1x128x1xf32>,
    %c1_14 = arith.constant 1 : index
    %c0_15 = arith.constant 0 : index
    %c0_16 = arith.constant 0 : index
    %31 = vector.load %arg1[%c1_14, %c0_15, %c0_16] : memref<2x3x256xf32, #tpu.memory_space<vmem>>, vector<1x3x256xf32>
    %32 = vector.shape_cast %31 : vector<1x3x256xf32> to vector<3x256xf32>
    %c0_17 = arith.constant 0 : index
    %c0_18 = arith.constant 0 : index
    %c0_19 = arith.constant 0 : index
    %33 = vector.load %arg2[%c0_17, %c0_18, %c0_19] : memref<3x128x1xf32, #tpu.memory_space<vmem>>, vector<1x128x1xf32>
    %34 = vector.shape_cast %33 : vector<1x128x1xf32> to vector<128x1xf32>
    %35 = vector.extract_strided_slice %32 {offsets = [0, 0], sizes = [1, 256], strides = [1, 1]} : vector<3x256xf32> to vector<1x256xf32>
    %36 = vector.broadcast %34 : vector<128x1xf32> to vector<128x256xf32>
    %37 = vector.broadcast %35 : vector<1x256xf32> to vector<128x256xf32>
    %38 = arith.mulf %36, %37 : vector<128x256xf32>
    %c1_20 = arith.constant 1 : index
    %c0_21 = arith.constant 0 : index
    %c0_22 = arith.constant 0 : index
    %39 = vector.load %arg2[%c1_20, %c0_21, %c0_22] : memref<3x128x1xf32, #tpu.memory_space<vmem>>, vector<1x128x1xf32>
    %40 = vector.shape_cast %39 : vector<1x128x1xf32> to vector<128x1xf32>
    %41 = vector.extract_strided_slice %32 {offsets = [1, 0], sizes = [1, 256], strides = [1, 1]} : vector<3x256xf32> to vector<1x256xf32>
    %42 = vector.broadcast %40 : vector<128x1xf32> to vector<128x256xf32>
    %43 = vector.broadcast %41 : vector<1x256xf32> to vector<128x256xf32>
    %44 = arith.mulf %42, %43 : vector<128x256xf32>
    %45 = arith.addf %38, %44 : vector<128x256xf32>
    %c2_23 = arith.constant 2 : index
    %c0_24 = arith.constant 0 : index
    %c0_25 = arith.constant 0 : index
    %46 = vector.load %arg2[%c2_23, %c0_24, %c0_25] : memref<3x128x1xf32, #tpu.memory_space<vmem>>, vector<1x128x1xf32>
    %47 = vector.shape_cast %46 : vector<1x128x1xf32> to vector<128x1xf32>
    %48 = vector.extract_strided_slice %32 {offsets = [2, 0], sizes = [1, 256], strides = [1, 1]} : vector<3x256xf32> to vector<1x256xf32>
    %49 = vector.broadcast %47 : vector<128x1xf32> to vector<128x256xf32>
    %50 = vector.broadcast %48 : vector<1x256xf32> to vector<128x256xf32>
    %51 = arith.mulf %49, %50 : vector<128x256xf32>
    %52 = arith.addf %45, %51 : vector<128x256xf32>
    %cst_26 = arith.constant 0.000000e+00 : f32
    %53 = vector.broadcast %cst_26 : f32 to vector<128x256xf32>
    %54 = arith.maximumf %52, %53 : vector<128x256xf32>
    %cst_27 = arith.constant dense<0.000000e+00> : vector<128xf32>
    %55 = vector.multi_reduction <add>, %54, %cst_27 [1] : vector<128x256xf32> to vector<128xf32>
    %56 = vector.shape_cast %55 : vector<128xf32> to vector<128x1xf32>
    %cst_28 = arith.constant 2.560000e+02 : f32
    %57 = vector.broadcast %cst_28 : f32 to vector<128x1xf32>
    %58 = arith.divf %56, %57 : vector<128x1xf32>
    %c1_29 = arith.constant 1 : index
    %c0_30 = arith.constant 0 : index
    %c0_31 = arith.constant 0 : index
    %59 = vector.load %arg3[%c1_29, %c0_30, %c0_31] : memref<2x128x1xf32, #tpu.memory_space<vmem>>, vector<1x128x1xf32>
    %60 = vector.shape_cast %59 : vector<1x128x1xf32> to vector<128x1xf32>
    %61 = vector.shape_cast %58 : vector<128x1xf32> to vector<1x128x1xf32>
    tpu.vector_store %arg3[%c1_29, %c0_30, %c0_31], %61 {strides = array<i32>} : memref<2x128x1xf32, #tpu.memory_space<vmem>>, vector<1x128x1xf32>,
    return
  }
  func.func @transform_0(%arg0: i32) -> (i32, i32, i32) {
    %c0_i32 = arith.constant 0 : i32
    %c0_i32_0 = arith.constant 0 : i32
    %c0_i32_1 = arith.constant 0 : i32
    return %arg0, %c0_i32, %c0_i32_0 : i32, i32, i32
  }
  func.func @transform_1(%arg0: i32) -> (i32, i32, i32) {
    %c0_i32 = arith.constant 0 : i32
    %c0_i32_0 = arith.constant 0 : i32
    %c0_i32_1 = arith.constant 0 : i32
    %c0_i32_2 = arith.constant 0 : i32
    return %c0_i32, %c0_i32_0, %c0_i32_1 : i32, i32, i32
  }
  func.func @transform_2(%arg0: i32) -> (i32, i32, i32) {
    %c0_i32 = arith.constant 0 : i32
    %c0_i32_0 = arith.constant 0 : i32
    %c0_i32_1 = arith.constant 0 : i32
    return %arg0, %c0_i32, %c0_i32_0 : i32, i32, i32
  }
}

module attributes {stable_mosaic.version = 11 : i64} {
  func.func @_fused_head_kernel(%arg0: i32, %arg1: i32, %arg2: memref<2x128xf32, #tpu.memory_space<vmem>>, %arg3: memref<32x2x1xf32, #tpu.memory_space<vmem>>, %arg4: memref<32x8x128xbf16, #tpu.memory_space<vmem>>, %arg5: memref<1x8xf32, #tpu.memory_space<vmem>>, %arg6: memref<2x8xf32, #tpu.memory_space<vmem>>, %arg7: memref<2x8xf32, #tpu.memory_space<vmem>>) attributes {dimension_semantics = [#tpu.dimension_semantics<parallel>, #tpu.dimension_semantics<arbitrary>], iteration_bounds = array<i64: 1, 4>, scalar_prefetch = 0 : i64, scratch_operands = 1 : i64, tpu.core_type = #tpu.core_type<tc>, window_params = [{transform_indices = @transform_0, window_bounds = array<i64: 2, 128>}, {transform_indices = @transform_1, window_bounds = array<i64: 32, 2, 1>}, {transform_indices = @transform_2, window_bounds = array<i64: 32, 8, 128>}, {pipeline_mode = #tpu.pipeline_mode<synchronous>, transform_indices = @transform_3, window_bounds = array<i64: 1, 8>}, {transform_indices = @transform_4, window_bounds = array<i64: 2, 8>}]} {
    %c0_i32 = arith.constant 0 : i32
    %0 = arith.cmpi eq, %arg1, %c0_i32 : i32
    %1 = arith.extui %0 : i1 to i32
    %c0_i32_0 = arith.constant 0 : i32
    %2 = arith.cmpi ne, %1, %c0_i32_0 : i32
    scf.if %2 {
      %cst_355 = arith.constant 0.000000e+00 : f32
      %455 = vector.broadcast %cst_355 : f32 to vector<2x8xf32>
      %c0_356 = arith.constant 0 : index
      %c0_357 = arith.constant 0 : index
      %456 = vector.load %arg7[%c0_356, %c0_357] : memref<2x8xf32, #tpu.memory_space<vmem>>, vector<2x8xf32>
      tpu.vector_store %arg7[%c0_356, %c0_357], %455 {strides = array<i32>} : memref<2x8xf32, #tpu.memory_space<vmem>>, vector<2x8xf32>,
    } else {
    }
    %c0 = arith.constant 0 : index
    %c0_1 = arith.constant 0 : index
    %3 = vector.load %arg2[%c0, %c0_1] : memref<2x128xf32, #tpu.memory_space<vmem>>, vector<2x128xf32>
    %c0_2 = arith.constant 0 : index
    %c0_3 = arith.constant 0 : index
    %c0_4 = arith.constant 0 : index
    %4 = vector.load %arg3[%c0_2, %c0_3, %c0_4] : memref<32x2x1xf32, #tpu.memory_space<vmem>>, vector<1x2x1xf32>
    %5 = vector.shape_cast %4 : vector<1x2x1xf32> to vector<2x1xf32>
    %6 = vector.broadcast %5 : vector<2x1xf32> to vector<2x128xf32>
    %7 = arith.mulf %6, %3 : vector<2x128xf32>
    %cst = arith.constant 9.99999974E-6 : f32
    %8 = vector.broadcast %cst : f32 to vector<2x128xf32>
    %9 = arith.addf %7, %8 : vector<2x128xf32>
    %10 = math.sqrt %9 : vector<2x128xf32>
    %c0_5 = arith.constant 0 : index
    %c0_6 = arith.constant 0 : index
    %c0_7 = arith.constant 0 : index
    %11 = vector.load %arg4[%c0_5, %c0_6, %c0_7] : memref<32x8x128xbf16, #tpu.memory_space<vmem>>, vector<1x8x128xbf16>
    %12 = vector.shape_cast %11 : vector<1x8x128xbf16> to vector<8x128xbf16>
    %13 = arith.extf %12 : vector<8x128xbf16> to vector<8x128xf32>
    %c0_8 = arith.constant 0 : index
    %c0_9 = arith.constant 0 : index
    %14 = vector.load %arg7[%c0_8, %c0_9] : memref<2x8xf32, #tpu.memory_space<vmem>>, vector<2x8xf32>
    %cst_10 = arith.constant dense<0.000000e+00> : vector<2x8xf32>
    %15 = tpu.matmul %10, %13, %cst_10 {dimension_numbers = #tpu.dot_dimension_numbers<[1], [1], [0], [0], [0, 0, 1, 0], [], []>} : vector<2x128xf32>, vector<8x128xf32>, vector<2x8xf32> -> vector<2x8xf32>
    %16 = arith.addf %14, %15 : vector<2x8xf32>
    %c0_11 = arith.constant 0 : index
    %c0_12 = arith.constant 0 : index
    %17 = vector.load %arg7[%c0_11, %c0_12] : memref<2x8xf32, #tpu.memory_space<vmem>>, vector<2x8xf32>
    tpu.vector_store %arg7[%c0_11, %c0_12], %16 {strides = array<i32>} : memref<2x8xf32, #tpu.memory_space<vmem>>, vector<2x8xf32>,
    %c1 = arith.constant 1 : index
    %c0_13 = arith.constant 0 : index
    %c0_14 = arith.constant 0 : index
    %18 = vector.load %arg3[%c1, %c0_13, %c0_14] : memref<32x2x1xf32, #tpu.memory_space<vmem>>, vector<1x2x1xf32>
    %19 = vector.shape_cast %18 : vector<1x2x1xf32> to vector<2x1xf32>
    %20 = vector.broadcast %19 : vector<2x1xf32> to vector<2x128xf32>
    %21 = arith.mulf %20, %3 : vector<2x128xf32>
    %cst_15 = arith.constant 9.99999974E-6 : f32
    %22 = vector.broadcast %cst_15 : f32 to vector<2x128xf32>
    %23 = arith.addf %21, %22 : vector<2x128xf32>
    %24 = math.sqrt %23 : vector<2x128xf32>
    %c1_16 = arith.constant 1 : index
    %c0_17 = arith.constant 0 : index
    %c0_18 = arith.constant 0 : index
    %25 = vector.load %arg4[%c1_16, %c0_17, %c0_18] : memref<32x8x128xbf16, #tpu.memory_space<vmem>>, vector<1x8x128xbf16>
    %26 = vector.shape_cast %25 : vector<1x8x128xbf16> to vector<8x128xbf16>
    %27 = arith.extf %26 : vector<8x128xbf16> to vector<8x128xf32>
    %c0_19 = arith.constant 0 : index
    %c0_20 = arith.constant 0 : index
    %28 = vector.load %arg7[%c0_19, %c0_20] : memref<2x8xf32, #tpu.memory_space<vmem>>, vector<2x8xf32>
    %cst_21 = arith.constant dense<0.000000e+00> : vector<2x8xf32>
    %29 = tpu.matmul %24, %27, %cst_21 {dimension_numbers = #tpu.dot_dimension_numbers<[1], [1], [0], [0], [0, 0, 1, 0], [], []>} : vector<2x128xf32>, vector<8x128xf32>, vector<2x8xf32> -> vector<2x8xf32>
    %30 = arith.addf %28, %29 : vector<2x8xf32>
    %c0_22 = arith.constant 0 : index
    %c0_23 = arith.constant 0 : index
    %31 = vector.load %arg7[%c0_22, %c0_23] : memref<2x8xf32, #tpu.memory_space<vmem>>, vector<2x8xf32>
    tpu.vector_store %arg7[%c0_22, %c0_23], %30 {strides = array<i32>} : memref<2x8xf32, #tpu.memory_space<vmem>>, vector<2x8xf32>,
    %c2 = arith.constant 2 : index
    %c0_24 = arith.constant 0 : index
    %c0_25 = arith.constant 0 : index
    %32 = vector.load %arg3[%c2, %c0_24, %c0_25] : memref<32x2x1xf32, #tpu.memory_space<vmem>>, vector<1x2x1xf32>
    %33 = vector.shape_cast %32 : vector<1x2x1xf32> to vector<2x1xf32>
    %34 = vector.broadcast %33 : vector<2x1xf32> to vector<2x128xf32>
    %35 = arith.mulf %34, %3 : vector<2x128xf32>
    %cst_26 = arith.constant 9.99999974E-6 : f32
    %36 = vector.broadcast %cst_26 : f32 to vector<2x128xf32>
    %37 = arith.addf %35, %36 : vector<2x128xf32>
    %38 = math.sqrt %37 : vector<2x128xf32>
    %c2_27 = arith.constant 2 : index
    %c0_28 = arith.constant 0 : index
    %c0_29 = arith.constant 0 : index
    %39 = vector.load %arg4[%c2_27, %c0_28, %c0_29] : memref<32x8x128xbf16, #tpu.memory_space<vmem>>, vector<1x8x128xbf16>
    %40 = vector.shape_cast %39 : vector<1x8x128xbf16> to vector<8x128xbf16>
    %41 = arith.extf %40 : vector<8x128xbf16> to vector<8x128xf32>
    %c0_30 = arith.constant 0 : index
    %c0_31 = arith.constant 0 : index
    %42 = vector.load %arg7[%c0_30, %c0_31] : memref<2x8xf32, #tpu.memory_space<vmem>>, vector<2x8xf32>
    %cst_32 = arith.constant dense<0.000000e+00> : vector<2x8xf32>
    %43 = tpu.matmul %38, %41, %cst_32 {dimension_numbers = #tpu.dot_dimension_numbers<[1], [1], [0], [0], [0, 0, 1, 0], [], []>} : vector<2x128xf32>, vector<8x128xf32>, vector<2x8xf32> -> vector<2x8xf32>
    %44 = arith.addf %42, %43 : vector<2x8xf32>
    %c0_33 = arith.constant 0 : index
    %c0_34 = arith.constant 0 : index
    %45 = vector.load %arg7[%c0_33, %c0_34] : memref<2x8xf32, #tpu.memory_space<vmem>>, vector<2x8xf32>
    tpu.vector_store %arg7[%c0_33, %c0_34], %44 {strides = array<i32>} : memref<2x8xf32, #tpu.memory_space<vmem>>, vector<2x8xf32>,
    %c3 = arith.constant 3 : index
    %c0_35 = arith.constant 0 : index
    %c0_36 = arith.constant 0 : index
    %46 = vector.load %arg3[%c3, %c0_35, %c0_36] : memref<32x2x1xf32, #tpu.memory_space<vmem>>, vector<1x2x1xf32>
    %47 = vector.shape_cast %46 : vector<1x2x1xf32> to vector<2x1xf32>
    %48 = vector.broadcast %47 : vector<2x1xf32> to vector<2x128xf32>
    %49 = arith.mulf %48, %3 : vector<2x128xf32>
    %cst_37 = arith.constant 9.99999974E-6 : f32
    %50 = vector.broadcast %cst_37 : f32 to vector<2x128xf32>
    %51 = arith.addf %49, %50 : vector<2x128xf32>
    %52 = math.sqrt %51 : vector<2x128xf32>
    %c3_38 = arith.constant 3 : index
    %c0_39 = arith.constant 0 : index
    %c0_40 = arith.constant 0 : index
    %53 = vector.load %arg4[%c3_38, %c0_39, %c0_40] : memref<32x8x128xbf16, #tpu.memory_space<vmem>>, vector<1x8x128xbf16>
    %54 = vector.shape_cast %53 : vector<1x8x128xbf16> to vector<8x128xbf16>
    %55 = arith.extf %54 : vector<8x128xbf16> to vector<8x128xf32>
    %c0_41 = arith.constant 0 : index
    %c0_42 = arith.constant 0 : index
    %56 = vector.load %arg7[%c0_41, %c0_42] : memref<2x8xf32, #tpu.memory_space<vmem>>, vector<2x8xf32>
    %cst_43 = arith.constant dense<0.000000e+00> : vector<2x8xf32>
    %57 = tpu.matmul %52, %55, %cst_43 {dimension_numbers = #tpu.dot_dimension_numbers<[1], [1], [0], [0], [0, 0, 1, 0], [], []>} : vector<2x128xf32>, vector<8x128xf32>, vector<2x8xf32> -> vector<2x8xf32>
    %58 = arith.addf %56, %57 : vector<2x8xf32>
    %c0_44 = arith.constant 0 : index
    %c0_45 = arith.constant 0 : index
    %59 = vector.load %arg7[%c0_44, %c0_45] : memref<2x8xf32, #tpu.memory_space<vmem>>, vector<2x8xf32>
    tpu.vector_store %arg7[%c0_44, %c0_45], %58 {strides = array<i32>} : memref<2x8xf32, #tpu.memory_space<vmem>>, vector<2x8xf32>,
    %c4 = arith.constant 4 : index
    %c0_46 = arith.constant 0 : index
    %c0_47 = arith.constant 0 : index
    %60 = vector.load %arg3[%c4, %c0_46, %c0_47] : memref<32x2x1xf32, #tpu.memory_space<vmem>>, vector<1x2x1xf32>
    %61 = vector.shape_cast %60 : vector<1x2x1xf32> to vector<2x1xf32>
    %62 = vector.broadcast %61 : vector<2x1xf32> to vector<2x128xf32>
    %63 = arith.mulf %62, %3 : vector<2x128xf32>
    %cst_48 = arith.constant 9.99999974E-6 : f32
    %64 = vector.broadcast %cst_48 : f32 to vector<2x128xf32>
    %65 = arith.addf %63, %64 : vector<2x128xf32>
    %66 = math.sqrt %65 : vector<2x128xf32>
    %c4_49 = arith.constant 4 : index
    %c0_50 = arith.constant 0 : index
    %c0_51 = arith.constant 0 : index
    %67 = vector.load %arg4[%c4_49, %c0_50, %c0_51] : memref<32x8x128xbf16, #tpu.memory_space<vmem>>, vector<1x8x128xbf16>
    %68 = vector.shape_cast %67 : vector<1x8x128xbf16> to vector<8x128xbf16>
    %69 = arith.extf %68 : vector<8x128xbf16> to vector<8x128xf32>
    %c0_52 = arith.constant 0 : index
    %c0_53 = arith.constant 0 : index
    %70 = vector.load %arg7[%c0_52, %c0_53] : memref<2x8xf32, #tpu.memory_space<vmem>>, vector<2x8xf32>
    %cst_54 = arith.constant dense<0.000000e+00> : vector<2x8xf32>
    %71 = tpu.matmul %66, %69, %cst_54 {dimension_numbers = #tpu.dot_dimension_numbers<[1], [1], [0], [0], [0, 0, 1, 0], [], []>} : vector<2x128xf32>, vector<8x128xf32>, vector<2x8xf32> -> vector<2x8xf32>
    %72 = arith.addf %70, %71 : vector<2x8xf32>
    %c0_55 = arith.constant 0 : index
    %c0_56 = arith.constant 0 : index
    %73 = vector.load %arg7[%c0_55, %c0_56] : memref<2x8xf32, #tpu.memory_space<vmem>>, vector<2x8xf32>
    tpu.vector_store %arg7[%c0_55, %c0_56], %72 {strides = array<i32>} : memref<2x8xf32, #tpu.memory_space<vmem>>, vector<2x8xf32>,
    %c5 = arith.constant 5 : index
    %c0_57 = arith.constant 0 : index
    %c0_58 = arith.constant 0 : index
    %74 = vector.load %arg3[%c5, %c0_57, %c0_58] : memref<32x2x1xf32, #tpu.memory_space<vmem>>, vector<1x2x1xf32>
    %75 = vector.shape_cast %74 : vector<1x2x1xf32> to vector<2x1xf32>
    %76 = vector.broadcast %75 : vector<2x1xf32> to vector<2x128xf32>
    %77 = arith.mulf %76, %3 : vector<2x128xf32>
    %cst_59 = arith.constant 9.99999974E-6 : f32
    %78 = vector.broadcast %cst_59 : f32 to vector<2x128xf32>
    %79 = arith.addf %77, %78 : vector<2x128xf32>
    %80 = math.sqrt %79 : vector<2x128xf32>
    %c5_60 = arith.constant 5 : index
    %c0_61 = arith.constant 0 : index
    %c0_62 = arith.constant 0 : index
    %81 = vector.load %arg4[%c5_60, %c0_61, %c0_62] : memref<32x8x128xbf16, #tpu.memory_space<vmem>>, vector<1x8x128xbf16>
    %82 = vector.shape_cast %81 : vector<1x8x128xbf16> to vector<8x128xbf16>
    %83 = arith.extf %82 : vector<8x128xbf16> to vector<8x128xf32>
    %c0_63 = arith.constant 0 : index
    %c0_64 = arith.constant 0 : index
    %84 = vector.load %arg7[%c0_63, %c0_64] : memref<2x8xf32, #tpu.memory_space<vmem>>, vector<2x8xf32>
    %cst_65 = arith.constant dense<0.000000e+00> : vector<2x8xf32>
    %85 = tpu.matmul %80, %83, %cst_65 {dimension_numbers = #tpu.dot_dimension_numbers<[1], [1], [0], [0], [0, 0, 1, 0], [], []>} : vector<2x128xf32>, vector<8x128xf32>, vector<2x8xf32> -> vector<2x8xf32>
    %86 = arith.addf %84, %85 : vector<2x8xf32>
    %c0_66 = arith.constant 0 : index
    %c0_67 = arith.constant 0 : index
    %87 = vector.load %arg7[%c0_66, %c0_67] : memref<2x8xf32, #tpu.memory_space<vmem>>, vector<2x8xf32>
    tpu.vector_store %arg7[%c0_66, %c0_67], %86 {strides = array<i32>} : memref<2x8xf32, #tpu.memory_space<vmem>>, vector<2x8xf32>,
    %c6 = arith.constant 6 : index
    %c0_68 = arith.constant 0 : index
    %c0_69 = arith.constant 0 : index
    %88 = vector.load %arg3[%c6, %c0_68, %c0_69] : memref<32x2x1xf32, #tpu.memory_space<vmem>>, vector<1x2x1xf32>
    %89 = vector.shape_cast %88 : vector<1x2x1xf32> to vector<2x1xf32>
    %90 = vector.broadcast %89 : vector<2x1xf32> to vector<2x128xf32>
    %91 = arith.mulf %90, %3 : vector<2x128xf32>
    %cst_70 = arith.constant 9.99999974E-6 : f32
    %92 = vector.broadcast %cst_70 : f32 to vector<2x128xf32>
    %93 = arith.addf %91, %92 : vector<2x128xf32>
    %94 = math.sqrt %93 : vector<2x128xf32>
    %c6_71 = arith.constant 6 : index
    %c0_72 = arith.constant 0 : index
    %c0_73 = arith.constant 0 : index
    %95 = vector.load %arg4[%c6_71, %c0_72, %c0_73] : memref<32x8x128xbf16, #tpu.memory_space<vmem>>, vector<1x8x128xbf16>
    %96 = vector.shape_cast %95 : vector<1x8x128xbf16> to vector<8x128xbf16>
    %97 = arith.extf %96 : vector<8x128xbf16> to vector<8x128xf32>
    %c0_74 = arith.constant 0 : index
    %c0_75 = arith.constant 0 : index
    %98 = vector.load %arg7[%c0_74, %c0_75] : memref<2x8xf32, #tpu.memory_space<vmem>>, vector<2x8xf32>
    %cst_76 = arith.constant dense<0.000000e+00> : vector<2x8xf32>
    %99 = tpu.matmul %94, %97, %cst_76 {dimension_numbers = #tpu.dot_dimension_numbers<[1], [1], [0], [0], [0, 0, 1, 0], [], []>} : vector<2x128xf32>, vector<8x128xf32>, vector<2x8xf32> -> vector<2x8xf32>
    %100 = arith.addf %98, %99 : vector<2x8xf32>
    %c0_77 = arith.constant 0 : index
    %c0_78 = arith.constant 0 : index
    %101 = vector.load %arg7[%c0_77, %c0_78] : memref<2x8xf32, #tpu.memory_space<vmem>>, vector<2x8xf32>
    tpu.vector_store %arg7[%c0_77, %c0_78], %100 {strides = array<i32>} : memref<2x8xf32, #tpu.memory_space<vmem>>, vector<2x8xf32>,
    %c7 = arith.constant 7 : index
    %c0_79 = arith.constant 0 : index
    %c0_80 = arith.constant 0 : index
    %102 = vector.load %arg3[%c7, %c0_79, %c0_80] : memref<32x2x1xf32, #tpu.memory_space<vmem>>, vector<1x2x1xf32>
    %103 = vector.shape_cast %102 : vector<1x2x1xf32> to vector<2x1xf32>
    %104 = vector.broadcast %103 : vector<2x1xf32> to vector<2x128xf32>
    %105 = arith.mulf %104, %3 : vector<2x128xf32>
    %cst_81 = arith.constant 9.99999974E-6 : f32
    %106 = vector.broadcast %cst_81 : f32 to vector<2x128xf32>
    %107 = arith.addf %105, %106 : vector<2x128xf32>
    %108 = math.sqrt %107 : vector<2x128xf32>
    %c7_82 = arith.constant 7 : index
    %c0_83 = arith.constant 0 : index
    %c0_84 = arith.constant 0 : index
    %109 = vector.load %arg4[%c7_82, %c0_83, %c0_84] : memref<32x8x128xbf16, #tpu.memory_space<vmem>>, vector<1x8x128xbf16>
    %110 = vector.shape_cast %109 : vector<1x8x128xbf16> to vector<8x128xbf16>
    %111 = arith.extf %110 : vector<8x128xbf16> to vector<8x128xf32>
    %c0_85 = arith.constant 0 : index
    %c0_86 = arith.constant 0 : index
    %112 = vector.load %arg7[%c0_85, %c0_86] : memref<2x8xf32, #tpu.memory_space<vmem>>, vector<2x8xf32>
    %cst_87 = arith.constant dense<0.000000e+00> : vector<2x8xf32>
    %113 = tpu.matmul %108, %111, %cst_87 {dimension_numbers = #tpu.dot_dimension_numbers<[1], [1], [0], [0], [0, 0, 1, 0], [], []>} : vector<2x128xf32>, vector<8x128xf32>, vector<2x8xf32> -> vector<2x8xf32>
    %114 = arith.addf %112, %113 : vector<2x8xf32>
    %c0_88 = arith.constant 0 : index
    %c0_89 = arith.constant 0 : index
    %115 = vector.load %arg7[%c0_88, %c0_89] : memref<2x8xf32, #tpu.memory_space<vmem>>, vector<2x8xf32>
    tpu.vector_store %arg7[%c0_88, %c0_89], %114 {strides = array<i32>} : memref<2x8xf32, #tpu.memory_space<vmem>>, vector<2x8xf32>,
    %c8 = arith.constant 8 : index
    %c0_90 = arith.constant 0 : index
    %c0_91 = arith.constant 0 : index
    %116 = vector.load %arg3[%c8, %c0_90, %c0_91] : memref<32x2x1xf32, #tpu.memory_space<vmem>>, vector<1x2x1xf32>
    %117 = vector.shape_cast %116 : vector<1x2x1xf32> to vector<2x1xf32>
    %118 = vector.broadcast %117 : vector<2x1xf32> to vector<2x128xf32>
    %119 = arith.mulf %118, %3 : vector<2x128xf32>
    %cst_92 = arith.constant 9.99999974E-6 : f32
    %120 = vector.broadcast %cst_92 : f32 to vector<2x128xf32>
    %121 = arith.addf %119, %120 : vector<2x128xf32>
    %122 = math.sqrt %121 : vector<2x128xf32>
    %c8_93 = arith.constant 8 : index
    %c0_94 = arith.constant 0 : index
    %c0_95 = arith.constant 0 : index
    %123 = vector.load %arg4[%c8_93, %c0_94, %c0_95] : memref<32x8x128xbf16, #tpu.memory_space<vmem>>, vector<1x8x128xbf16>
    %124 = vector.shape_cast %123 : vector<1x8x128xbf16> to vector<8x128xbf16>
    %125 = arith.extf %124 : vector<8x128xbf16> to vector<8x128xf32>
    %c0_96 = arith.constant 0 : index
    %c0_97 = arith.constant 0 : index
    %126 = vector.load %arg7[%c0_96, %c0_97] : memref<2x8xf32, #tpu.memory_space<vmem>>, vector<2x8xf32>
    %cst_98 = arith.constant dense<0.000000e+00> : vector<2x8xf32>
    %127 = tpu.matmul %122, %125, %cst_98 {dimension_numbers = #tpu.dot_dimension_numbers<[1], [1], [0], [0], [0, 0, 1, 0], [], []>} : vector<2x128xf32>, vector<8x128xf32>, vector<2x8xf32> -> vector<2x8xf32>
    %128 = arith.addf %126, %127 : vector<2x8xf32>
    %c0_99 = arith.constant 0 : index
    %c0_100 = arith.constant 0 : index
    %129 = vector.load %arg7[%c0_99, %c0_100] : memref<2x8xf32, #tpu.memory_space<vmem>>, vector<2x8xf32>
    tpu.vector_store %arg7[%c0_99, %c0_100], %128 {strides = array<i32>} : memref<2x8xf32, #tpu.memory_space<vmem>>, vector<2x8xf32>,
    %c9 = arith.constant 9 : index
    %c0_101 = arith.constant 0 : index
    %c0_102 = arith.constant 0 : index
    %130 = vector.load %arg3[%c9, %c0_101, %c0_102] : memref<32x2x1xf32, #tpu.memory_space<vmem>>, vector<1x2x1xf32>
    %131 = vector.shape_cast %130 : vector<1x2x1xf32> to vector<2x1xf32>
    %132 = vector.broadcast %131 : vector<2x1xf32> to vector<2x128xf32>
    %133 = arith.mulf %132, %3 : vector<2x128xf32>
    %cst_103 = arith.constant 9.99999974E-6 : f32
    %134 = vector.broadcast %cst_103 : f32 to vector<2x128xf32>
    %135 = arith.addf %133, %134 : vector<2x128xf32>
    %136 = math.sqrt %135 : vector<2x128xf32>
    %c9_104 = arith.constant 9 : index
    %c0_105 = arith.constant 0 : index
    %c0_106 = arith.constant 0 : index
    %137 = vector.load %arg4[%c9_104, %c0_105, %c0_106] : memref<32x8x128xbf16, #tpu.memory_space<vmem>>, vector<1x8x128xbf16>
    %138 = vector.shape_cast %137 : vector<1x8x128xbf16> to vector<8x128xbf16>
    %139 = arith.extf %138 : vector<8x128xbf16> to vector<8x128xf32>
    %c0_107 = arith.constant 0 : index
    %c0_108 = arith.constant 0 : index
    %140 = vector.load %arg7[%c0_107, %c0_108] : memref<2x8xf32, #tpu.memory_space<vmem>>, vector<2x8xf32>
    %cst_109 = arith.constant dense<0.000000e+00> : vector<2x8xf32>
    %141 = tpu.matmul %136, %139, %cst_109 {dimension_numbers = #tpu.dot_dimension_numbers<[1], [1], [0], [0], [0, 0, 1, 0], [], []>} : vector<2x128xf32>, vector<8x128xf32>, vector<2x8xf32> -> vector<2x8xf32>
    %142 = arith.addf %140, %141 : vector<2x8xf32>
    %c0_110 = arith.constant 0 : index
    %c0_111 = arith.constant 0 : index
    %143 = vector.load %arg7[%c0_110, %c0_111] : memref<2x8xf32, #tpu.memory_space<vmem>>, vector<2x8xf32>
    tpu.vector_store %arg7[%c0_110, %c0_111], %142 {strides = array<i32>} : memref<2x8xf32, #tpu.memory_space<vmem>>, vector<2x8xf32>,
    %c10 = arith.constant 10 : index
    %c0_112 = arith.constant 0 : index
    %c0_113 = arith.constant 0 : index
    %144 = vector.load %arg3[%c10, %c0_112, %c0_113] : memref<32x2x1xf32, #tpu.memory_space<vmem>>, vector<1x2x1xf32>
    %145 = vector.shape_cast %144 : vector<1x2x1xf32> to vector<2x1xf32>
    %146 = vector.broadcast %145 : vector<2x1xf32> to vector<2x128xf32>
    %147 = arith.mulf %146, %3 : vector<2x128xf32>
    %cst_114 = arith.constant 9.99999974E-6 : f32
    %148 = vector.broadcast %cst_114 : f32 to vector<2x128xf32>
    %149 = arith.addf %147, %148 : vector<2x128xf32>
    %150 = math.sqrt %149 : vector<2x128xf32>
    %c10_115 = arith.constant 10 : index
    %c0_116 = arith.constant 0 : index
    %c0_117 = arith.constant 0 : index
    %151 = vector.load %arg4[%c10_115, %c0_116, %c0_117] : memref<32x8x128xbf16, #tpu.memory_space<vmem>>, vector<1x8x128xbf16>
    %152 = vector.shape_cast %151 : vector<1x8x128xbf16> to vector<8x128xbf16>
    %153 = arith.extf %152 : vector<8x128xbf16> to vector<8x128xf32>
    %c0_118 = arith.constant 0 : index
    %c0_119 = arith.constant 0 : index
    %154 = vector.load %arg7[%c0_118, %c0_119] : memref<2x8xf32, #tpu.memory_space<vmem>>, vector<2x8xf32>
    %cst_120 = arith.constant dense<0.000000e+00> : vector<2x8xf32>
    %155 = tpu.matmul %150, %153, %cst_120 {dimension_numbers = #tpu.dot_dimension_numbers<[1], [1], [0], [0], [0, 0, 1, 0], [], []>} : vector<2x128xf32>, vector<8x128xf32>, vector<2x8xf32> -> vector<2x8xf32>
    %156 = arith.addf %154, %155 : vector<2x8xf32>
    %c0_121 = arith.constant 0 : index
    %c0_122 = arith.constant 0 : index
    %157 = vector.load %arg7[%c0_121, %c0_122] : memref<2x8xf32, #tpu.memory_space<vmem>>, vector<2x8xf32>
    tpu.vector_store %arg7[%c0_121, %c0_122], %156 {strides = array<i32>} : memref<2x8xf32, #tpu.memory_space<vmem>>, vector<2x8xf32>,
    %c11 = arith.constant 11 : index
    %c0_123 = arith.constant 0 : index
    %c0_124 = arith.constant 0 : index
    %158 = vector.load %arg3[%c11, %c0_123, %c0_124] : memref<32x2x1xf32, #tpu.memory_space<vmem>>, vector<1x2x1xf32>
    %159 = vector.shape_cast %158 : vector<1x2x1xf32> to vector<2x1xf32>
    %160 = vector.broadcast %159 : vector<2x1xf32> to vector<2x128xf32>
    %161 = arith.mulf %160, %3 : vector<2x128xf32>
    %cst_125 = arith.constant 9.99999974E-6 : f32
    %162 = vector.broadcast %cst_125 : f32 to vector<2x128xf32>
    %163 = arith.addf %161, %162 : vector<2x128xf32>
    %164 = math.sqrt %163 : vector<2x128xf32>
    %c11_126 = arith.constant 11 : index
    %c0_127 = arith.constant 0 : index
    %c0_128 = arith.constant 0 : index
    %165 = vector.load %arg4[%c11_126, %c0_127, %c0_128] : memref<32x8x128xbf16, #tpu.memory_space<vmem>>, vector<1x8x128xbf16>
    %166 = vector.shape_cast %165 : vector<1x8x128xbf16> to vector<8x128xbf16>
    %167 = arith.extf %166 : vector<8x128xbf16> to vector<8x128xf32>
    %c0_129 = arith.constant 0 : index
    %c0_130 = arith.constant 0 : index
    %168 = vector.load %arg7[%c0_129, %c0_130] : memref<2x8xf32, #tpu.memory_space<vmem>>, vector<2x8xf32>
    %cst_131 = arith.constant dense<0.000000e+00> : vector<2x8xf32>
    %169 = tpu.matmul %164, %167, %cst_131 {dimension_numbers = #tpu.dot_dimension_numbers<[1], [1], [0], [0], [0, 0, 1, 0], [], []>} : vector<2x128xf32>, vector<8x128xf32>, vector<2x8xf32> -> vector<2x8xf32>
    %170 = arith.addf %168, %169 : vector<2x8xf32>
    %c0_132 = arith.constant 0 : index
    %c0_133 = arith.constant 0 : index
    %171 = vector.load %arg7[%c0_132, %c0_133] : memref<2x8xf32, #tpu.memory_space<vmem>>, vector<2x8xf32>
    tpu.vector_store %arg7[%c0_132, %c0_133], %170 {strides = array<i32>} : memref<2x8xf32, #tpu.memory_space<vmem>>, vector<2x8xf32>,
    %c12 = arith.constant 12 : index
    %c0_134 = arith.constant 0 : index
    %c0_135 = arith.constant 0 : index
    %172 = vector.load %arg3[%c12, %c0_134, %c0_135] : memref<32x2x1xf32, #tpu.memory_space<vmem>>, vector<1x2x1xf32>
    %173 = vector.shape_cast %172 : vector<1x2x1xf32> to vector<2x1xf32>
    %174 = vector.broadcast %173 : vector<2x1xf32> to vector<2x128xf32>
    %175 = arith.mulf %174, %3 : vector<2x128xf32>
    %cst_136 = arith.constant 9.99999974E-6 : f32
    %176 = vector.broadcast %cst_136 : f32 to vector<2x128xf32>
    %177 = arith.addf %175, %176 : vector<2x128xf32>
    %178 = math.sqrt %177 : vector<2x128xf32>
    %c12_137 = arith.constant 12 : index
    %c0_138 = arith.constant 0 : index
    %c0_139 = arith.constant 0 : index
    %179 = vector.load %arg4[%c12_137, %c0_138, %c0_139] : memref<32x8x128xbf16, #tpu.memory_space<vmem>>, vector<1x8x128xbf16>
    %180 = vector.shape_cast %179 : vector<1x8x128xbf16> to vector<8x128xbf16>
    %181 = arith.extf %180 : vector<8x128xbf16> to vector<8x128xf32>
    %c0_140 = arith.constant 0 : index
    %c0_141 = arith.constant 0 : index
    %182 = vector.load %arg7[%c0_140, %c0_141] : memref<2x8xf32, #tpu.memory_space<vmem>>, vector<2x8xf32>
    %cst_142 = arith.constant dense<0.000000e+00> : vector<2x8xf32>
    %183 = tpu.matmul %178, %181, %cst_142 {dimension_numbers = #tpu.dot_dimension_numbers<[1], [1], [0], [0], [0, 0, 1, 0], [], []>} : vector<2x128xf32>, vector<8x128xf32>, vector<2x8xf32> -> vector<2x8xf32>
    %184 = arith.addf %182, %183 : vector<2x8xf32>
    %c0_143 = arith.constant 0 : index
    %c0_144 = arith.constant 0 : index
    %185 = vector.load %arg7[%c0_143, %c0_144] : memref<2x8xf32, #tpu.memory_space<vmem>>, vector<2x8xf32>
    tpu.vector_store %arg7[%c0_143, %c0_144], %184 {strides = array<i32>} : memref<2x8xf32, #tpu.memory_space<vmem>>, vector<2x8xf32>,
    %c13 = arith.constant 13 : index
    %c0_145 = arith.constant 0 : index
    %c0_146 = arith.constant 0 : index
    %186 = vector.load %arg3[%c13, %c0_145, %c0_146] : memref<32x2x1xf32, #tpu.memory_space<vmem>>, vector<1x2x1xf32>
    %187 = vector.shape_cast %186 : vector<1x2x1xf32> to vector<2x1xf32>
    %188 = vector.broadcast %187 : vector<2x1xf32> to vector<2x128xf32>
    %189 = arith.mulf %188, %3 : vector<2x128xf32>
    %cst_147 = arith.constant 9.99999974E-6 : f32
    %190 = vector.broadcast %cst_147 : f32 to vector<2x128xf32>
    %191 = arith.addf %189, %190 : vector<2x128xf32>
    %192 = math.sqrt %191 : vector<2x128xf32>
    %c13_148 = arith.constant 13 : index
    %c0_149 = arith.constant 0 : index
    %c0_150 = arith.constant 0 : index
    %193 = vector.load %arg4[%c13_148, %c0_149, %c0_150] : memref<32x8x128xbf16, #tpu.memory_space<vmem>>, vector<1x8x128xbf16>
    %194 = vector.shape_cast %193 : vector<1x8x128xbf16> to vector<8x128xbf16>
    %195 = arith.extf %194 : vector<8x128xbf16> to vector<8x128xf32>
    %c0_151 = arith.constant 0 : index
    %c0_152 = arith.constant 0 : index
    %196 = vector.load %arg7[%c0_151, %c0_152] : memref<2x8xf32, #tpu.memory_space<vmem>>, vector<2x8xf32>
    %cst_153 = arith.constant dense<0.000000e+00> : vector<2x8xf32>
    %197 = tpu.matmul %192, %195, %cst_153 {dimension_numbers = #tpu.dot_dimension_numbers<[1], [1], [0], [0], [0, 0, 1, 0], [], []>} : vector<2x128xf32>, vector<8x128xf32>, vector<2x8xf32> -> vector<2x8xf32>
    %198 = arith.addf %196, %197 : vector<2x8xf32>
    %c0_154 = arith.constant 0 : index
    %c0_155 = arith.constant 0 : index
    %199 = vector.load %arg7[%c0_154, %c0_155] : memref<2x8xf32, #tpu.memory_space<vmem>>, vector<2x8xf32>
    tpu.vector_store %arg7[%c0_154, %c0_155], %198 {strides = array<i32>} : memref<2x8xf32, #tpu.memory_space<vmem>>, vector<2x8xf32>,
    %c14 = arith.constant 14 : index
    %c0_156 = arith.constant 0 : index
    %c0_157 = arith.constant 0 : index
    %200 = vector.load %arg3[%c14, %c0_156, %c0_157] : memref<32x2x1xf32, #tpu.memory_space<vmem>>, vector<1x2x1xf32>
    %201 = vector.shape_cast %200 : vector<1x2x1xf32> to vector<2x1xf32>
    %202 = vector.broadcast %201 : vector<2x1xf32> to vector<2x128xf32>
    %203 = arith.mulf %202, %3 : vector<2x128xf32>
    %cst_158 = arith.constant 9.99999974E-6 : f32
    %204 = vector.broadcast %cst_158 : f32 to vector<2x128xf32>
    %205 = arith.addf %203, %204 : vector<2x128xf32>
    %206 = math.sqrt %205 : vector<2x128xf32>
    %c14_159 = arith.constant 14 : index
    %c0_160 = arith.constant 0 : index
    %c0_161 = arith.constant 0 : index
    %207 = vector.load %arg4[%c14_159, %c0_160, %c0_161] : memref<32x8x128xbf16, #tpu.memory_space<vmem>>, vector<1x8x128xbf16>
    %208 = vector.shape_cast %207 : vector<1x8x128xbf16> to vector<8x128xbf16>
    %209 = arith.extf %208 : vector<8x128xbf16> to vector<8x128xf32>
    %c0_162 = arith.constant 0 : index
    %c0_163 = arith.constant 0 : index
    %210 = vector.load %arg7[%c0_162, %c0_163] : memref<2x8xf32, #tpu.memory_space<vmem>>, vector<2x8xf32>
    %cst_164 = arith.constant dense<0.000000e+00> : vector<2x8xf32>
    %211 = tpu.matmul %206, %209, %cst_164 {dimension_numbers = #tpu.dot_dimension_numbers<[1], [1], [0], [0], [0, 0, 1, 0], [], []>} : vector<2x128xf32>, vector<8x128xf32>, vector<2x8xf32> -> vector<2x8xf32>
    %212 = arith.addf %210, %211 : vector<2x8xf32>
    %c0_165 = arith.constant 0 : index
    %c0_166 = arith.constant 0 : index
    %213 = vector.load %arg7[%c0_165, %c0_166] : memref<2x8xf32, #tpu.memory_space<vmem>>, vector<2x8xf32>
    tpu.vector_store %arg7[%c0_165, %c0_166], %212 {strides = array<i32>} : memref<2x8xf32, #tpu.memory_space<vmem>>, vector<2x8xf32>,
    %c15 = arith.constant 15 : index
    %c0_167 = arith.constant 0 : index
    %c0_168 = arith.constant 0 : index
    %214 = vector.load %arg3[%c15, %c0_167, %c0_168] : memref<32x2x1xf32, #tpu.memory_space<vmem>>, vector<1x2x1xf32>
    %215 = vector.shape_cast %214 : vector<1x2x1xf32> to vector<2x1xf32>
    %216 = vector.broadcast %215 : vector<2x1xf32> to vector<2x128xf32>
    %217 = arith.mulf %216, %3 : vector<2x128xf32>
    %cst_169 = arith.constant 9.99999974E-6 : f32
    %218 = vector.broadcast %cst_169 : f32 to vector<2x128xf32>
    %219 = arith.addf %217, %218 : vector<2x128xf32>
    %220 = math.sqrt %219 : vector<2x128xf32>
    %c15_170 = arith.constant 15 : index
    %c0_171 = arith.constant 0 : index
    %c0_172 = arith.constant 0 : index
    %221 = vector.load %arg4[%c15_170, %c0_171, %c0_172] : memref<32x8x128xbf16, #tpu.memory_space<vmem>>, vector<1x8x128xbf16>
    %222 = vector.shape_cast %221 : vector<1x8x128xbf16> to vector<8x128xbf16>
    %223 = arith.extf %222 : vector<8x128xbf16> to vector<8x128xf32>
    %c0_173 = arith.constant 0 : index
    %c0_174 = arith.constant 0 : index
    %224 = vector.load %arg7[%c0_173, %c0_174] : memref<2x8xf32, #tpu.memory_space<vmem>>, vector<2x8xf32>
    %cst_175 = arith.constant dense<0.000000e+00> : vector<2x8xf32>
    %225 = tpu.matmul %220, %223, %cst_175 {dimension_numbers = #tpu.dot_dimension_numbers<[1], [1], [0], [0], [0, 0, 1, 0], [], []>} : vector<2x128xf32>, vector<8x128xf32>, vector<2x8xf32> -> vector<2x8xf32>
    %226 = arith.addf %224, %225 : vector<2x8xf32>
    %c0_176 = arith.constant 0 : index
    %c0_177 = arith.constant 0 : index
    %227 = vector.load %arg7[%c0_176, %c0_177] : memref<2x8xf32, #tpu.memory_space<vmem>>, vector<2x8xf32>
    tpu.vector_store %arg7[%c0_176, %c0_177], %226 {strides = array<i32>} : memref<2x8xf32, #tpu.memory_space<vmem>>, vector<2x8xf32>,
    %c16 = arith.constant 16 : index
    %c0_178 = arith.constant 0 : index
    %c0_179 = arith.constant 0 : index
    %228 = vector.load %arg3[%c16, %c0_178, %c0_179] : memref<32x2x1xf32, #tpu.memory_space<vmem>>, vector<1x2x1xf32>
    %229 = vector.shape_cast %228 : vector<1x2x1xf32> to vector<2x1xf32>
    %230 = vector.broadcast %229 : vector<2x1xf32> to vector<2x128xf32>
    %231 = arith.mulf %230, %3 : vector<2x128xf32>
    %cst_180 = arith.constant 9.99999974E-6 : f32
    %232 = vector.broadcast %cst_180 : f32 to vector<2x128xf32>
    %233 = arith.addf %231, %232 : vector<2x128xf32>
    %234 = math.sqrt %233 : vector<2x128xf32>
    %c16_181 = arith.constant 16 : index
    %c0_182 = arith.constant 0 : index
    %c0_183 = arith.constant 0 : index
    %235 = vector.load %arg4[%c16_181, %c0_182, %c0_183] : memref<32x8x128xbf16, #tpu.memory_space<vmem>>, vector<1x8x128xbf16>
    %236 = vector.shape_cast %235 : vector<1x8x128xbf16> to vector<8x128xbf16>
    %237 = arith.extf %236 : vector<8x128xbf16> to vector<8x128xf32>
    %c0_184 = arith.constant 0 : index
    %c0_185 = arith.constant 0 : index
    %238 = vector.load %arg7[%c0_184, %c0_185] : memref<2x8xf32, #tpu.memory_space<vmem>>, vector<2x8xf32>
    %cst_186 = arith.constant dense<0.000000e+00> : vector<2x8xf32>
    %239 = tpu.matmul %234, %237, %cst_186 {dimension_numbers = #tpu.dot_dimension_numbers<[1], [1], [0], [0], [0, 0, 1, 0], [], []>} : vector<2x128xf32>, vector<8x128xf32>, vector<2x8xf32> -> vector<2x8xf32>
    %240 = arith.addf %238, %239 : vector<2x8xf32>
    %c0_187 = arith.constant 0 : index
    %c0_188 = arith.constant 0 : index
    %241 = vector.load %arg7[%c0_187, %c0_188] : memref<2x8xf32, #tpu.memory_space<vmem>>, vector<2x8xf32>
    tpu.vector_store %arg7[%c0_187, %c0_188], %240 {strides = array<i32>} : memref<2x8xf32, #tpu.memory_space<vmem>>, vector<2x8xf32>,
    %c17 = arith.constant 17 : index
    %c0_189 = arith.constant 0 : index
    %c0_190 = arith.constant 0 : index
    %242 = vector.load %arg3[%c17, %c0_189, %c0_190] : memref<32x2x1xf32, #tpu.memory_space<vmem>>, vector<1x2x1xf32>
    %243 = vector.shape_cast %242 : vector<1x2x1xf32> to vector<2x1xf32>
    %244 = vector.broadcast %243 : vector<2x1xf32> to vector<2x128xf32>
    %245 = arith.mulf %244, %3 : vector<2x128xf32>
    %cst_191 = arith.constant 9.99999974E-6 : f32
    %246 = vector.broadcast %cst_191 : f32 to vector<2x128xf32>
    %247 = arith.addf %245, %246 : vector<2x128xf32>
    %248 = math.sqrt %247 : vector<2x128xf32>
    %c17_192 = arith.constant 17 : index
    %c0_193 = arith.constant 0 : index
    %c0_194 = arith.constant 0 : index
    %249 = vector.load %arg4[%c17_192, %c0_193, %c0_194] : memref<32x8x128xbf16, #tpu.memory_space<vmem>>, vector<1x8x128xbf16>
    %250 = vector.shape_cast %249 : vector<1x8x128xbf16> to vector<8x128xbf16>
    %251 = arith.extf %250 : vector<8x128xbf16> to vector<8x128xf32>
    %c0_195 = arith.constant 0 : index
    %c0_196 = arith.constant 0 : index
    %252 = vector.load %arg7[%c0_195, %c0_196] : memref<2x8xf32, #tpu.memory_space<vmem>>, vector<2x8xf32>
    %cst_197 = arith.constant dense<0.000000e+00> : vector<2x8xf32>
    %253 = tpu.matmul %248, %251, %cst_197 {dimension_numbers = #tpu.dot_dimension_numbers<[1], [1], [0], [0], [0, 0, 1, 0], [], []>} : vector<2x128xf32>, vector<8x128xf32>, vector<2x8xf32> -> vector<2x8xf32>
    %254 = arith.addf %252, %253 : vector<2x8xf32>
    %c0_198 = arith.constant 0 : index
    %c0_199 = arith.constant 0 : index
    %255 = vector.load %arg7[%c0_198, %c0_199] : memref<2x8xf32, #tpu.memory_space<vmem>>, vector<2x8xf32>
    tpu.vector_store %arg7[%c0_198, %c0_199], %254 {strides = array<i32>} : memref<2x8xf32, #tpu.memory_space<vmem>>, vector<2x8xf32>,
    %c18 = arith.constant 18 : index
    %c0_200 = arith.constant 0 : index
    %c0_201 = arith.constant 0 : index
    %256 = vector.load %arg3[%c18, %c0_200, %c0_201] : memref<32x2x1xf32, #tpu.memory_space<vmem>>, vector<1x2x1xf32>
    %257 = vector.shape_cast %256 : vector<1x2x1xf32> to vector<2x1xf32>
    %258 = vector.broadcast %257 : vector<2x1xf32> to vector<2x128xf32>
    %259 = arith.mulf %258, %3 : vector<2x128xf32>
    %cst_202 = arith.constant 9.99999974E-6 : f32
    %260 = vector.broadcast %cst_202 : f32 to vector<2x128xf32>
    %261 = arith.addf %259, %260 : vector<2x128xf32>
    %262 = math.sqrt %261 : vector<2x128xf32>
    %c18_203 = arith.constant 18 : index
    %c0_204 = arith.constant 0 : index
    %c0_205 = arith.constant 0 : index
    %263 = vector.load %arg4[%c18_203, %c0_204, %c0_205] : memref<32x8x128xbf16, #tpu.memory_space<vmem>>, vector<1x8x128xbf16>
    %264 = vector.shape_cast %263 : vector<1x8x128xbf16> to vector<8x128xbf16>
    %265 = arith.extf %264 : vector<8x128xbf16> to vector<8x128xf32>
    %c0_206 = arith.constant 0 : index
    %c0_207 = arith.constant 0 : index
    %266 = vector.load %arg7[%c0_206, %c0_207] : memref<2x8xf32, #tpu.memory_space<vmem>>, vector<2x8xf32>
    %cst_208 = arith.constant dense<0.000000e+00> : vector<2x8xf32>
    %267 = tpu.matmul %262, %265, %cst_208 {dimension_numbers = #tpu.dot_dimension_numbers<[1], [1], [0], [0], [0, 0, 1, 0], [], []>} : vector<2x128xf32>, vector<8x128xf32>, vector<2x8xf32> -> vector<2x8xf32>
    %268 = arith.addf %266, %267 : vector<2x8xf32>
    %c0_209 = arith.constant 0 : index
    %c0_210 = arith.constant 0 : index
    %269 = vector.load %arg7[%c0_209, %c0_210] : memref<2x8xf32, #tpu.memory_space<vmem>>, vector<2x8xf32>
    tpu.vector_store %arg7[%c0_209, %c0_210], %268 {strides = array<i32>} : memref<2x8xf32, #tpu.memory_space<vmem>>, vector<2x8xf32>,
    %c19 = arith.constant 19 : index
    %c0_211 = arith.constant 0 : index
    %c0_212 = arith.constant 0 : index
    %270 = vector.load %arg3[%c19, %c0_211, %c0_212] : memref<32x2x1xf32, #tpu.memory_space<vmem>>, vector<1x2x1xf32>
    %271 = vector.shape_cast %270 : vector<1x2x1xf32> to vector<2x1xf32>
    %272 = vector.broadcast %271 : vector<2x1xf32> to vector<2x128xf32>
    %273 = arith.mulf %272, %3 : vector<2x128xf32>
    %cst_213 = arith.constant 9.99999974E-6 : f32
    %274 = vector.broadcast %cst_213 : f32 to vector<2x128xf32>
    %275 = arith.addf %273, %274 : vector<2x128xf32>
    %276 = math.sqrt %275 : vector<2x128xf32>
    %c19_214 = arith.constant 19 : index
    %c0_215 = arith.constant 0 : index
    %c0_216 = arith.constant 0 : index
    %277 = vector.load %arg4[%c19_214, %c0_215, %c0_216] : memref<32x8x128xbf16, #tpu.memory_space<vmem>>, vector<1x8x128xbf16>
    %278 = vector.shape_cast %277 : vector<1x8x128xbf16> to vector<8x128xbf16>
    %279 = arith.extf %278 : vector<8x128xbf16> to vector<8x128xf32>
    %c0_217 = arith.constant 0 : index
    %c0_218 = arith.constant 0 : index
    %280 = vector.load %arg7[%c0_217, %c0_218] : memref<2x8xf32, #tpu.memory_space<vmem>>, vector<2x8xf32>
    %cst_219 = arith.constant dense<0.000000e+00> : vector<2x8xf32>
    %281 = tpu.matmul %276, %279, %cst_219 {dimension_numbers = #tpu.dot_dimension_numbers<[1], [1], [0], [0], [0, 0, 1, 0], [], []>} : vector<2x128xf32>, vector<8x128xf32>, vector<2x8xf32> -> vector<2x8xf32>
    %282 = arith.addf %280, %281 : vector<2x8xf32>
    %c0_220 = arith.constant 0 : index
    %c0_221 = arith.constant 0 : index
    %283 = vector.load %arg7[%c0_220, %c0_221] : memref<2x8xf32, #tpu.memory_space<vmem>>, vector<2x8xf32>
    tpu.vector_store %arg7[%c0_220, %c0_221], %282 {strides = array<i32>} : memref<2x8xf32, #tpu.memory_space<vmem>>, vector<2x8xf32>,
    %c20 = arith.constant 20 : index
    %c0_222 = arith.constant 0 : index
    %c0_223 = arith.constant 0 : index
    %284 = vector.load %arg3[%c20, %c0_222, %c0_223] : memref<32x2x1xf32, #tpu.memory_space<vmem>>, vector<1x2x1xf32>
    %285 = vector.shape_cast %284 : vector<1x2x1xf32> to vector<2x1xf32>
    %286 = vector.broadcast %285 : vector<2x1xf32> to vector<2x128xf32>
    %287 = arith.mulf %286, %3 : vector<2x128xf32>
    %cst_224 = arith.constant 9.99999974E-6 : f32
    %288 = vector.broadcast %cst_224 : f32 to vector<2x128xf32>
    %289 = arith.addf %287, %288 : vector<2x128xf32>
    %290 = math.sqrt %289 : vector<2x128xf32>
    %c20_225 = arith.constant 20 : index
    %c0_226 = arith.constant 0 : index
    %c0_227 = arith.constant 0 : index
    %291 = vector.load %arg4[%c20_225, %c0_226, %c0_227] : memref<32x8x128xbf16, #tpu.memory_space<vmem>>, vector<1x8x128xbf16>
    %292 = vector.shape_cast %291 : vector<1x8x128xbf16> to vector<8x128xbf16>
    %293 = arith.extf %292 : vector<8x128xbf16> to vector<8x128xf32>
    %c0_228 = arith.constant 0 : index
    %c0_229 = arith.constant 0 : index
    %294 = vector.load %arg7[%c0_228, %c0_229] : memref<2x8xf32, #tpu.memory_space<vmem>>, vector<2x8xf32>
    %cst_230 = arith.constant dense<0.000000e+00> : vector<2x8xf32>
    %295 = tpu.matmul %290, %293, %cst_230 {dimension_numbers = #tpu.dot_dimension_numbers<[1], [1], [0], [0], [0, 0, 1, 0], [], []>} : vector<2x128xf32>, vector<8x128xf32>, vector<2x8xf32> -> vector<2x8xf32>
    %296 = arith.addf %294, %295 : vector<2x8xf32>
    %c0_231 = arith.constant 0 : index
    %c0_232 = arith.constant 0 : index
    %297 = vector.load %arg7[%c0_231, %c0_232] : memref<2x8xf32, #tpu.memory_space<vmem>>, vector<2x8xf32>
    tpu.vector_store %arg7[%c0_231, %c0_232], %296 {strides = array<i32>} : memref<2x8xf32, #tpu.memory_space<vmem>>, vector<2x8xf32>,
    %c21 = arith.constant 21 : index
    %c0_233 = arith.constant 0 : index
    %c0_234 = arith.constant 0 : index
    %298 = vector.load %arg3[%c21, %c0_233, %c0_234] : memref<32x2x1xf32, #tpu.memory_space<vmem>>, vector<1x2x1xf32>
    %299 = vector.shape_cast %298 : vector<1x2x1xf32> to vector<2x1xf32>
    %300 = vector.broadcast %299 : vector<2x1xf32> to vector<2x128xf32>
    %301 = arith.mulf %300, %3 : vector<2x128xf32>
    %cst_235 = arith.constant 9.99999974E-6 : f32
    %302 = vector.broadcast %cst_235 : f32 to vector<2x128xf32>
    %303 = arith.addf %301, %302 : vector<2x128xf32>
    %304 = math.sqrt %303 : vector<2x128xf32>
    %c21_236 = arith.constant 21 : index
    %c0_237 = arith.constant 0 : index
    %c0_238 = arith.constant 0 : index
    %305 = vector.load %arg4[%c21_236, %c0_237, %c0_238] : memref<32x8x128xbf16, #tpu.memory_space<vmem>>, vector<1x8x128xbf16>
    %306 = vector.shape_cast %305 : vector<1x8x128xbf16> to vector<8x128xbf16>
    %307 = arith.extf %306 : vector<8x128xbf16> to vector<8x128xf32>
    %c0_239 = arith.constant 0 : index
    %c0_240 = arith.constant 0 : index
    %308 = vector.load %arg7[%c0_239, %c0_240] : memref<2x8xf32, #tpu.memory_space<vmem>>, vector<2x8xf32>
    %cst_241 = arith.constant dense<0.000000e+00> : vector<2x8xf32>
    %309 = tpu.matmul %304, %307, %cst_241 {dimension_numbers = #tpu.dot_dimension_numbers<[1], [1], [0], [0], [0, 0, 1, 0], [], []>} : vector<2x128xf32>, vector<8x128xf32>, vector<2x8xf32> -> vector<2x8xf32>
    %310 = arith.addf %308, %309 : vector<2x8xf32>
    %c0_242 = arith.constant 0 : index
    %c0_243 = arith.constant 0 : index
    %311 = vector.load %arg7[%c0_242, %c0_243] : memref<2x8xf32, #tpu.memory_space<vmem>>, vector<2x8xf32>
    tpu.vector_store %arg7[%c0_242, %c0_243], %310 {strides = array<i32>} : memref<2x8xf32, #tpu.memory_space<vmem>>, vector<2x8xf32>,
    %c22 = arith.constant 22 : index
    %c0_244 = arith.constant 0 : index
    %c0_245 = arith.constant 0 : index
    %312 = vector.load %arg3[%c22, %c0_244, %c0_245] : memref<32x2x1xf32, #tpu.memory_space<vmem>>, vector<1x2x1xf32>
    %313 = vector.shape_cast %312 : vector<1x2x1xf32> to vector<2x1xf32>
    %314 = vector.broadcast %313 : vector<2x1xf32> to vector<2x128xf32>
    %315 = arith.mulf %314, %3 : vector<2x128xf32>
    %cst_246 = arith.constant 9.99999974E-6 : f32
    %316 = vector.broadcast %cst_246 : f32 to vector<2x128xf32>
    %317 = arith.addf %315, %316 : vector<2x128xf32>
    %318 = math.sqrt %317 : vector<2x128xf32>
    %c22_247 = arith.constant 22 : index
    %c0_248 = arith.constant 0 : index
    %c0_249 = arith.constant 0 : index
    %319 = vector.load %arg4[%c22_247, %c0_248, %c0_249] : memref<32x8x128xbf16, #tpu.memory_space<vmem>>, vector<1x8x128xbf16>
    %320 = vector.shape_cast %319 : vector<1x8x128xbf16> to vector<8x128xbf16>
    %321 = arith.extf %320 : vector<8x128xbf16> to vector<8x128xf32>
    %c0_250 = arith.constant 0 : index
    %c0_251 = arith.constant 0 : index
    %322 = vector.load %arg7[%c0_250, %c0_251] : memref<2x8xf32, #tpu.memory_space<vmem>>, vector<2x8xf32>
    %cst_252 = arith.constant dense<0.000000e+00> : vector<2x8xf32>
    %323 = tpu.matmul %318, %321, %cst_252 {dimension_numbers = #tpu.dot_dimension_numbers<[1], [1], [0], [0], [0, 0, 1, 0], [], []>} : vector<2x128xf32>, vector<8x128xf32>, vector<2x8xf32> -> vector<2x8xf32>
    %324 = arith.addf %322, %323 : vector<2x8xf32>
    %c0_253 = arith.constant 0 : index
    %c0_254 = arith.constant 0 : index
    %325 = vector.load %arg7[%c0_253, %c0_254] : memref<2x8xf32, #tpu.memory_space<vmem>>, vector<2x8xf32>
    tpu.vector_store %arg7[%c0_253, %c0_254], %324 {strides = array<i32>} : memref<2x8xf32, #tpu.memory_space<vmem>>, vector<2x8xf32>,
    %c23 = arith.constant 23 : index
    %c0_255 = arith.constant 0 : index
    %c0_256 = arith.constant 0 : index
    %326 = vector.load %arg3[%c23, %c0_255, %c0_256] : memref<32x2x1xf32, #tpu.memory_space<vmem>>, vector<1x2x1xf32>
    %327 = vector.shape_cast %326 : vector<1x2x1xf32> to vector<2x1xf32>
    %328 = vector.broadcast %327 : vector<2x1xf32> to vector<2x128xf32>
    %329 = arith.mulf %328, %3 : vector<2x128xf32>
    %cst_257 = arith.constant 9.99999974E-6 : f32
    %330 = vector.broadcast %cst_257 : f32 to vector<2x128xf32>
    %331 = arith.addf %329, %330 : vector<2x128xf32>
    %332 = math.sqrt %331 : vector<2x128xf32>
    %c23_258 = arith.constant 23 : index
    %c0_259 = arith.constant 0 : index
    %c0_260 = arith.constant 0 : index
    %333 = vector.load %arg4[%c23_258, %c0_259, %c0_260] : memref<32x8x128xbf16, #tpu.memory_space<vmem>>, vector<1x8x128xbf16>
    %334 = vector.shape_cast %333 : vector<1x8x128xbf16> to vector<8x128xbf16>
    %335 = arith.extf %334 : vector<8x128xbf16> to vector<8x128xf32>
    %c0_261 = arith.constant 0 : index
    %c0_262 = arith.constant 0 : index
    %336 = vector.load %arg7[%c0_261, %c0_262] : memref<2x8xf32, #tpu.memory_space<vmem>>, vector<2x8xf32>
    %cst_263 = arith.constant dense<0.000000e+00> : vector<2x8xf32>
    %337 = tpu.matmul %332, %335, %cst_263 {dimension_numbers = #tpu.dot_dimension_numbers<[1], [1], [0], [0], [0, 0, 1, 0], [], []>} : vector<2x128xf32>, vector<8x128xf32>, vector<2x8xf32> -> vector<2x8xf32>
    %338 = arith.addf %336, %337 : vector<2x8xf32>
    %c0_264 = arith.constant 0 : index
    %c0_265 = arith.constant 0 : index
    %339 = vector.load %arg7[%c0_264, %c0_265] : memref<2x8xf32, #tpu.memory_space<vmem>>, vector<2x8xf32>
    tpu.vector_store %arg7[%c0_264, %c0_265], %338 {strides = array<i32>} : memref<2x8xf32, #tpu.memory_space<vmem>>, vector<2x8xf32>,
    %c24 = arith.constant 24 : index
    %c0_266 = arith.constant 0 : index
    %c0_267 = arith.constant 0 : index
    %340 = vector.load %arg3[%c24, %c0_266, %c0_267] : memref<32x2x1xf32, #tpu.memory_space<vmem>>, vector<1x2x1xf32>
    %341 = vector.shape_cast %340 : vector<1x2x1xf32> to vector<2x1xf32>
    %342 = vector.broadcast %341 : vector<2x1xf32> to vector<2x128xf32>
    %343 = arith.mulf %342, %3 : vector<2x128xf32>
    %cst_268 = arith.constant 9.99999974E-6 : f32
    %344 = vector.broadcast %cst_268 : f32 to vector<2x128xf32>
    %345 = arith.addf %343, %344 : vector<2x128xf32>
    %346 = math.sqrt %345 : vector<2x128xf32>
    %c24_269 = arith.constant 24 : index
    %c0_270 = arith.constant 0 : index
    %c0_271 = arith.constant 0 : index
    %347 = vector.load %arg4[%c24_269, %c0_270, %c0_271] : memref<32x8x128xbf16, #tpu.memory_space<vmem>>, vector<1x8x128xbf16>
    %348 = vector.shape_cast %347 : vector<1x8x128xbf16> to vector<8x128xbf16>
    %349 = arith.extf %348 : vector<8x128xbf16> to vector<8x128xf32>
    %c0_272 = arith.constant 0 : index
    %c0_273 = arith.constant 0 : index
    %350 = vector.load %arg7[%c0_272, %c0_273] : memref<2x8xf32, #tpu.memory_space<vmem>>, vector<2x8xf32>
    %cst_274 = arith.constant dense<0.000000e+00> : vector<2x8xf32>
    %351 = tpu.matmul %346, %349, %cst_274 {dimension_numbers = #tpu.dot_dimension_numbers<[1], [1], [0], [0], [0, 0, 1, 0], [], []>} : vector<2x128xf32>, vector<8x128xf32>, vector<2x8xf32> -> vector<2x8xf32>
    %352 = arith.addf %350, %351 : vector<2x8xf32>
    %c0_275 = arith.constant 0 : index
    %c0_276 = arith.constant 0 : index
    %353 = vector.load %arg7[%c0_275, %c0_276] : memref<2x8xf32, #tpu.memory_space<vmem>>, vector<2x8xf32>
    tpu.vector_store %arg7[%c0_275, %c0_276], %352 {strides = array<i32>} : memref<2x8xf32, #tpu.memory_space<vmem>>, vector<2x8xf32>,
    %c25 = arith.constant 25 : index
    %c0_277 = arith.constant 0 : index
    %c0_278 = arith.constant 0 : index
    %354 = vector.load %arg3[%c25, %c0_277, %c0_278] : memref<32x2x1xf32, #tpu.memory_space<vmem>>, vector<1x2x1xf32>
    %355 = vector.shape_cast %354 : vector<1x2x1xf32> to vector<2x1xf32>
    %356 = vector.broadcast %355 : vector<2x1xf32> to vector<2x128xf32>
    %357 = arith.mulf %356, %3 : vector<2x128xf32>
    %cst_279 = arith.constant 9.99999974E-6 : f32
    %358 = vector.broadcast %cst_279 : f32 to vector<2x128xf32>
    %359 = arith.addf %357, %358 : vector<2x128xf32>
    %360 = math.sqrt %359 : vector<2x128xf32>
    %c25_280 = arith.constant 25 : index
    %c0_281 = arith.constant 0 : index
    %c0_282 = arith.constant 0 : index
    %361 = vector.load %arg4[%c25_280, %c0_281, %c0_282] : memref<32x8x128xbf16, #tpu.memory_space<vmem>>, vector<1x8x128xbf16>
    %362 = vector.shape_cast %361 : vector<1x8x128xbf16> to vector<8x128xbf16>
    %363 = arith.extf %362 : vector<8x128xbf16> to vector<8x128xf32>
    %c0_283 = arith.constant 0 : index
    %c0_284 = arith.constant 0 : index
    %364 = vector.load %arg7[%c0_283, %c0_284] : memref<2x8xf32, #tpu.memory_space<vmem>>, vector<2x8xf32>
    %cst_285 = arith.constant dense<0.000000e+00> : vector<2x8xf32>
    %365 = tpu.matmul %360, %363, %cst_285 {dimension_numbers = #tpu.dot_dimension_numbers<[1], [1], [0], [0], [0, 0, 1, 0], [], []>} : vector<2x128xf32>, vector<8x128xf32>, vector<2x8xf32> -> vector<2x8xf32>
    %366 = arith.addf %364, %365 : vector<2x8xf32>
    %c0_286 = arith.constant 0 : index
    %c0_287 = arith.constant 0 : index
    %367 = vector.load %arg7[%c0_286, %c0_287] : memref<2x8xf32, #tpu.memory_space<vmem>>, vector<2x8xf32>
    tpu.vector_store %arg7[%c0_286, %c0_287], %366 {strides = array<i32>} : memref<2x8xf32, #tpu.memory_space<vmem>>, vector<2x8xf32>,
    %c26 = arith.constant 26 : index
    %c0_288 = arith.constant 0 : index
    %c0_289 = arith.constant 0 : index
    %368 = vector.load %arg3[%c26, %c0_288, %c0_289] : memref<32x2x1xf32, #tpu.memory_space<vmem>>, vector<1x2x1xf32>
    %369 = vector.shape_cast %368 : vector<1x2x1xf32> to vector<2x1xf32>
    %370 = vector.broadcast %369 : vector<2x1xf32> to vector<2x128xf32>
    %371 = arith.mulf %370, %3 : vector<2x128xf32>
    %cst_290 = arith.constant 9.99999974E-6 : f32
    %372 = vector.broadcast %cst_290 : f32 to vector<2x128xf32>
    %373 = arith.addf %371, %372 : vector<2x128xf32>
    %374 = math.sqrt %373 : vector<2x128xf32>
    %c26_291 = arith.constant 26 : index
    %c0_292 = arith.constant 0 : index
    %c0_293 = arith.constant 0 : index
    %375 = vector.load %arg4[%c26_291, %c0_292, %c0_293] : memref<32x8x128xbf16, #tpu.memory_space<vmem>>, vector<1x8x128xbf16>
    %376 = vector.shape_cast %375 : vector<1x8x128xbf16> to vector<8x128xbf16>
    %377 = arith.extf %376 : vector<8x128xbf16> to vector<8x128xf32>
    %c0_294 = arith.constant 0 : index
    %c0_295 = arith.constant 0 : index
    %378 = vector.load %arg7[%c0_294, %c0_295] : memref<2x8xf32, #tpu.memory_space<vmem>>, vector<2x8xf32>
    %cst_296 = arith.constant dense<0.000000e+00> : vector<2x8xf32>
    %379 = tpu.matmul %374, %377, %cst_296 {dimension_numbers = #tpu.dot_dimension_numbers<[1], [1], [0], [0], [0, 0, 1, 0], [], []>} : vector<2x128xf32>, vector<8x128xf32>, vector<2x8xf32> -> vector<2x8xf32>
    %380 = arith.addf %378, %379 : vector<2x8xf32>
    %c0_297 = arith.constant 0 : index
    %c0_298 = arith.constant 0 : index
    %381 = vector.load %arg7[%c0_297, %c0_298] : memref<2x8xf32, #tpu.memory_space<vmem>>, vector<2x8xf32>
    tpu.vector_store %arg7[%c0_297, %c0_298], %380 {strides = array<i32>} : memref<2x8xf32, #tpu.memory_space<vmem>>, vector<2x8xf32>,
    %c27 = arith.constant 27 : index
    %c0_299 = arith.constant 0 : index
    %c0_300 = arith.constant 0 : index
    %382 = vector.load %arg3[%c27, %c0_299, %c0_300] : memref<32x2x1xf32, #tpu.memory_space<vmem>>, vector<1x2x1xf32>
    %383 = vector.shape_cast %382 : vector<1x2x1xf32> to vector<2x1xf32>
    %384 = vector.broadcast %383 : vector<2x1xf32> to vector<2x128xf32>
    %385 = arith.mulf %384, %3 : vector<2x128xf32>
    %cst_301 = arith.constant 9.99999974E-6 : f32
    %386 = vector.broadcast %cst_301 : f32 to vector<2x128xf32>
    %387 = arith.addf %385, %386 : vector<2x128xf32>
    %388 = math.sqrt %387 : vector<2x128xf32>
    %c27_302 = arith.constant 27 : index
    %c0_303 = arith.constant 0 : index
    %c0_304 = arith.constant 0 : index
    %389 = vector.load %arg4[%c27_302, %c0_303, %c0_304] : memref<32x8x128xbf16, #tpu.memory_space<vmem>>, vector<1x8x128xbf16>
    %390 = vector.shape_cast %389 : vector<1x8x128xbf16> to vector<8x128xbf16>
    %391 = arith.extf %390 : vector<8x128xbf16> to vector<8x128xf32>
    %c0_305 = arith.constant 0 : index
    %c0_306 = arith.constant 0 : index
    %392 = vector.load %arg7[%c0_305, %c0_306] : memref<2x8xf32, #tpu.memory_space<vmem>>, vector<2x8xf32>
    %cst_307 = arith.constant dense<0.000000e+00> : vector<2x8xf32>
    %393 = tpu.matmul %388, %391, %cst_307 {dimension_numbers = #tpu.dot_dimension_numbers<[1], [1], [0], [0], [0, 0, 1, 0], [], []>} : vector<2x128xf32>, vector<8x128xf32>, vector<2x8xf32> -> vector<2x8xf32>
    %394 = arith.addf %392, %393 : vector<2x8xf32>
    %c0_308 = arith.constant 0 : index
    %c0_309 = arith.constant 0 : index
    %395 = vector.load %arg7[%c0_308, %c0_309] : memref<2x8xf32, #tpu.memory_space<vmem>>, vector<2x8xf32>
    tpu.vector_store %arg7[%c0_308, %c0_309], %394 {strides = array<i32>} : memref<2x8xf32, #tpu.memory_space<vmem>>, vector<2x8xf32>,
    %c28 = arith.constant 28 : index
    %c0_310 = arith.constant 0 : index
    %c0_311 = arith.constant 0 : index
    %396 = vector.load %arg3[%c28, %c0_310, %c0_311] : memref<32x2x1xf32, #tpu.memory_space<vmem>>, vector<1x2x1xf32>
    %397 = vector.shape_cast %396 : vector<1x2x1xf32> to vector<2x1xf32>
    %398 = vector.broadcast %397 : vector<2x1xf32> to vector<2x128xf32>
    %399 = arith.mulf %398, %3 : vector<2x128xf32>
    %cst_312 = arith.constant 9.99999974E-6 : f32
    %400 = vector.broadcast %cst_312 : f32 to vector<2x128xf32>
    %401 = arith.addf %399, %400 : vector<2x128xf32>
    %402 = math.sqrt %401 : vector<2x128xf32>
    %c28_313 = arith.constant 28 : index
    %c0_314 = arith.constant 0 : index
    %c0_315 = arith.constant 0 : index
    %403 = vector.load %arg4[%c28_313, %c0_314, %c0_315] : memref<32x8x128xbf16, #tpu.memory_space<vmem>>, vector<1x8x128xbf16>
    %404 = vector.shape_cast %403 : vector<1x8x128xbf16> to vector<8x128xbf16>
    %405 = arith.extf %404 : vector<8x128xbf16> to vector<8x128xf32>
    %c0_316 = arith.constant 0 : index
    %c0_317 = arith.constant 0 : index
    %406 = vector.load %arg7[%c0_316, %c0_317] : memref<2x8xf32, #tpu.memory_space<vmem>>, vector<2x8xf32>
    %cst_318 = arith.constant dense<0.000000e+00> : vector<2x8xf32>
    %407 = tpu.matmul %402, %405, %cst_318 {dimension_numbers = #tpu.dot_dimension_numbers<[1], [1], [0], [0], [0, 0, 1, 0], [], []>} : vector<2x128xf32>, vector<8x128xf32>, vector<2x8xf32> -> vector<2x8xf32>
    %408 = arith.addf %406, %407 : vector<2x8xf32>
    %c0_319 = arith.constant 0 : index
    %c0_320 = arith.constant 0 : index
    %409 = vector.load %arg7[%c0_319, %c0_320] : memref<2x8xf32, #tpu.memory_space<vmem>>, vector<2x8xf32>
    tpu.vector_store %arg7[%c0_319, %c0_320], %408 {strides = array<i32>} : memref<2x8xf32, #tpu.memory_space<vmem>>, vector<2x8xf32>,
    %c29 = arith.constant 29 : index
    %c0_321 = arith.constant 0 : index
    %c0_322 = arith.constant 0 : index
    %410 = vector.load %arg3[%c29, %c0_321, %c0_322] : memref<32x2x1xf32, #tpu.memory_space<vmem>>, vector<1x2x1xf32>
    %411 = vector.shape_cast %410 : vector<1x2x1xf32> to vector<2x1xf32>
    %412 = vector.broadcast %411 : vector<2x1xf32> to vector<2x128xf32>
    %413 = arith.mulf %412, %3 : vector<2x128xf32>
    %cst_323 = arith.constant 9.99999974E-6 : f32
    %414 = vector.broadcast %cst_323 : f32 to vector<2x128xf32>
    %415 = arith.addf %413, %414 : vector<2x128xf32>
    %416 = math.sqrt %415 : vector<2x128xf32>
    %c29_324 = arith.constant 29 : index
    %c0_325 = arith.constant 0 : index
    %c0_326 = arith.constant 0 : index
    %417 = vector.load %arg4[%c29_324, %c0_325, %c0_326] : memref<32x8x128xbf16, #tpu.memory_space<vmem>>, vector<1x8x128xbf16>
    %418 = vector.shape_cast %417 : vector<1x8x128xbf16> to vector<8x128xbf16>
    %419 = arith.extf %418 : vector<8x128xbf16> to vector<8x128xf32>
    %c0_327 = arith.constant 0 : index
    %c0_328 = arith.constant 0 : index
    %420 = vector.load %arg7[%c0_327, %c0_328] : memref<2x8xf32, #tpu.memory_space<vmem>>, vector<2x8xf32>
    %cst_329 = arith.constant dense<0.000000e+00> : vector<2x8xf32>
    %421 = tpu.matmul %416, %419, %cst_329 {dimension_numbers = #tpu.dot_dimension_numbers<[1], [1], [0], [0], [0, 0, 1, 0], [], []>} : vector<2x128xf32>, vector<8x128xf32>, vector<2x8xf32> -> vector<2x8xf32>
    %422 = arith.addf %420, %421 : vector<2x8xf32>
    %c0_330 = arith.constant 0 : index
    %c0_331 = arith.constant 0 : index
    %423 = vector.load %arg7[%c0_330, %c0_331] : memref<2x8xf32, #tpu.memory_space<vmem>>, vector<2x8xf32>
    tpu.vector_store %arg7[%c0_330, %c0_331], %422 {strides = array<i32>} : memref<2x8xf32, #tpu.memory_space<vmem>>, vector<2x8xf32>,
    %c30 = arith.constant 30 : index
    %c0_332 = arith.constant 0 : index
    %c0_333 = arith.constant 0 : index
    %424 = vector.load %arg3[%c30, %c0_332, %c0_333] : memref<32x2x1xf32, #tpu.memory_space<vmem>>, vector<1x2x1xf32>
    %425 = vector.shape_cast %424 : vector<1x2x1xf32> to vector<2x1xf32>
    %426 = vector.broadcast %425 : vector<2x1xf32> to vector<2x128xf32>
    %427 = arith.mulf %426, %3 : vector<2x128xf32>
    %cst_334 = arith.constant 9.99999974E-6 : f32
    %428 = vector.broadcast %cst_334 : f32 to vector<2x128xf32>
    %429 = arith.addf %427, %428 : vector<2x128xf32>
    %430 = math.sqrt %429 : vector<2x128xf32>
    %c30_335 = arith.constant 30 : index
    %c0_336 = arith.constant 0 : index
    %c0_337 = arith.constant 0 : index
    %431 = vector.load %arg4[%c30_335, %c0_336, %c0_337] : memref<32x8x128xbf16, #tpu.memory_space<vmem>>, vector<1x8x128xbf16>
    %432 = vector.shape_cast %431 : vector<1x8x128xbf16> to vector<8x128xbf16>
    %433 = arith.extf %432 : vector<8x128xbf16> to vector<8x128xf32>
    %c0_338 = arith.constant 0 : index
    %c0_339 = arith.constant 0 : index
    %434 = vector.load %arg7[%c0_338, %c0_339] : memref<2x8xf32, #tpu.memory_space<vmem>>, vector<2x8xf32>
    %cst_340 = arith.constant dense<0.000000e+00> : vector<2x8xf32>
    %435 = tpu.matmul %430, %433, %cst_340 {dimension_numbers = #tpu.dot_dimension_numbers<[1], [1], [0], [0], [0, 0, 1, 0], [], []>} : vector<2x128xf32>, vector<8x128xf32>, vector<2x8xf32> -> vector<2x8xf32>
    %436 = arith.addf %434, %435 : vector<2x8xf32>
    %c0_341 = arith.constant 0 : index
    %c0_342 = arith.constant 0 : index
    %437 = vector.load %arg7[%c0_341, %c0_342] : memref<2x8xf32, #tpu.memory_space<vmem>>, vector<2x8xf32>
    tpu.vector_store %arg7[%c0_341, %c0_342], %436 {strides = array<i32>} : memref<2x8xf32, #tpu.memory_space<vmem>>, vector<2x8xf32>,
    %c31 = arith.constant 31 : index
    %c0_343 = arith.constant 0 : index
    %c0_344 = arith.constant 0 : index
    %438 = vector.load %arg3[%c31, %c0_343, %c0_344] : memref<32x2x1xf32, #tpu.memory_space<vmem>>, vector<1x2x1xf32>
    %439 = vector.shape_cast %438 : vector<1x2x1xf32> to vector<2x1xf32>
    %440 = vector.broadcast %439 : vector<2x1xf32> to vector<2x128xf32>
    %441 = arith.mulf %440, %3 : vector<2x128xf32>
    %cst_345 = arith.constant 9.99999974E-6 : f32
    %442 = vector.broadcast %cst_345 : f32 to vector<2x128xf32>
    %443 = arith.addf %441, %442 : vector<2x128xf32>
    %444 = math.sqrt %443 : vector<2x128xf32>
    %c31_346 = arith.constant 31 : index
    %c0_347 = arith.constant 0 : index
    %c0_348 = arith.constant 0 : index
    %445 = vector.load %arg4[%c31_346, %c0_347, %c0_348] : memref<32x8x128xbf16, #tpu.memory_space<vmem>>, vector<1x8x128xbf16>
    %446 = vector.shape_cast %445 : vector<1x8x128xbf16> to vector<8x128xbf16>
    %447 = arith.extf %446 : vector<8x128xbf16> to vector<8x128xf32>
    %c0_349 = arith.constant 0 : index
    %c0_350 = arith.constant 0 : index
    %448 = vector.load %arg7[%c0_349, %c0_350] : memref<2x8xf32, #tpu.memory_space<vmem>>, vector<2x8xf32>
    %cst_351 = arith.constant dense<0.000000e+00> : vector<2x8xf32>
    %449 = tpu.matmul %444, %447, %cst_351 {dimension_numbers = #tpu.dot_dimension_numbers<[1], [1], [0], [0], [0, 0, 1, 0], [], []>} : vector<2x128xf32>, vector<8x128xf32>, vector<2x8xf32> -> vector<2x8xf32>
    %450 = arith.addf %448, %449 : vector<2x8xf32>
    %c0_352 = arith.constant 0 : index
    %c0_353 = arith.constant 0 : index
    %451 = vector.load %arg7[%c0_352, %c0_353] : memref<2x8xf32, #tpu.memory_space<vmem>>, vector<2x8xf32>
    tpu.vector_store %arg7[%c0_352, %c0_353], %450 {strides = array<i32>} : memref<2x8xf32, #tpu.memory_space<vmem>>, vector<2x8xf32>,
    %c3_i32 = arith.constant 3 : i32
    %452 = arith.cmpi eq, %arg1, %c3_i32 : i32
    %453 = arith.extui %452 : i1 to i32
    %c0_i32_354 = arith.constant 0 : i32
    %454 = arith.cmpi ne, %453, %c0_i32_354 : i32
    scf.if %454 {
      %cst_355 = arith.constant dense<0.000000e+00> : vector<2xf32>
      %455 = vector.multi_reduction <add>, %3, %cst_355 [1] : vector<2x128xf32> to vector<2xf32>
      %456 = vector.shape_cast %455 : vector<2xf32> to vector<2x1xf32>
      %457 = arith.mulf %456, %456 : vector<2x1xf32>
      %cst_356 = arith.constant 1.638400e-01 : f32
      %458 = vector.broadcast %cst_356 : f32 to vector<2x1xf32>
      %459 = arith.addf %457, %458 : vector<2x1xf32>
      %460 = math.sqrt %459 : vector<2x1xf32>
      %cst_357 = arith.constant 9.99999996E-13 : f32
      %461 = vector.broadcast %cst_357 : f32 to vector<2x1xf32>
      %462 = arith.maximumf %460, %461 : vector<2x1xf32>
      %463 = tpu.reciprocal %462 {approx = true} : vector<2x1xf32> -> vector<2x1xf32>
      %c0_358 = arith.constant 0 : index
      %c0_359 = arith.constant 0 : index
      %464 = vector.load %arg7[%c0_358, %c0_359] : memref<2x8xf32, #tpu.memory_space<vmem>>, vector<2x8xf32>
      %465 = vector.broadcast %463 : vector<2x1xf32> to vector<2x8xf32>
      %466 = arith.mulf %464, %465 : vector<2x8xf32>
      %c0_360 = arith.constant 0 : index
      %c0_361 = arith.constant 0 : index
      %467 = vector.load %arg5[%c0_360, %c0_361] : memref<1x8xf32, #tpu.memory_space<vmem>>, vector<1x8xf32>
      %468 = vector.broadcast %467 : vector<1x8xf32> to vector<2x8xf32>
      %469 = arith.addf %466, %468 : vector<2x8xf32>
      %c0_362 = arith.constant 0 : index
      %c0_363 = arith.constant 0 : index
      %470 = vector.load %arg6[%c0_362, %c0_363] : memref<2x8xf32, #tpu.memory_space<vmem>>, vector<2x8xf32>
      tpu.vector_store %arg6[%c0_362, %c0_363], %469 {strides = array<i32>} : memref<2x8xf32, #tpu.memory_space<vmem>>, vector<2x8xf32>,
    } else {
    }
    return
  }
  func.func @transform_0(%arg0: i32, %arg1: i32) -> (i32, i32) {
    %c0_i32 = arith.constant 0 : i32
    %c0_i32_0 = arith.constant 0 : i32
    return %arg0, %c0_i32 : i32, i32
  }
  func.func @transform_1(%arg0: i32, %arg1: i32) -> (i32, i32, i32) {
    %c0_i32 = arith.constant 0 : i32
    %c0_i32_0 = arith.constant 0 : i32
    return %arg1, %arg0, %c0_i32 : i32, i32, i32
  }
  func.func @transform_2(%arg0: i32, %arg1: i32) -> (i32, i32, i32) {
    %c0_i32 = arith.constant 0 : i32
    %c0_i32_0 = arith.constant 0 : i32
    %c0_i32_1 = arith.constant 0 : i32
    return %arg1, %c0_i32, %c0_i32_0 : i32, i32, i32
  }
  func.func @transform_3(%arg0: i32, %arg1: i32) -> (i32, i32) {
    %c0_i32 = arith.constant 0 : i32
    %c0_i32_0 = arith.constant 0 : i32
    %c0_i32_1 = arith.constant 0 : i32
    return %c0_i32, %c0_i32_0 : i32, i32
  }
  func.func @transform_4(%arg0: i32, %arg1: i32) -> (i32, i32) {
    %c0_i32 = arith.constant 0 : i32
    %c0_i32_0 = arith.constant 0 : i32
    return %arg0, %c0_i32 : i32, i32
  }
}

</mosaic_0001>

<llo_original>
// kernel: classifier_forward.2
$region0: #{classifier_forward.2}
  #allocation0 [shape = 'u32[]', space=smem, size = 0x4, offset = 0x4, fixed_abs, tag = 'smem constant byte address 0x4 - core index']
  #allocation1 [shape = 'u32[72,128]{1,0:T(1,128)}', space=vmem, size = 0x9000, scoped, tag = 'internal scratch']
  %s0 = inlined_call_operand.vmem [shape: f32[2,3,256], index: 0, kind: input, shape index: {}]
  %s1 = inlined_call_operand.vmem [shape: f32[3,128,1], index: 1, kind: input, shape index: {}]
  %s2 = inlined_call_operand.vmem [shape: f32[2,128,1], index: 2, kind: output, shape index: {}]
  %s3 = sld [smem:[#allocation0]]
  $region18: #{classifier_forward.2} parent=0
    _
  %s5 = ssub.s32 1, %s3
  %s6 = scalar_select 0, %s5, %s3
  // Predicated region
  $region2: #{classifier_forward.2} parent=0 // pred_check
    _
  $region3: #{classifier_forward.2} parent=0 // pred_check_branch
    %8 = sbr.rel (0) target = $region5
  $region4: #{classifier_forward.2} parent=0 // pred_region
    _
  $region5: #{classifier_forward.2} parent=0 // pred_fallthru
    _
  // Predicated region
  $region6: #{classifier_forward.2} parent=0 // pred_check
    _
  $region7: #{classifier_forward.2} parent=0 // pred_check_branch
    %10 = sbr.rel (0) target = $region9
  $region8: #{classifier_forward.2} parent=0 // pred_region
    _
  $region9: #{classifier_forward.2} parent=0 // pred_fallthru
    _
  %v11 = vld [vmem:[%s0] sm:$0x77]
  %v12 = vld [vmem:[%s1] sm:$0xff]
  %v13 = vld [vmem:[%s1 + $0x8] sm:$0xff]
  %v14 = vld [vmem:[%s1 + $0x10] sm:$0xff]
  %v15 = vld [vmem:[%s1 + $0x18] sm:$0xff]
  %v16 = vld [vmem:[%s1 + $0x20] sm:$0xff]
  %v17 = vld [vmem:[%s1 + $0x28] sm:$0xff]
  %v18 = vld [vmem:[%s1 + $0x30] sm:$0xff]
  %v19 = vld [vmem:[%s1 + $0x38] sm:$0xff]
  %v20 = vld [vmem:[%s1 + $0x40] sm:$0xff]
  %v21 = vld [vmem:[%s1 + $0x48] sm:$0xff]
  %v22 = vld [vmem:[%s1 + $0x50] sm:$0xff]
  %v23 = vld [vmem:[%s1 + $0x58] sm:$0xff]
  %v24 = vld [vmem:[%s1 + $0x60] sm:$0xff]
  %v25 = vld [vmem:[%s1 + $0x68] sm:$0xff]
  %v26 = vld [vmem:[%s1 + $0x70] sm:$0xff]
  %v27 = vld [vmem:[%s1 + $0x78] sm:$0xff]
  %29 = vset.pattern.permute.xlu0 0
  %30 = vperm.xlu0 %29, %v12
  %v31 = vpop.permute.xlu0 %30
  %34 = vset.pattern.permute.xlu0 0
  %35 = vperm.xlu0 %34, %v13
  %v36 = vpop.permute.xlu0 %35
  %39 = vset.pattern.permute.xlu0 0
  %40 = vperm.xlu0 %39, %v14
  %v41 = vpop.permute.xlu0 %40
  %44 = vset.pattern.permute.xlu0 0
  %45 = vperm.xlu0 %44, %v15
  %v46 = vpop.permute.xlu0 %45
  %49 = vset.pattern.permute.xlu0 0
  %50 = vperm.xlu0 %49, %v16
  %v51 = vpop.permute.xlu0 %50
  %54 = vset.pattern.permute.xlu0 0
  %55 = vperm.xlu0 %54, %v17
  %v56 = vpop.permute.xlu0 %55
  %59 = vset.pattern.permute.xlu0 0
  %60 = vperm.xlu0 %59, %v18
  %v61 = vpop.permute.xlu0 %60
  %64 = vset.pattern.permute.xlu0 0
  %65 = vperm.xlu0 %64, %v19
  %v66 = vpop.permute.xlu0 %65
  %69 = vset.pattern.permute.xlu0 0
  %70 = vperm.xlu0 %69, %v20
  %v71 = vpop.permute.xlu0 %70
  %74 = vset.pattern.permute.xlu0 0
  %75 = vperm.xlu0 %74, %v21
  %v76 = vpop.permute.xlu0 %75
  %79 = vset.pattern.permute.xlu0 0
  %80 = vperm.xlu0 %79, %v22
  %v81 = vpop.permute.xlu0 %80
  %84 = vset.pattern.permute.xlu0 0
  %85 = vperm.xlu0 %84, %v23
  %v86 = vpop.permute.xlu0 %85
  %89 = vset.pattern.permute.xlu0 0
  %90 = vperm.xlu0 %89, %v24
  %v91 = vpop.permute.xlu0 %90
  %94 = vset.pattern.permute.xlu0 0
  %95 = vperm.xlu0 %94, %v25
  %v96 = vpop.permute.xlu0 %95
  %99 = vset.pattern.permute.xlu0 0
  %100 = vperm.xlu0 %99, %v26
  %v101 = vpop.permute.xlu0 %100
  %104 = vset.pattern.permute.xlu0 0
  %105 = vperm.xlu0 %104, %v27
  %v106 = vpop.permute.xlu0 %105
  %v109 = vperm.slane %v11, 0
  %v110 = vperm.slane %v11, 4
  %v113 = vperm.slane %v109, 0
  %v114 = vperm.slane %v110, 0
  %v115 = vmul.f32 %v31, %v113
  %v116 = vmul.f32 %v31, %v114
  %v117 = vmul.f32 %v36, %v113
  %v118 = vmul.f32 %v36, %v114
  %v119 = vmul.f32 %v41, %v113
  %v120 = vmul.f32 %v41, %v114
  %v121 = vmul.f32 %v46, %v113
  %v122 = vmul.f32 %v46, %v114
  %v123 = vmul.f32 %v51, %v113
  %v124 = vmul.f32 %v51, %v114
  %v125 = vmul.f32 %v56, %v113
  %v126 = vmul.f32 %v56, %v114
  %v127 = vmul.f32 %v61, %v113
  %v128 = vmul.f32 %v61, %v114
  %v129 = vmul.f32 %v66, %v113
  %v130 = vmul.f32 %v66, %v114
  %v131 = vmul.f32 %v71, %v113
  %v132 = vmul.f32 %v71, %v114
  %v133 = vmul.f32 %v76, %v113
  %v134 = vmul.f32 %v76, %v114
  %v135 = vmul.f32 %v81, %v113
  %v136 = vmul.f32 %v81, %v114
  %v137 = vmul.f32 %v86, %v113
  %v138 = vmul.f32 %v86, %v114
  %v139 = vmul.f32 %v91, %v113
  %v140 = vmul.f32 %v91, %v114
  %v141 = vmul.f32 %v96, %v113
  %v142 = vmul.f32 %v96, %v114
  %v143 = vmul.f32 %v101, %v113
  %v144 = vmul.f32 %v101, %v114
  %v145 = vmul.f32 %v106, %v113
  %v146 = vmul.f32 %v106, %v114
  %s147 = scalar_lea.vmem %s1, 128
  %v148 = vld [vmem:[%s147] sm:$0xff]
  %v149 = vld [vmem:[%s147 + $0x8] sm:$0xff]
  %v150 = vld [vmem:[%s147 + $0x10] sm:$0xff]
  %v151 = vld [vmem:[%s147 + $0x18] sm:$0xff]
  %v152 = vld [vmem:[%s147 + $0x20] sm:$0xff]
  %v153 = vld [vmem:[%s147 + $0x28] sm:$0xff]
  %v154 = vld [vmem:[%s147 + $0x30] sm:$0xff]
  %v155 = vld [vmem:[%s147 + $0x38] sm:$0xff]
  %v156 = vld [vmem:[%s147 + $0x40] sm:$0xff]
  %v157 = vld [vmem:[%s147 + $0x48] sm:$0xff]
  %v158 = vld [vmem:[%s147 + $0x50] sm:$0xff]
  %v159 = vld [vmem:[%s147 + $0x58] sm:$0xff]
  %v160 = vld [vmem:[%s147 + $0x60] sm:$0xff]
  %v161 = vld [vmem:[%s147 + $0x68] sm:$0xff]
  %v162 = vld [vmem:[%s147 + $0x70] sm:$0xff]
  %v163 = vld [vmem:[%s147 + $0x78] sm:$0xff]
  %165 = vset.pattern.permute.xlu0 0
  %166 = vperm.xlu0 %165, %v148
  %v167 = vpop.permute.xlu0 %166
  %170 = vset.pattern.permute.xlu0 0
  %171 = vperm.xlu0 %170, %v149
  %v172 = vpop.permute.xlu0 %171
  %175 = vset.pattern.permute.xlu0 0
  %176 = vperm.xlu0 %175, %v150
  %v177 = vpop.permute.xlu0 %176
  %180 = vset.pattern.permute.xlu0 0
  %181 = vperm.xlu0 %180, %v151
  %v182 = vpop.permute.xlu0 %181
  %185 = vset.pattern.permute.xlu0 0
  %186 = vperm.xlu0 %185, %v152
  %v187 = vpop.permute.xlu0 %186
  %190 = vset.pattern.permute.xlu0 0
  %191 = vperm.xlu0 %190, %v153
  %v192 = vpop.permute.xlu0 %191
  %195 = vset.pattern.permute.xlu0 0
  %196 = vperm.xlu0 %195, %v154
  %v197 = vpop.permute.xlu0 %196
  %200 = vset.pattern.permute.xlu0 0
  %201 = vperm.xlu0 %200, %v155
  %v202 = vpop.permute.xlu0 %201
  %205 = vset.pattern.permute.xlu0 0
  %206 = vperm.xlu0 %205, %v156
  %v207 = vpop.permute.xlu0 %206
  %210 = vset.pattern.permute.xlu0 0
  %211 = vperm.xlu0 %210, %v157
  %v212 = vpop.permute.xlu0 %211
  %215 = vset.pattern.permute.xlu0 0
  %216 = vperm.xlu0 %215, %v158
  %v217 = vpop.permute.xlu0 %216
  %220 = vset.pattern.permute.xlu0 0
  %221 = vperm.xlu0 %220, %v159
  %v222 = vpop.permute.xlu0 %221
  %225 = vset.pattern.permute.xlu0 0
  %226 = vperm.xlu0 %225, %v160
  %v227 = vpop.permute.xlu0 %226
  %230 = vset.pattern.permute.xlu0 0
  %231 = vperm.xlu0 %230, %v161
  %v232 = vpop.permute.xlu0 %231
  %235 = vset.pattern.permute.xlu0 0
  %236 = vperm.xlu0 %235, %v162
  %v237 = vpop.permute.xlu0 %236
  %240 = vset.pattern.permute.xlu0 0
  %241 = vperm.xlu0 %240, %v163
  %v242 = vpop.permute.xlu0 %241
  %v244 = vperm.slane %v11, 1
  %v245 = vperm.slane %v11, 5
  %v248 = vperm.slane %v244, 1
  %v249 = vperm.slane %v245, 1
  %v250 = vmul.f32 %v167, %v248
  %v251 = vmul.f32 %v167, %v249
  %v252 = vmul.f32 %v172, %v248
  %v253 = vmul.f32 %v172, %v249
  %v254 = vmul.f32 %v177, %v248
  %v255 = vmul.f32 %v177, %v249
  %v256 = vmul.f32 %v182, %v248
  %v257 = vmul.f32 %v182, %v249
  %v258 = vmul.f32 %v187, %v248
  %v259 = vmul.f32 %v187, %v249
  %v260 = vmul.f32 %v192, %v248
  %v261 = vmul.f32 %v192, %v249
  %v262 = vmul.f32 %v197, %v248
  %v263 = vmul.f32 %v197, %v249
  %v264 = vmul.f32 %v202, %v248
  %v265 = vmul.f32 %v202, %v249
  %v266 = vmul.f32 %v207, %v248
  %v267 = vmul.f32 %v207, %v249
  %v268 = vmul.f32 %v212, %v248
  %v269 = vmul.f32 %v212, %v249
  %v270 = vmul.f32 %v217, %v248
  %v271 = vmul.f32 %v217, %v249
  %v272 = vmul.f32 %v222, %v248
  %v273 = vmul.f32 %v222, %v249
  %v274 = vmul.f32 %v227, %v248
  %v275 = vmul.f32 %v227, %v249
  %v276 = vmul.f32 %v232, %v248
  %v277 = vmul.f32 %v232, %v249
  %v278 = vmul.f32 %v237, %v248
  %v279 = vmul.f32 %v237, %v249
  %v280 = vmul.f32 %v242, %v248
  %v281 = vmul.f32 %v242, %v249
  %v282 = vadd.f32 %v115, %v250
  %v283 = vadd.f32 %v116, %v251
  %v284 = vadd.f32 %v117, %v252
  %v285 = vadd.f32 %v118, %v253
  %v286 = vadd.f32 %v119, %v254
  %v287 = vadd.f32 %v120, %v255
  %v288 = vadd.f32 %v121, %v256
  %v289 = vadd.f32 %v122, %v257
  %v290 = vadd.f32 %v123, %v258
  %v291 = vadd.f32 %v124, %v259
  %v292 = vadd.f32 %v125, %v260
  %v293 = vadd.f32 %v126, %v261
  %v294 = vadd.f32 %v127, %v262
  %v295 = vadd.f32 %v128, %v263
  %v296 = vadd.f32 %v129, %v264
  %v297 = vadd.f32 %v130, %v265
  %v298 = vadd.f32 %v131, %v266
  %v299 = vadd.f32 %v132, %v267
  %v300 = vadd.f32 %v133, %v268
  %v301 = vadd.f32 %v134, %v269
  %v302 = vadd.f32 %v135, %v270
  %v303 = vadd.f32 %v136, %v271
  %v304 = vadd.f32 %v137, %v272
  %v305 = vadd.f32 %v138, %v273
  %v306 = vadd.f32 %v139, %v274
  %v307 = vadd.f32 %v140, %v275
  %v308 = vadd.f32 %v141, %v276
  %v309 = vadd.f32 %v142, %v277
  %v310 = vadd.f32 %v143, %v278
  %v311 = vadd.f32 %v144, %v279
  %v312 = vadd.f32 %v145, %v280
  %v313 = vadd.f32 %v146, %v281
  %s314 = scalar_lea.vmem %s1, 256
  %v315 = vld [vmem:[%s314] sm:$0xff]
  %v316 = vld [vmem:[%s314 + $0x8] sm:$0xff]
  %v317 = vld [vmem:[%s314 + $0x10] sm:$0xff]
  %v318 = vld [vmem:[%s314 + $0x18] sm:$0xff]
  %v319 = vld [vmem:[%s314 + $0x20] sm:$0xff]
  %v320 = vld [vmem:[%s314 + $0x28] sm:$0xff]
  %v321 = vld [vmem:[%s314 + $0x30] sm:$0xff]
  %v322 = vld [vmem:[%s314 + $0x38] sm:$0xff]
  %v323 = vld [vmem:[%s314 + $0x40] sm:$0xff]
  %v324 = vld [vmem:[%s314 + $0x48] sm:$0xff]
  %v325 = vld [vmem:[%s314 + $0x50] sm:$0xff]
  %v326 = vld [vmem:[%s314 + $0x58] sm:$0xff]
  %v327 = vld [vmem:[%s314 + $0x60] sm:$0xff]
  %v328 = vld [vmem:[%s314 + $0x68] sm:$0xff]
  %v329 = vld [vmem:[%s314 + $0x70] sm:$0xff]
  %v330 = vld [vmem:[%s314 + $0x78] sm:$0xff]
  %332 = vset.pattern.permute.xlu0 0
  %333 = vperm.xlu0 %332, %v315
  %v334 = vpop.permute.xlu0 %333
  %337 = vset.pattern.permute.xlu0 0
  %338 = vperm.xlu0 %337, %v316
  %v339 = vpop.permute.xlu0 %338
  %342 = vset.pattern.permute.xlu0 0
  %343 = vperm.xlu0 %342, %v317
  %v344 = vpop.permute.xlu0 %343
  %347 = vset.pattern.permute.xlu0 0
  %348 = vperm.xlu0 %347, %v318
  %v349 = vpop.permute.xlu0 %348
  %352 = vset.pattern.permute.xlu0 0
  %353 = vperm.xlu0 %352, %v319
  %v354 = vpop.permute.xlu0 %353
  %357 = vset.pattern.permute.xlu0 0
  %358 = vperm.xlu0 %357, %v320
  %v359 = vpop.permute.xlu0 %358
  %362 = vset.pattern.permute.xlu0 0
  %363 = vperm.xlu0 %362, %v321
  %v364 = vpop.permute.xlu0 %363
  %367 = vset.pattern.permute.xlu0 0
  %368 = vperm.xlu0 %367, %v322
  %v369 = vpop.permute.xlu0 %368
  %372 = vset.pattern.permute.xlu0 0
  %373 = vperm.xlu0 %372, %v323
  %v374 = vpop.permute.xlu0 %373
  %377 = vset.pattern.permute.xlu0 0
  %378 = vperm.xlu0 %377, %v324
  %v379 = vpop.permute.xlu0 %378
  %382 = vset.pattern.permute.xlu0 0
  %383 = vperm.xlu0 %382, %v325
  %v384 = vpop.permute.xlu0 %383
  %387 = vset.pattern.permute.xlu0 0
  %388 = vperm.xlu0 %387, %v326
  %v389 = vpop.permute.xlu0 %388
  %392 = vset.pattern.permute.xlu0 0
  %393 = vperm.xlu0 %392, %v327
  %v394 = vpop.permute.xlu0 %393
  %397 = vset.pattern.permute.xlu0 0
  %398 = vperm.xlu0 %397, %v328
  %v399 = vpop.permute.xlu0 %398
  %402 = vset.pattern.permute.xlu0 0
  %403 = vperm.xlu0 %402, %v329
  %v404 = vpop.permute.xlu0 %403
  %407 = vset.pattern.permute.xlu0 0
  %408 = vperm.xlu0 %407, %v330
  %v409 = vpop.permute.xlu0 %408
  %v411 = vperm.slane %v11, 2
  %v412 = vperm.slane %v11, 6
  %v415 = vperm.slane %v411, 2
  %v416 = vperm.slane %v412, 2
  %v417 = vmul.f32 %v334, %v415
  %v418 = vmul.f32 %v334, %v416
  %v419 = vmul.f32 %v339, %v415
  %v420 = vmul.f32 %v339, %v416
  %v421 = vmul.f32 %v344, %v415
  %v422 = vmul.f32 %v344, %v416
  %v423 = vmul.f32 %v349, %v415
  %v424 = vmul.f32 %v349, %v416
  %v425 = vmul.f32 %v354, %v415
  %v426 = vmul.f32 %v354, %v416
  %v427 = vmul.f32 %v359, %v415
  %v428 = vmul.f32 %v359, %v416
  %v429 = vmul.f32 %v364, %v415
  %v430 = vmul.f32 %v364, %v416
  %v431 = vmul.f32 %v369, %v415
  %v432 = vmul.f32 %v369, %v416
  %v433 = vmul.f32 %v374, %v415
  %v434 = vmul.f32 %v374, %v416
  %v435 = vmul.f32 %v379, %v415
  %v436 = vmul.f32 %v379, %v416
  %v437 = vmul.f32 %v384, %v415
  %v438 = vmul.f32 %v384, %v416
  %v439 = vmul.f32 %v389, %v415
  %v440 = vmul.f32 %v389, %v416
  %v441 = vmul.f32 %v394, %v415
  %v442 = vmul.f32 %v394, %v416
  %v443 = vmul.f32 %v399, %v415
  %v444 = vmul.f32 %v399, %v416
  %v445 = vmul.f32 %v404, %v415
  %v446 = vmul.f32 %v404, %v416
  %v447 = vmul.f32 %v409, %v415
  %v448 = vmul.f32 %v409, %v416
  %v449 = vadd.f32 %v282, %v417
  %v450 = vadd.f32 %v283, %v418
  %v451 = vadd.f32 %v284, %v419
  %v452 = vadd.f32 %v285, %v420
  %v453 = vadd.f32 %v286, %v421
  %v454 = vadd.f32 %v287, %v422
  %v455 = vadd.f32 %v288, %v423
  %v456 = vadd.f32 %v289, %v424
  %v457 = vadd.f32 %v290, %v425
  %v458 = vadd.f32 %v291, %v426
  %v459 = vadd.f32 %v292, %v427
  %v460 = vadd.f32 %v293, %v428
  %v461 = vadd.f32 %v294, %v429
  %v462 = vadd.f32 %v295, %v430
  %v463 = vadd.f32 %v296, %v431
  %v464 = vadd.f32 %v297, %v432
  %v465 = vadd.f32 %v298, %v433
  %v466 = vadd.f32 %v299, %v434
  %v467 = vadd.f32 %v300, %v435
  %v468 = vadd.f32 %v301, %v436
  %v469 = vadd.f32 %v302, %v437
  %v470 = vadd.f32 %v303, %v438
  %v471 = vadd.f32 %v304, %v439
  %v472 = vadd.f32 %v305, %v440
  %v473 = vadd.f32 %v306, %v441
  %v474 = vadd.f32 %v307, %v442
  %v475 = vadd.f32 %v308, %v443
  %v476 = vadd.f32 %v309, %v444
  %v477 = vadd.f32 %v310, %v445
  %v478 = vadd.f32 %v311, %v446
  %v479 = vadd.f32 %v312, %v447
  %v480 = vadd.f32 %v313, %v448
  %v481 = vmax.f32 %v449, 0.0
  %v482 = vmax.f32 %v450, 0.0
  %v483 = vmax.f32 %v451, 0.0
  %v484 = vmax.f32 %v452, 0.0
  %v485 = vmax.f32 %v453, 0.0
  %v486 = vmax.f32 %v454, 0.0
  %v487 = vmax.f32 %v455, 0.0
  %v488 = vmax.f32 %v456, 0.0
  %v489 = vmax.f32 %v457, 0.0
  %v490 = vmax.f32 %v458, 0.0
  %v491 = vmax.f32 %v459, 0.0
  %v492 = vmax.f32 %v460, 0.0
  %v493 = vmax.f32 %v461, 0.0
  %v494 = vmax.f32 %v462, 0.0
  %v495 = vmax.f32 %v463, 0.0
  %v496 = vmax.f32 %v464, 0.0
  %v497 = vmax.f32 %v465, 0.0
  %v498 = vmax.f32 %v466, 0.0
  %v499 = vmax.f32 %v467, 0.0
  %v500 = vmax.f32 %v468, 0.0
  %v501 = vmax.f32 %v469, 0.0
  %v502 = vmax.f32 %v470, 0.0
  %v503 = vmax.f32 %v471, 0.0
  %v504 = vmax.f32 %v472, 0.0
  %v505 = vmax.f32 %v473, 0.0
  %v506 = vmax.f32 %v474, 0.0
  %v507 = vmax.f32 %v475, 0.0
  %v508 = vmax.f32 %v476, 0.0
  %v509 = vmax.f32 %v477, 0.0
  %v510 = vmax.f32 %v478, 0.0
  %v511 = vmax.f32 %v479, 0.0
  %v512 = vmax.f32 %v480, 0.0
  %v513 = vadd.f32 %v481, %v482
  %514 = vadd.xlane.f32.xlu0 %v513
  %v515 = vpop.xlane.xlu0 %514
  %v516 = vadd.f32 %v483, %v484
  %517 = vadd.xlane.f32.xlu0 %v516
  %v518 = vpop.xlane.xlu0 %517
  %v519 = vadd.f32 %v485, %v486
  %520 = vadd.xlane.f32.xlu0 %v519
  %v521 = vpop.xlane.xlu0 %520
  %v522 = vadd.f32 %v487, %v488
  %523 = vadd.xlane.f32.xlu0 %v522
  %v524 = vpop.xlane.xlu0 %523
  %v525 = vadd.f32 %v489, %v490
  %526 = vadd.xlane.f32.xlu0 %v525
  %v527 = vpop.xlane.xlu0 %526
  %v528 = vadd.f32 %v491, %v492
  %529 = vadd.xlane.f32.xlu0 %v528
  %v530 = vpop.xlane.xlu0 %529
  %v531 = vadd.f32 %v493, %v494
  %532 = vadd.xlane.f32.xlu0 %v531
  %v533 = vpop.xlane.xlu0 %532
  %v534 = vadd.f32 %v495, %v496
  %535 = vadd.xlane.f32.xlu0 %v534
  %v536 = vpop.xlane.xlu0 %535
  %v537 = vadd.f32 %v497, %v498
  %538 = vadd.xlane.f32.xlu0 %v537
  %v539 = vpop.xlane.xlu0 %538
  %v540 = vadd.f32 %v499, %v500
  %541 = vadd.xlane.f32.xlu0 %v540
  %v542 = vpop.xlane.xlu0 %541
  %v543 = vadd.f32 %v501, %v502
  %544 = vadd.xlane.f32.xlu0 %v543
  %v545 = vpop.xlane.xlu0 %544
  %v546 = vadd.f32 %v503, %v504
  %547 = vadd.xlane.f32.xlu0 %v546
  %v548 = vpop.xlane.xlu0 %547
  %v549 = vadd.f32 %v505, %v506
  %550 = vadd.xlane.f32.xlu0 %v549
  %v551 = vpop.xlane.xlu0 %550
  %v552 = vadd.f32 %v507, %v508
  %553 = vadd.xlane.f32.xlu0 %v552
  %v554 = vpop.xlane.xlu0 %553
  %v555 = vadd.f32 %v509, %v510
  %556 = vadd.xlane.f32.xlu0 %v555
  %v557 = vpop.xlane.xlu0 %556
  %v558 = vadd.f32 %v511, %v512
  %559 = vadd.xlane.f32.xlu0 %v558
  %v560 = vpop.xlane.xlu0 %559
  %v561 = vrcp.pop 256.0
  %v562 = vmul.f32 256.0, %v561
  %v563 = vsub.f32 1.0, %v562
  %v564 = vmul.f32 %v561, %v563
  %v565 = vadd.f32 %v561, %v564
  %vm566 = vweird.f32 %v561
  %v567 = vsel %vm566, %v561, %v565
  %v568 = vmul.f32 %v515, %v567
  %v569 = vmul.f32 %v518, %v567
  %v570 = vmul.f32 %v521, %v567
  %v571 = vmul.f32 %v524, %v567
  %v572 = vmul.f32 %v527, %v567
  %v573 = vmul.f32 %v530, %v567
  %v574 = vmul.f32 %v533, %v567
  %v575 = vmul.f32 %v536, %v567
  %v576 = vmul.f32 %v539, %v567
  %v577 = vmul.f32 %v542, %v567
  %v578 = vmul.f32 %v545, %v567
  %v579 = vmul.f32 %v548, %v567
  %v580 = vmul.f32 %v551, %v567
  %v581 = vmul.f32 %v554, %v567
  %v582 = vmul.f32 %v557, %v567
  %v583 = vmul.f32 %v560, %v567
  %vm584 = vcmask 7168
  %585 = vst.msk [vmem:[%s2] sm:$0xff] %vm584, %v568
  %586 = vst.msk [vmem:[%s2 + $0x8] sm:$0xff] %vm584, %v569
  %587 = vst.msk [vmem:[%s2 + $0x10] sm:$0xff] %vm584, %v570
  %588 = vst.msk [vmem:[%s2 + $0x18] sm:$0xff] %vm584, %v571
  %589 = vst.msk [vmem:[%s2 + $0x20] sm:$0xff] %vm584, %v572
  %590 = vst.msk [vmem:[%s2 + $0x28] sm:$0xff] %vm584, %v573
  %591 = vst.msk [vmem:[%s2 + $0x30] sm:$0xff] %vm584, %v574
  %592 = vst.msk [vmem:[%s2 + $0x38] sm:$0xff] %vm584, %v575
  %593 = vst.msk [vmem:[%s2 + $0x40] sm:$0xff] %vm584, %v576
  %594 = vst.msk [vmem:[%s2 + $0x48] sm:$0xff] %vm584, %v577
  %595 = vst.msk [vmem:[%s2 + $0x50] sm:$0xff] %vm584, %v578
  %596 = vst.msk [vmem:[%s2 + $0x58] sm:$0xff] %vm584, %v579
  %597 = vst.msk [vmem:[%s2 + $0x60] sm:$0xff] %vm584, %v580
  %598 = vst.msk [vmem:[%s2 + $0x68] sm:$0xff] %vm584, %v581
  %599 = vst.msk [vmem:[%s2 + $0x70] sm:$0xff] %vm584, %v582
  %600 = vst.msk [vmem:[%s2 + $0x78] sm:$0xff] %vm584, %v583
  %s601 = scalar_lea.vmem %s0, 8
  %v602 = vld [vmem:[%s601] sm:$0x77]
  %v603 = vld [vmem:[%s1] sm:$0xff]
  %v604 = vld [vmem:[%s1 + $0x8] sm:$0xff]
  %v605 = vld [vmem:[%s1 + $0x10] sm:$0xff]
  %v606 = vld [vmem:[%s1 + $0x18] sm:$0xff]
  %v607 = vld [vmem:[%s1 + $0x20] sm:$0xff]
  %v608 = vld [vmem:[%s1 + $0x28] sm:$0xff]
  %v609 = vld [vmem:[%s1 + $0x30] sm:$0xff]
  %v610 = vld [vmem:[%s1 + $0x38] sm:$0xff]
  %v611 = vld [vmem:[%s1 + $0x40] sm:$0xff]
  %v612 = vld [vmem:[%s1 + $0x48] sm:$0xff]
  %v613 = vld [vmem:[%s1 + $0x50] sm:$0xff]
  %v614 = vld [vmem:[%s1 + $0x58] sm:$0xff]
  %v615 = vld [vmem:[%s1 + $0x60] sm:$0xff]
  %v616 = vld [vmem:[%s1 + $0x68] sm:$0xff]
  %v617 = vld [vmem:[%s1 + $0x70] sm:$0xff]
  %v618 = vld [vmem:[%s1 + $0x78] sm:$0xff]
  %620 = vset.pattern.permute.xlu0 0
  %621 = vperm.xlu0 %620, %v603
  %v622 = vpop.permute.xlu0 %621
  %625 = vset.pattern.permute.xlu0 0
  %626 = vperm.xlu0 %625, %v604
  %v627 = vpop.permute.xlu0 %626
  %630 = vset.pattern.permute.xlu0 0
  %631 = vperm.xlu0 %630, %v605
  %v632 = vpop.permute.xlu0 %631
  %635 = vset.pattern.permute.xlu0 0
  %636 = vperm.xlu0 %635, %v606
  %v637 = vpop.permute.xlu0 %636
  %640 = vset.pattern.permute.xlu0 0
  %641 = vperm.xlu0 %640, %v607
  %v642 = vpop.permute.xlu0 %641
  %645 = vset.pattern.permute.xlu0 0
  %646 = vperm.xlu0 %645, %v608
  %v647 = vpop.permute.xlu0 %646
  %650 = vset.pattern.permute.xlu0 0
  %651 = vperm.xlu0 %650, %v609
  %v652 = vpop.permute.xlu0 %651
  %655 = vset.pattern.permute.xlu0 0
  %656 = vperm.xlu0 %655, %v610
  %v657 = vpop.permute.xlu0 %656
  %660 = vset.pattern.permute.xlu0 0
  %661 = vperm.xlu0 %660, %v611
  %v662 = vpop.permute.xlu0 %661
  %665 = vset.pattern.permute.xlu0 0
  %666 = vperm.xlu0 %665, %v612
  %v667 = vpop.permute.xlu0 %666
  %670 = vset.pattern.permute.xlu0 0
  %671 = vperm.xlu0 %670, %v613
  %v672 = vpop.permute.xlu0 %671
  %675 = vset.pattern.permute.xlu0 0
  %676 = vperm.xlu0 %675, %v614
  %v677 = vpop.permute.xlu0 %676
  %680 = vset.pattern.permute.xlu0 0
  %681 = vperm.xlu0 %680, %v615
  %v682 = vpop.permute.xlu0 %681
  %685 = vset.pattern.permute.xlu0 0
  %686 = vperm.xlu0 %685, %v616
  %v687 = vpop.permute.xlu0 %686
  %690 = vset.pattern.permute.xlu0 0
  %691 = vperm.xlu0 %690, %v617
  %v692 = vpop.permute.xlu0 %691
  %695 = vset.pattern.permute.xlu0 0
  %696 = vperm.xlu0 %695, %v618
  %v697 = vpop.permute.xlu0 %696
  %v700 = vperm.slane %v602, 0
  %v701 = vperm.slane %v602, 4
  %v704 = vperm.slane %v700, 0
  %v705 = vperm.slane %v701, 0
  %v706 = vmul.f32 %v622, %v704
  %v707 = vmul.f32 %v622, %v705
  %v708 = vmul.f32 %v627, %v704
  %v709 = vmul.f32 %v627, %v705
  %v710 = vmul.f32 %v632, %v704
  %v711 = vmul.f32 %v632, %v705
  %v712 = vmul.f32 %v637, %v704
  %v713 = vmul.f32 %v637, %v705
  %v714 = vmul.f32 %v642, %v704
  %v715 = vmul.f32 %v642, %v705
  %v716 = vmul.f32 %v647, %v704
  %v717 = vmul.f32 %v647, %v705
  %v718 = vmul.f32 %v652, %v704
  %v719 = vmul.f32 %v652, %v705
  %v720 = vmul.f32 %v657, %v704
  %v721 = vmul.f32 %v657, %v705
  %v722 = vmul.f32 %v662, %v704
  %v723 = vmul.f32 %v662, %v705
  %v724 = vmul.f32 %v667, %v704
  %v725 = vmul.f32 %v667, %v705
  %v726 = vmul.f32 %v672, %v704
  %v727 = vmul.f32 %v672, %v705
  %v728 = vmul.f32 %v677, %v704
  %v729 = vmul.f32 %v677, %v705
  %v730 = vmul.f32 %v682, %v704
  %v731 = vmul.f32 %v682, %v705
  %v732 = vmul.f32 %v687, %v704
  %v733 = vmul.f32 %v687, %v705
  %v734 = vmul.f32 %v692, %v704
  %v735 = vmul.f32 %v692, %v705
  %v736 = vmul.f32 %v697, %v704
  %v737 = vmul.f32 %v697, %v705
  %v738 = vld [vmem:[%s147] sm:$0xff]
  %v739 = vld [vmem:[%s147 + $0x8] sm:$0xff]
  %v740 = vld [vmem:[%s147 + $0x10] sm:$0xff]
  %v741 = vld [vmem:[%s147 + $0x18] sm:$0xff]
  %v742 = vld [vmem:[%s147 + $0x20] sm:$0xff]
  %v743 = vld [vmem:[%s147 + $0x28] sm:$0xff]
  %v744 = vld [vmem:[%s147 + $0x30] sm:$0xff]
  %v745 = vld [vmem:[%s147 + $0x38] sm:$0xff]
  %v746 = vld [vmem:[%s147 + $0x40] sm:$0xff]
  %v747 = vld [vmem:[%s147 + $0x48] sm:$0xff]
  %v748 = vld [vmem:[%s147 + $0x50] sm:$0xff]
  %v749 = vld [vmem:[%s147 + $0x58] sm:$0xff]
  %v750 = vld [vmem:[%s147 + $0x60] sm:$0xff]
  %v751 = vld [vmem:[%s147 + $0x68] sm:$0xff]
  %v752 = vld [vmem:[%s147 + $0x70] sm:$0xff]
  %v753 = vld [vmem:[%s147 + $0x78] sm:$0xff]
  %755 = vset.pattern.permute.xlu0 0
  %756 = vperm.xlu0 %755, %v738
  %v757 = vpop.permute.xlu0 %756
  %760 = vset.pattern.permute.xlu0 0
  %761 = vperm.xlu0 %760, %v739
  %v762 = vpop.permute.xlu0 %761
  %765 = vset.pattern.permute.xlu0 0
  %766 = vperm.xlu0 %765, %v740
  %v767 = vpop.permute.xlu0 %766
  %770 = vset.pattern.permute.xlu0 0
  %771 = vperm.xlu0 %770, %v741
  %v772 = vpop.permute.xlu0 %771
  %775 = vset.pattern.permute.xlu0 0
  %776 = vperm.xlu0 %775, %v742
  %v777 = vpop.permute.xlu0 %776
  %780 = vset.pattern.permute.xlu0 0
  %781 = vperm.xlu0 %780, %v743
  %v782 = vpop.permute.xlu0 %781
  %785 = vset.pattern.permute.xlu0 0
  %786 = vperm.xlu0 %785, %v744
  %v787 = vpop.permute.xlu0 %786
  %790 = vset.pattern.permute.xlu0 0
  %791 = vperm.xlu0 %790, %v745
  %v792 = vpop.permute.xlu0 %791
  %795 = vset.pattern.permute.xlu0 0
  %796 = vperm.xlu0 %795, %v746
  %v797 = vpop.permute.xlu0 %796
  %800 = vset.pattern.permute.xlu0 0
  %801 = vperm.xlu0 %800, %v747
  %v802 = vpop.permute.xlu0 %801
  %805 = vset.pattern.permute.xlu0 0
  %806 = vperm.xlu0 %805, %v748
  %v807 = vpop.permute.xlu0 %806
  %810 = vset.pattern.permute.xlu0 0
  %811 = vperm.xlu0 %810, %v749
  %v812 = vpop.permute.xlu0 %811
  %815 = vset.pattern.permute.xlu0 0
  %816 = vperm.xlu0 %815, %v750
  %v817 = vpop.permute.xlu0 %816
  %820 = vset.pattern.permute.xlu0 0
  %821 = vperm.xlu0 %820, %v751
  %v822 = vpop.permute.xlu0 %821
  %825 = vset.pattern.permute.xlu0 0
  %826 = vperm.xlu0 %825, %v752
  %v827 = vpop.permute.xlu0 %826
  %830 = vset.pattern.permute.xlu0 0
  %831 = vperm.xlu0 %830, %v753
  %v832 = vpop.permute.xlu0 %831
  %v834 = vperm.slane %v602, 1
  %v835 = vperm.slane %v602, 5
  %v838 = vperm.slane %v834, 1
  %v839 = vperm.slane %v835, 1
  %v840 = vmul.f32 %v757, %v838
  %v841 = vmul.f32 %v757, %v839
  %v842 = vmul.f32 %v762, %v838
  %v843 = vmul.f32 %v762, %v839
  %v844 = vmul.f32 %v767, %v838
  %v845 = vmul.f32 %v767, %v839
  %v846 = vmul.f32 %v772, %v838
  %v847 = vmul.f32 %v772, %v839
  %v848 = vmul.f32 %v777, %v838
  %v849 = vmul.f32 %v777, %v839
  %v850 = vmul.f32 %v782, %v838
  %v851 = vmul.f32 %v782, %v839
  %v852 = vmul.f32 %v787, %v838
  %v853 = vmul.f32 %v787, %v839
  %v854 = vmul.f32 %v792, %v838
  %v855 = vmul.f32 %v792, %v839
  %v856 = vmul.f32 %v797, %v838
  %v857 = vmul.f32 %v797, %v839
  %v858 = vmul.f32 %v802, %v838
  %v859 = vmul.f32 %v802, %v839
  %v860 = vmul.f32 %v807, %v838
  %v861 = vmul.f32 %v807, %v839
  %v862 = vmul.f32 %v812, %v838
  %v863 = vmul.f32 %v812, %v839
  %v864 = vmul.f32 %v817, %v838
  %v865 = vmul.f32 %v817, %v839
  %v866 = vmul.f32 %v822, %v838
  %v867 = vmul.f32 %v822, %v839
  %v868 = vmul.f32 %v827, %v838
  %v869 = vmul.f32 %v827, %v839
  %v870 = vmul.f32 %v832, %v838
  %v871 = vmul.f32 %v832, %v839
  %v872 = vadd.f32 %v706, %v840
  %v873 = vadd.f32 %v707, %v841
  %v874 = vadd.f32 %v708, %v842
  %v875 = vadd.f32 %v709, %v843
  %v876 = vadd.f32 %v710, %v844
  %v877 = vadd.f32 %v711, %v845
  %v878 = vadd.f32 %v712, %v846
  %v879 = vadd.f32 %v713, %v847
  %v880 = vadd.f32 %v714, %v848
  %v881 = vadd.f32 %v715, %v849
  %v882 = vadd.f32 %v716, %v850
  %v883 = vadd.f32 %v717, %v851
  %v884 = vadd.f32 %v718, %v852
  %v885 = vadd.f32 %v719, %v853
  %v886 = vadd.f32 %v720, %v854
  %v887 = vadd.f32 %v721, %v855
  %v888 = vadd.f32 %v722, %v856
  %v889 = vadd.f32 %v723, %v857
  %v890 = vadd.f32 %v724, %v858
  %v891 = vadd.f32 %v725, %v859
  %v892 = vadd.f32 %v726, %v860
  %v893 = vadd.f32 %v727, %v861
  %v894 = vadd.f32 %v728, %v862
  %v895 = vadd.f32 %v729, %v863
  %v896 = vadd.f32 %v730, %v864
  %v897 = vadd.f32 %v731, %v865
  %v898 = vadd.f32 %v732, %v866
  %v899 = vadd.f32 %v733, %v867
  %v900 = vadd.f32 %v734, %v868
  %v901 = vadd.f32 %v735, %v869
  %v902 = vadd.f32 %v736, %v870
  %v903 = vadd.f32 %v737, %v871
  %v904 = vld [vmem:[%s314] sm:$0xff]
  %v905 = vld [vmem:[%s314 + $0x8] sm:$0xff]
  %v906 = vld [vmem:[%s314 + $0x10] sm:$0xff]
  %v907 = vld [vmem:[%s314 + $0x18] sm:$0xff]
  %v908 = vld [vmem:[%s314 + $0x20] sm:$0xff]
  %v909 = vld [vmem:[%s314 + $0x28] sm:$0xff]
  %v910 = vld [vmem:[%s314 + $0x30] sm:$0xff]
  %v911 = vld [vmem:[%s314 + $0x38] sm:$0xff]
  %v912 = vld [vmem:[%s314 + $0x40] sm:$0xff]
  %v913 = vld [vmem:[%s314 + $0x48] sm:$0xff]
  %v914 = vld [vmem:[%s314 + $0x50] sm:$0xff]
  %v915 = vld [vmem:[%s314 + $0x58] sm:$0xff]
  %v916 = vld [vmem:[%s314 + $0x60] sm:$0xff]
  %v917 = vld [vmem:[%s314 + $0x68] sm:$0xff]
  %v918 = vld [vmem:[%s314 + $0x70] sm:$0xff]
  %v919 = vld [vmem:[%s314 + $0x78] sm:$0xff]
  %921 = vset.pattern.permute.xlu0 0
  %922 = vperm.xlu0 %921, %v904
  %v923 = vpop.permute.xlu0 %922
  %926 = vset.pattern.permute.xlu0 0
  %927 = vperm.xlu0 %926, %v905
  %v928 = vpop.permute.xlu0 %927
  %931 = vset.pattern.permute.xlu0 0
  %932 = vperm.xlu0 %931, %v906
  %v933 = vpop.permute.xlu0 %932
  %936 = vset.pattern.permute.xlu0 0
  %937 = vperm.xlu0 %936, %v907
  %v938 = vpop.permute.xlu0 %937
  %941 = vset.pattern.permute.xlu0 0
  %942 = vperm.xlu0 %941, %v908
  %v943 = vpop.permute.xlu0 %942
  %946 = vset.pattern.permute.xlu0 0
  %947 = vperm.xlu0 %946, %v909
  %v948 = vpop.permute.xlu0 %947
  %951 = vset.pattern.permute.xlu0 0
  %952 = vperm.xlu0 %951, %v910
  %v953 = vpop.permute.xlu0 %952
  %956 = vset.pattern.permute.xlu0 0
  %957 = vperm.xlu0 %956, %v911
  %v958 = vpop.permute.xlu0 %957
  %961 = vset.pattern.permute.xlu0 0
  %962 = vperm.xlu0 %961, %v912
  %v963 = vpop.permute.xlu0 %962
  %966 = vset.pattern.permute.xlu0 0
  %967 = vperm.xlu0 %966, %v913
  %v968 = vpop.permute.xlu0 %967
  %971 = vset.pattern.permute.xlu0 0
  %972 = vperm.xlu0 %971, %v914
  %v973 = vpop.permute.xlu0 %972
  %976 = vset.pattern.permute.xlu0 0
  %977 = vperm.xlu0 %976, %v915
  %v978 = vpop.permute.xlu0 %977
  %981 = vset.pattern.permute.xlu0 0
  %982 = vperm.xlu0 %981, %v916
  %v983 = vpop.permute.xlu0 %982
  %986 = vset.pattern.permute.xlu0 0
  %987 = vperm.xlu0 %986, %v917
  %v988 = vpop.permute.xlu0 %987
  %991 = vset.pattern.permute.xlu0 0
  %992 = vperm.xlu0 %991, %v918
  %v993 = vpop.permute.xlu0 %992
  %996 = vset.pattern.permute.xlu0 0
  %997 = vperm.xlu0 %996, %v919
  %v998 = vpop.permute.xlu0 %997
  %v1000 = vperm.slane %v602, 2
  %v1001 = vperm.slane %v602, 6
  %v1004 = vperm.slane %v1000, 2
  %v1005 = vperm.slane %v1001, 2
  %v1006 = vmul.f32 %v923, %v1004
  %v1007 = vmul.f32 %v923, %v1005
  %v1008 = vmul.f32 %v928, %v1004
  %v1009 = vmul.f32 %v928, %v1005
  %v1010 = vmul.f32 %v933, %v1004
  %v1011 = vmul.f32 %v933, %v1005
  %v1012 = vmul.f32 %v938, %v1004
  %v1013 = vmul.f32 %v938, %v1005
  %v1014 = vmul.f32 %v943, %v1004
  %v1015 = vmul.f32 %v943, %v1005
  %v1016 = vmul.f32 %v948, %v1004
  %v1017 = vmul.f32 %v948, %v1005
  %v1018 = vmul.f32 %v953, %v1004
  %v1019 = vmul.f32 %v953, %v1005
  %v1020 = vmul.f32 %v958, %v1004
  %v1021 = vmul.f32 %v958, %v1005
  %v1022 = vmul.f32 %v963, %v1004
  %v1023 = vmul.f32 %v963, %v1005
  %v1024 = vmul.f32 %v968, %v1004
  %v1025 = vmul.f32 %v968, %v1005
  %v1026 = vmul.f32 %v973, %v1004
  %v1027 = vmul.f32 %v973, %v1005
  %v1028 = vmul.f32 %v978, %v1004
  %v1029 = vmul.f32 %v978, %v1005
  %v1030 = vmul.f32 %v983, %v1004
  %v1031 = vmul.f32 %v983, %v1005
  %v1032 = vmul.f32 %v988, %v1004
  %v1033 = vmul.f32 %v988, %v1005
  %v1034 = vmul.f32 %v993, %v1004
  %v1035 = vmul.f32 %v993, %v1005
  %v1036 = vmul.f32 %v998, %v1004
  %v1037 = vmul.f32 %v998, %v1005
  %v1038 = vadd.f32 %v872, %v1006
  %v1039 = vadd.f32 %v873, %v1007
  %v1040 = vadd.f32 %v874, %v1008
  %v1041 = vadd.f32 %v875, %v1009
  %v1042 = vadd.f32 %v876, %v1010
  %v1043 = vadd.f32 %v877, %v1011
  %v1044 = vadd.f32 %v878, %v1012
  %v1045 = vadd.f32 %v879, %v1013
  %v1046 = vadd.f32 %v880, %v1014
  %v1047 = vadd.f32 %v881, %v1015
  %v1048 = vadd.f32 %v882, %v1016
  %v1049 = vadd.f32 %v883, %v1017
  %v1050 = vadd.f32 %v884, %v1018
  %v1051 = vadd.f32 %v885, %v1019
  %v1052 = vadd.f32 %v886, %v1020
  %v1053 = vadd.f32 %v887, %v1021
  %v1054 = vadd.f32 %v888, %v1022
  %v1055 = vadd.f32 %v889, %v1023
  %v1056 = vadd.f32 %v890, %v1024
  %v1057 = vadd.f32 %v891, %v1025
  %v1058 = vadd.f32 %v892, %v1026
  %v1059 = vadd.f32 %v893, %v1027
  %v1060 = vadd.f32 %v894, %v1028
  %v1061 = vadd.f32 %v895, %v1029
  %v1062 = vadd.f32 %v896, %v1030
  %v1063 = vadd.f32 %v897, %v1031
  %v1064 = vadd.f32 %v898, %v1032
  %v1065 = vadd.f32 %v899, %v1033
  %v1066 = vadd.f32 %v900, %v1034
  %v1067 = vadd.f32 %v901, %v1035
  %v1068 = vadd.f32 %v902, %v1036
  %v1069 = vadd.f32 %v903, %v1037
  %v1070 = vmax.f32 %v1038, 0.0
  %v1071 = vmax.f32 %v1039, 0.0
  %v1072 = vmax.f32 %v1040, 0.0
  %v1073 = vmax.f32 %v1041, 0.0
  %v1074 = vmax.f32 %v1042, 0.0
  %v1075 = vmax.f32 %v1043, 0.0
  %v1076 = vmax.f32 %v1044, 0.0
  %v1077 = vmax.f32 %v1045, 0.0
  %v1078 = vmax.f32 %v1046, 0.0
  %v1079 = vmax.f32 %v1047, 0.0
  %v1080 = vmax.f32 %v1048, 0.0
  %v1081 = vmax.f32 %v1049, 0.0
  %v1082 = vmax.f32 %v1050, 0.0
  %v1083 = vmax.f32 %v1051, 0.0
  %v1084 = vmax.f32 %v1052, 0.0
  %v1085 = vmax.f32 %v1053, 0.0
  %v1086 = vmax.f32 %v1054, 0.0
  %v1087 = vmax.f32 %v1055, 0.0
  %v1088 = vmax.f32 %v1056, 0.0
  %v1089 = vmax.f32 %v1057, 0.0
  %v1090 = vmax.f32 %v1058, 0.0
  %v1091 = vmax.f32 %v1059, 0.0
  %v1092 = vmax.f32 %v1060, 0.0
  %v1093 = vmax.f32 %v1061, 0.0
  %v1094 = vmax.f32 %v1062, 0.0
  %v1095 = vmax.f32 %v1063, 0.0
  %v1096 = vmax.f32 %v1064, 0.0
  %v1097 = vmax.f32 %v1065, 0.0
  %v1098 = vmax.f32 %v1066, 0.0
  %v1099 = vmax.f32 %v1067, 0.0
  %v1100 = vmax.f32 %v1068, 0.0
  %v1101 = vmax.f32 %v1069, 0.0
  %v1102 = vadd.f32 %v1070, %v1071
  %1103 = vadd.xlane.f32.xlu0 %v1102
  %v1104 = vpop.xlane.xlu0 %1103
  %v1105 = vadd.f32 %v1072, %v1073
  %1106 = vadd.xlane.f32.xlu0 %v1105
  %v1107 = vpop.xlane.xlu0 %1106
  %v1108 = vadd.f32 %v1074, %v1075
  %1109 = vadd.xlane.f32.xlu0 %v1108
  %v1110 = vpop.xlane.xlu0 %1109
  %v1111 = vadd.f32 %v1076, %v1077
  %1112 = vadd.xlane.f32.xlu0 %v1111
  %v1113 = vpop.xlane.xlu0 %1112
  %v1114 = vadd.f32 %v1078, %v1079
  %1115 = vadd.xlane.f32.xlu0 %v1114
  %v1116 = vpop.xlane.xlu0 %1115
  %v1117 = vadd.f32 %v1080, %v1081
  %1118 = vadd.xlane.f32.xlu0 %v1117
  %v1119 = vpop.xlane.xlu0 %1118
  %v1120 = vadd.f32 %v1082, %v1083
  %1121 = vadd.xlane.f32.xlu0 %v1120
  %v1122 = vpop.xlane.xlu0 %1121
  %v1123 = vadd.f32 %v1084, %v1085
  %1124 = vadd.xlane.f32.xlu0 %v1123
  %v1125 = vpop.xlane.xlu0 %1124
  %v1126 = vadd.f32 %v1086, %v1087
  %1127 = vadd.xlane.f32.xlu0 %v1126
  %v1128 = vpop.xlane.xlu0 %1127
  %v1129 = vadd.f32 %v1088, %v1089
  %1130 = vadd.xlane.f32.xlu0 %v1129
  %v1131 = vpop.xlane.xlu0 %1130
  %v1132 = vadd.f32 %v1090, %v1091
  %1133 = vadd.xlane.f32.xlu0 %v1132
  %v1134 = vpop.xlane.xlu0 %1133
  %v1135 = vadd.f32 %v1092, %v1093
  %1136 = vadd.xlane.f32.xlu0 %v1135
  %v1137 = vpop.xlane.xlu0 %1136
  %v1138 = vadd.f32 %v1094, %v1095
  %1139 = vadd.xlane.f32.xlu0 %v1138
  %v1140 = vpop.xlane.xlu0 %1139
  %v1141 = vadd.f32 %v1096, %v1097
  %1142 = vadd.xlane.f32.xlu0 %v1141
  %v1143 = vpop.xlane.xlu0 %1142
  %v1144 = vadd.f32 %v1098, %v1099
  %1145 = vadd.xlane.f32.xlu0 %v1144
  %v1146 = vpop.xlane.xlu0 %1145
  %v1147 = vadd.f32 %v1100, %v1101
  %1148 = vadd.xlane.f32.xlu0 %v1147
  %v1149 = vpop.xlane.xlu0 %1148
  %v1150 = vmul.f32 %v1104, %v567
  %v1151 = vmul.f32 %v1107, %v567
  %v1152 = vmul.f32 %v1110, %v567
  %v1153 = vmul.f32 %v1113, %v567
  %v1154 = vmul.f32 %v1116, %v567
  %v1155 = vmul.f32 %v1119, %v567
  %v1156 = vmul.f32 %v1122, %v567
  %v1157 = vmul.f32 %v1125, %v567
  %v1158 = vmul.f32 %v1128, %v567
  %v1159 = vmul.f32 %v1131, %v567
  %v1160 = vmul.f32 %v1134, %v567
  %v1161 = vmul.f32 %v1137, %v567
  %v1162 = vmul.f32 %v1140, %v567
  %v1163 = vmul.f32 %v1143, %v567
  %v1164 = vmul.f32 %v1146, %v567
  %v1165 = vmul.f32 %v1149, %v567
  %s1166 = scalar_lea.vmem %s2, 128
  %1167 = vst.msk [vmem:[%s1166] sm:$0xff] %vm584, %v1150
  %1168 = vst.msk [vmem:[%s1166 + $0x8] sm:$0xff] %vm584, %v1151
  %1169 = vst.msk [vmem:[%s1166 + $0x10] sm:$0xff] %vm584, %v1152
  %1170 = vst.msk [vmem:[%s1166 + $0x18] sm:$0xff] %vm584, %v1153
  %1171 = vst.msk [vmem:[%s1166 + $0x20] sm:$0xff] %vm584, %v1154
  %1172 = vst.msk [vmem:[%s1166 + $0x28] sm:$0xff] %vm584, %v1155
  %1173 = vst.msk [vmem:[%s1166 + $0x30] sm:$0xff] %vm584, %v1156
  %1174 = vst.msk [vmem:[%s1166 + $0x38] sm:$0xff] %vm584, %v1157
  %1175 = vst.msk [vmem:[%s1166 + $0x40] sm:$0xff] %vm584, %v1158
  %1176 = vst.msk [vmem:[%s1166 + $0x48] sm:$0xff] %vm584, %v1159
  %1177 = vst.msk [vmem:[%s1166 + $0x50] sm:$0xff] %vm584, %v1160
  %1178 = vst.msk [vmem:[%s1166 + $0x58] sm:$0xff] %vm584, %v1161
  %1179 = vst.msk [vmem:[%s1166 + $0x60] sm:$0xff] %vm584, %v1162
  %1180 = vst.msk [vmem:[%s1166 + $0x68] sm:$0xff] %vm584, %v1163
  %1181 = vst.msk [vmem:[%s1166 + $0x70] sm:$0xff] %vm584, %v1164
  %1182 = vst.msk [vmem:[%s1166 + $0x78] sm:$0xff] %vm584, %v1165
  // Predicated region
  $region10: #{classifier_forward.2} parent=0 // pred_check
    _
  $region11: #{classifier_forward.2} parent=0 // pred_check_branch
    %1184 = sbr.rel (0) target = $region13
  $region12: #{classifier_forward.2} parent=0 // pred_region
    _
  $region13: #{classifier_forward.2} parent=0 // pred_fallthru
    _
  // Predicated region
  $region14: #{classifier_forward.2} parent=0 // pred_check
    _
  $region15: #{classifier_forward.2} parent=0 // pred_check_branch
    %1186 = sbr.rel (0) target = $region17
  $region16: #{classifier_forward.2} parent=0 // pred_region
    _
  $region17: #{classifier_forward.2} parent=0 // pred_fallthru
    _

// kernel: classifier_forward.3
$region0: #{classifier_forward.3}
  #allocation0 [shape = 'u32[]', space=smem, size = 0x4, offset = 0x4, fixed_abs, tag = 'smem constant byte address 0x4 - core index']
  #allocation1 [shape = 'u32[72,128]{1,0:T(1,128)}', space=vmem, size = 0x9000, scoped, tag = 'internal scratch']
  #allocation2 [shape = 'f32[2,8]{1,0:T(2,128)}', space=vmem, size = 0x400, scoped, tag = 'scratch operand']
  %s0 = inlined_call_operand.vmem [shape: f32[2,128], index: 0, kind: input, shape index: {}]
  %s1 = inlined_call_operand.vmem [shape: f32[128,2,1], index: 1, kind: input, shape index: {}]
  %s2 = inlined_call_operand.vmem [shape: bf16[128,8,128], index: 2, kind: input, shape index: {}]
  %s3 = inlined_call_operand.vmem [shape: f32[1,8], index: 3, kind: input, shape index: {}]
  %s4 = inlined_call_operand.hbm [shape: f32[2,8], index: 4, kind: output, shape index: {}]
  %s5 = sld [smem:[#allocation0]]
  $region57: #{classifier_forward.3} parent=0
    _
  %s7 = ssub.s32 1, %s5
  %s8 = scalar_select 0, %s7, %s5
  $region1: #{classifier_forward.3} parent=0
    #allocation3 [shape = 'u8[1024]{0}', space=vmem, size = 0x400, scoped, tag = 'output window, operand 0, single buffered']
    #allocation4 [shape = 's32[2]{0}', space=sflag, size = 0x8, scoped, tag = 'scoped memory for classifier_forward.3']
    %9 = vsyncpa [#allocation4], 0
    loop: start=0, step=1, limit=6
    $region2: #{classifier_forward.3} parent=1 // loop_pre_header
      _
    $region3: #{classifier_forward.3} parent=1 // loop_header
      %s11 = sphi 0, %s15
      %p12 = scmp.ge.s32.totalorder %s11, 6
      %s18 = sphi 0, %s30
      %s19 = sphi 0, %s26
      %s20 = sphi 0, %s18
      %s21 = sphi 0, %s19
      %s22 = sphi 0, %s20
      %s23 = sphi 0, %s21
      %s33 = sphi 0, %s35
      %s36 = sphi 0, %s33
      %s37 = sphi 0, %s36
      %s53 = sphi 0, %s37
      %s61 = sphi 0, %s63
      %s64 = sphi 0, %s61
      %s65 = sphi 0, %s64
      %s81 = sphi 0, %s65
      %s87 = sphi 0, %s89
      %s90 = sphi 0, %s87
      %s91 = sphi 0, %s90
      %s107 = sphi 0, %s91
      %s111 = sphi 0, %s111
      %s113 = sphi 0, %s111
      %s114 = sphi 0, %s113
      %s128 = sphi 0, %s114
      %s134 = sphi 0, %s136
      %s137 = sphi 0, %s134
      %s138 = sphi 0, %s137
      %s154 = sphi 0, %s138
    $region4: #{classifier_forward.3} parent=1 // loop_header_branch
      %14 = sbr.rel (%p12) target = $region8
    $region5: #{classifier_forward.3} parent=1 // loop_body
      %s16 = ssub.s32 %s11, 1
      %s17 = ssub.s32 %s11, 2
      %s24 = sadd.s32 1, %s19
      %p25 = scmp.ge.s32.totalorder %s24, 4
      %s26 = scalar_select %p25, 0, %s24
      %s27 = sadd.s32 1, %s18
      %s28 = scalar_select %p25, %s27, %s18
      %p29 = scmp.ge.s32.totalorder %s28, 1
      %s30 = scalar_select %p29, 0, %s28
      %s31 = ssub.s32 %s18, %s30
      %p32 = scmp.eq.s32.totalorder %s31, 0
      %s34 = sadd.s32 %s33, 1
      %s35 = scalar_select %p32, %s33, %s34
      %p38 = pneg %p32
      %p39 = scmp.eq.s32.totalorder %s11, 3
      %p40 = por %p38, %p39
      %p41 = scmp.ne.s32.totalorder %s33, %s36
      %p42 = scmp.eq.s32.totalorder %s11, 0
      %p43 = por %p41, %p42
      %p44 = scmp.ne.s32.totalorder %s33, %s36
      %p45 = scmp.eq.s32.totalorder %s16, 3
      %p46 = por %p44, %p45
      %p47 = scmp.ne.s32.totalorder %s36, %s37
      %p48 = scmp.eq.s32.totalorder %s16, 0
      %p49 = por %p47, %p48
      %p50 = scmp.ne.s32.totalorder %s36, %s37
      %p51 = scmp.eq.s32.totalorder %s17, 3
      %p52 = por %p50, %p51
      %p54 = scmp.ne.s32.totalorder %s37, %s53
      %p55 = scmp.eq.s32.totalorder %s17, 0
      %p56 = por %p54, %p55
      %s57 = ssub.s32 %s19, %s26
      %s58 = ssub.s32 %s18, %s30
      %s59 = sor.u32 %s57, %s58
      %p60 = scmp.eq.s32.totalorder %s59, 0
      %s62 = sadd.s32 %s61, 1
      %s63 = scalar_select %p60, %s61, %s62
      %p66 = pneg %p60
      %p67 = scmp.eq.s32.totalorder %s11, 3
      %p68 = por %p66, %p67
      %p69 = scmp.ne.s32.totalorder %s61, %s64
      %p70 = scmp.eq.s32.totalorder %s11, 0
      %p71 = por %p69, %p70
      %p72 = scmp.ne.s32.totalorder %s61, %s64
      %p73 = scmp.eq.s32.totalorder %s16, 3
      %p74 = por %p72, %p73
      %p75 = scmp.ne.s32.totalorder %s64, %s65
      %p76 = scmp.eq.s32.totalorder %s16, 0
      %p77 = por %p75, %p76
      %p78 = scmp.ne.s32.totalorder %s64, %s65
      %p79 = scmp.eq.s32.totalorder %s17, 3
      %p80 = por %p78, %p79
      %p82 = scmp.ne.s32.totalorder %s65, %s81
      %p83 = scmp.eq.s32.totalorder %s17, 0
      %p84 = por %p82, %p83
      %s85 = ssub.s32 %s19, %s26
      %p86 = scmp.eq.s32.totalorder %s85, 0
      %s88 = sadd.s32 %s87, 1
      %s89 = scalar_select %p86, %s87, %s88
      %p92 = pneg %p86
      %p93 = scmp.eq.s32.totalorder %s11, 3
      %p94 = por %p92, %p93
      %p95 = scmp.ne.s32.totalorder %s87, %s90
      %p96 = scmp.eq.s32.totalorder %s11, 0
      %p97 = por %p95, %p96
      %p98 = scmp.ne.s32.totalorder %s87, %s90
      %p99 = scmp.eq.s32.totalorder %s16, 3
      %p100 = por %p98, %p99
      %p101 = scmp.ne.s32.totalorder %s90, %s91
      %p102 = scmp.eq.s32.totalorder %s16, 0
      %p103 = por %p101, %p102
      %p104 = scmp.ne.s32.totalorder %s90, %s91
      %p105 = scmp.eq.s32.totalorder %s17, 3
      %p106 = por %p104, %p105
      %p108 = scmp.ne.s32.totalorder %s91, %s107
      %p109 = scmp.eq.s32.totalorder %s17, 0
      %p110 = por %p108, %p109
      %s112 = sadd.s32 %s111, 1
      %p115 = scmp.eq.s32.totalorder %s11, 3
      %p116 = scmp.ne.s32.totalorder %s111, %s113
      %p117 = scmp.eq.s32.totalorder %s11, 0
      %p118 = por %p116, %p117
      %p119 = scmp.ne.s32.totalorder %s111, %s113
      %p120 = scmp.eq.s32.totalorder %s16, 3
      %p121 = por %p119, %p120
      %p122 = scmp.ne.s32.totalorder %s113, %s114
      %p123 = scmp.eq.s32.totalorder %s16, 0
      %p124 = por %p122, %p123
      %p125 = scmp.ne.s32.totalorder %s113, %s114
      %p126 = scmp.eq.s32.totalorder %s17, 3
      %p127 = por %p125, %p126
      %p129 = scmp.ne.s32.totalorder %s114, %s128
      %p130 = scmp.eq.s32.totalorder %s17, 0
      %p131 = por %p129, %p130
      %s132 = ssub.s32 %s18, %s30
      %p133 = scmp.eq.s32.totalorder %s132, 0
      %s135 = sadd.s32 %s134, 1
      %s136 = scalar_select %p133, %s134, %s135
      %p139 = pneg %p133
      %p140 = scmp.eq.s32.totalorder %s11, 3
      %p141 = por %p139, %p140
      %p142 = scmp.ne.s32.totalorder %s134, %s137
      %p143 = scmp.eq.s32.totalorder %s11, 0
      %p144 = por %p142, %p143
      %p145 = scmp.ne.s32.totalorder %s134, %s137
      %p146 = scmp.eq.s32.totalorder %s16, 3
      %p147 = por %p145, %p146
      %p148 = scmp.ne.s32.totalorder %s137, %s138
      %p149 = scmp.eq.s32.totalorder %s16, 0
      %p150 = por %p148, %p149
      %p151 = scmp.ne.s32.totalorder %s137, %s138
      %p152 = scmp.eq.s32.totalorder %s17, 3
      %p153 = por %p151, %p152
      %p155 = scmp.ne.s32.totalorder %s138, %s154
      %p156 = scmp.eq.s32.totalorder %s17, 0
      %p157 = por %p155, %p156
      %p158 = scmp.le.s32.totalorder 1, %s11
      %p159 = scmp.lt.s32.totalorder %s11, 5
      %p160 = pnand %p158, %p159
      %p161 = pneg %p160
      // Predicated region
      $region9: #{classifier_forward.3} parent=5 // pred_check
        _
      $region10: #{classifier_forward.3} parent=5 // pred_check_branch
        %163 = sbr.rel (%p160) target = $region12
      $region11: #{classifier_forward.3} parent=5 // pred_region
        %s164 = ssub.s32 %s11, 1
        // Predicated region
        $region13: #{classifier_forward.3} parent=11 // pred_check
          %p165 = pneg %p49
        $region14: #{classifier_forward.3} parent=11 // pred_check_branch
          %167 = sbr.rel (%p165) target = $region16
        $region15: #{classifier_forward.3} parent=11 // pred_region
          %p168 = scmp.lt.s32.totalorder %s20, 0
          %s169 = scalar_select %p168, %s20, 0
          %s170 = smul.addr %s169, 2
          %s171 = scalar_lea.vmem %s0, %s170
        $region16: #{classifier_forward.3} parent=11 // pred_fallthru
          _
        // Predicated region
        $region17: #{classifier_forward.3} parent=11 // pred_check
          %p172 = pneg %p124
        $region18: #{classifier_forward.3} parent=11 // pred_check_branch
          %174 = sbr.rel (%p172) target = $region20
        $region19: #{classifier_forward.3} parent=11 // pred_region
          _
        $region20: #{classifier_forward.3} parent=11 // pred_fallthru
          _
      $region12: #{classifier_forward.3} parent=5 // pred_fallthru
        _
      %p175 = scmp.lt.s32.totalorder %s11, 4
      // Predicated region
      $region21: #{classifier_forward.3} parent=5 // pred_check
        %p176 = pneg %p175
      $region22: #{classifier_forward.3} parent=5 // pred_check_branch
        %178 = sbr.rel (%p176) target = $region24
      $region23: #{classifier_forward.3} parent=5 // pred_region
        // Predicated region
        $region25: #{classifier_forward.3} parent=23 // pred_check
          %p179 = pneg %p71
        $region26: #{classifier_forward.3} parent=23 // pred_check_branch
          %181 = sbr.rel (%p179) target = $region28
        $region27: #{classifier_forward.3} parent=23 // pred_region
          %s182 = smul.u32 32, %s19
          %p183 = scmp.lt.s32.totalorder %s182, 127
          %s184 = scalar_select %p183, %s182, 127
          %p185 = scmp.lt.s32.totalorder %s18, 0
          %s186 = scalar_select %p185, %s18, 0
          %s187 = sadd.s32 %s186, %s184
          %s188 = smul.addr %s187, 2
          %s189 = scalar_lea.vmem %s1, %s188
          %s190 = smul.u32 32, %s19
        $region28: #{classifier_forward.3} parent=23 // pred_fallthru
          _
        // Predicated region
        $region29: #{classifier_forward.3} parent=23 // pred_check
          %p191 = pneg %p97
        $region30: #{classifier_forward.3} parent=23 // pred_check_branch
          %193 = sbr.rel (%p191) target = $region32
        $region31: #{classifier_forward.3} parent=23 // pred_region
          %s194 = smul.u32 32, %s19
          %p195 = scmp.lt.s32.totalorder %s194, 127
          %s196 = scalar_select %p195, %s194, 127
          %s197 = smul.addr %s196, 4
          %s198 = scalar_lea.vmem %s2, %s197
          %s199 = smul.u32 32, %s19
        $region32: #{classifier_forward.3} parent=23 // pred_fallthru
          _
      $region24: #{classifier_forward.3} parent=5 // pred_fallthru
        _
      %p200 = scmp.le.s32.totalorder 1, %s11
      %p201 = scmp.lt.s32.totalorder %s11, 5
      %p202 = pnand %p200, %p201
      %p203 = pneg %p202
      // Predicated region
      $region33: #{classifier_forward.3} parent=5 // pred_check
        _
      $region34: #{classifier_forward.3} parent=5 // pred_check_branch
        %205 = sbr.rel (%p202) target = $region36
      $region35: #{classifier_forward.3} parent=5 // pred_region
        %s206 = ssub.s32 %s11, 1
        %p207 = scmp.lt.s32.totalorder %s20, 0
        %s208 = scalar_select %p207, %s20, 0
        %s209 = smul.addr %s208, 2
        %s210 = scalar_lea.vmem %s0, %s209
        %p211 = pneg %p49
        %p212 = pneg %p46
        %s213 = smul.u32 32, %s21
        %p214 = scmp.lt.s32.totalorder %s213, 127
        %s215 = scalar_select %p214, %s213, 127
        %p216 = scmp.lt.s32.totalorder %s20, 0
        %s217 = scalar_select %p216, %s20, 0
        %s218 = sadd.s32 %s217, %s215
        %s219 = smul.addr %s218, 2
        %s220 = scalar_lea.vmem %s1, %s219
        %p221 = pneg %p77
        %p222 = pneg %p74
        %s223 = smul.u32 32, %s21
        %p224 = scmp.lt.s32.totalorder %s223, 127
        %s225 = scalar_select %p224, %s223, 127
        %s226 = smul.addr %s225, 4
        %s227 = scalar_lea.vmem %s2, %s226
        %p228 = pneg %p103
        %p229 = pneg %p100
        %p230 = pneg %p124
        %p231 = pneg %p121
        %p232 = pneg %p150
        %p233 = pneg %p147
        %p234 = scmp.lt.s32.totalorder %s20, 0
        %s235 = scalar_select %p234, %s20, 0
        %s236 = smul.addr %s235, 2
        %s237 = scalar_lea.vmem %s0, %s236
        %s238 = smul.u32 32, %s21
        %p239 = scmp.lt.s32.totalorder %s238, 127
        %s240 = scalar_select %p239, %s238, 127
        %p241 = scmp.lt.s32.totalorder %s20, 0
        %s242 = scalar_select %p241, %s20, 0
        %s243 = sadd.s32 %s242, %s240
        %s244 = smul.addr %s243, 2
        %s245 = scalar_lea.vmem %s1, %s244
        %s246 = smul.u32 32, %s21
        %s247 = smul.u32 32, %s21
        %p248 = scmp.lt.s32.totalorder %s247, 127
        %s249 = scalar_select %p248, %s247, 127
        %s250 = smul.addr %s249, 4
        %s251 = scalar_lea.vmem %s2, %s250
        %s252 = smul.u32 32, %s21
        %p253 = scmp.eq.s32.totalorder %s21, 0
        // Predicated region
        $region37: #{classifier_forward.3} parent=35 // pred_check
          %p254 = pneg %p253
        $region38: #{classifier_forward.3} parent=35 // pred_check_branch
          %256 = sbr.rel (%p254) target = $region40
        $region39: #{classifier_forward.3} parent=35 // pred_region
          %vm257 = vcmask 58368
          %258 = vst.msk [vmem:[#allocation2] sm:$0x3] %vm257, 0.0
        $region40: #{classifier_forward.3} parent=35 // pred_fallthru
          _
        %v259 = vld [vmem:[%s237] sm:$0x3]
        %v260 = vld [vmem:[%s245] sm:$0x3]
        %262 = vset.pattern.permute.xlu0 0
        %263 = vperm.xlu0 %262, %v260
        %v264 = vpop.permute.xlu0 %263
        %v266 = vmul.f32 %v264, %v259
        %v267 = vadd.f32 %v266, 1e-05
        %v268 = vrsqrt.pop %v267
        %v269 = vmul.f32 %v268, %v267
        %v270 = vmul.f32 %v269, %v268
        %v271 = vmul.f32 0.5, %v270
        %v272 = vsub.f32 1.5, %v271
        %v273 = vmul.f32 %v268, %v272
        %v274 = vmul.f32 %v267, %v273
        %vm275 = vcmp.eq.f32.partialorder %v267, inf
        %v276 = vsel %vm275, %v267, %v274
        %vm277 = vcmp.eq.f32.partialorder %v267, 0.0
        %v278 = vand.u32 %v267, 2147483648
        %v279 = vsel %vm277, %v278, %v276
        %v280 = vld [vmem:[%s251] sm:$0xf]
        %v281 = vunpack.c.l.bf16 %v280
        %v282 = vld [vmem:[#allocation2] sm:$0x3]
        %283 = vmatpush.xpose.msra.mxu0 0.0
        %284 = vmatpush.xpose.msra.mxu0 0.0
        %285 = vmatpush.xpose.msra.mxu0 0.0
        %286 = vmatpush.xpose.msra.mxu0 0.0
        %287 = vmatpush.xpose.msra.mxu0 0.0
        %288 = vmatpush.xpose.msra.mxu0 0.0
        %289 = vmatpush.xpose.msra.mxu0 0.0
        %290 = vmatpush.xpose.msra.mxu0 0.0
        %291 = vmatpush.xpose.msra.mxu0 0.0
        %292 = vmatpush.xpose.msra.mxu0 0.0
        %293 = vmatpush.xpose.msra.mxu0 0.0
        %294 = vmatpush.xpose.msra.mxu0 0.0
        %295 = vmatpush.xpose.msra.mxu0 0.0
        %296 = vmatpush.xpose.msra.mxu0 0.0
        %297 = vmatpush.xpose.msra.mxu0 0.0
        %298 = vmatpush.xpose.msra.mxu0 %v281
        %299 = vmatmul.f32.gmra.mxu0 %v279
        %v300 = vpop.f32.mrf.mxu0
        %v301 = vadd.f32 0.0, %v300
        %302 = vdwg.mxu0
        %v303 = vadd.f32 %v282, %v301
        %vm304 = vcmask 58368
        %305 = vst.msk [vmem:[#allocation2] sm:$0x3] %vm304, %v303
        %s306 = scalar_lea.vmem %s245, 2
        %v307 = vld [vmem:[%s306] sm:$0x3]
        %309 = vset.pattern.permute.xlu0 0
        %310 = vperm.xlu0 %309, %v307
        %v311 = vpop.permute.xlu0 %310
        %v313 = vmul.f32 %v311, %v259
        %v314 = vadd.f32 %v313, 1e-05
        %v315 = vrsqrt.pop %v314
        %v316 = vmul.f32 %v315, %v314
        %v317 = vmul.f32 %v316, %v315
        %v318 = vmul.f32 0.5, %v317
        %v319 = vsub.f32 1.5, %v318
        %v320 = vmul.f32 %v315, %v319
        %v321 = vmul.f32 %v314, %v320
        %vm322 = vcmp.eq.f32.partialorder %v314, inf
        %v323 = vsel %vm322, %v314, %v321
        %vm324 = vcmp.eq.f32.partialorder %v314, 0.0
        %v325 = vand.u32 %v314, 2147483648
        %v326 = vsel %vm324, %v325, %v323
        %s327 = scalar_lea.vmem %s251, 4
        %v328 = vld [vmem:[%s327] sm:$0xf]
        %v329 = vunpack.c.l.bf16 %v328
        %v330 = vld [vmem:[#allocation2] sm:$0x3]
        %331 = vmatpush.xpose.msra.mxu0 0.0
        %332 = vmatpush.xpose.msra.mxu0 0.0
        %333 = vmatpush.xpose.msra.mxu0 0.0
        %334 = vmatpush.xpose.msra.mxu0 0.0
        %335 = vmatpush.xpose.msra.mxu0 0.0
        %336 = vmatpush.xpose.msra.mxu0 0.0
        %337 = vmatpush.xpose.msra.mxu0 0.0
        %338 = vmatpush.xpose.msra.mxu0 0.0
        %339 = vmatpush.xpose.msra.mxu0 0.0
        %340 = vmatpush.xpose.msra.mxu0 0.0
        %341 = vmatpush.xpose.msra.mxu0 0.0
        %342 = vmatpush.xpose.msra.mxu0 0.0
        %343 = vmatpush.xpose.msra.mxu0 0.0
        %344 = vmatpush.xpose.msra.mxu0 0.0
        %345 = vmatpush.xpose.msra.mxu0 0.0
        %346 = vmatpush.xpose.msra.mxu0 %v329
        %347 = vmatmul.f32.gmra.mxu0 %v326
        %v348 = vpop.f32.mrf.mxu0
        %v349 = vadd.f32 0.0, %v348
        %350 = vdwg.mxu0
        %v351 = vadd.f32 %v330, %v349
        %352 = vst.msk [vmem:[#allocation2] sm:$0x3] %vm304, %v351
        %s353 = scalar_lea.vmem %s245, 4
        %v354 = vld [vmem:[%s353] sm:$0x3]
        %356 = vset.pattern.permute.xlu0 0
        %357 = vperm.xlu0 %356, %v354
        %v358 = vpop.permute.xlu0 %357
        %v360 = vmul.f32 %v358, %v259
        %v361 = vadd.f32 %v360, 1e-05
        %v362 = vrsqrt.pop %v361
        %v363 = vmul.f32 %v362, %v361
        %v364 = vmul.f32 %v363, %v362
        %v365 = vmul.f32 0.5, %v364
        %v366 = vsub.f32 1.5, %v365
        %v367 = vmul.f32 %v362, %v366
        %v368 = vmul.f32 %v361, %v367
        %vm369 = vcmp.eq.f32.partialorder %v361, inf
        %v370 = vsel %vm369, %v361, %v368
        %vm371 = vcmp.eq.f32.partialorder %v361, 0.0
        %v372 = vand.u32 %v361, 2147483648
        %v373 = vsel %vm371, %v372, %v370
        %s374 = scalar_lea.vmem %s251, 8
        %v375 = vld [vmem:[%s374] sm:$0xf]
        %v376 = vunpack.c.l.bf16 %v375
        %v377 = vld [vmem:[#allocation2] sm:$0x3]
        %378 = vmatpush.xpose.msra.mxu0 0.0
        %379 = vmatpush.xpose.msra.mxu0 0.0
        %380 = vmatpush.xpose.msra.mxu0 0.0
        %381 = vmatpush.xpose.msra.mxu0 0.0
        %382 = vmatpush.xpose.msra.mxu0 0.0
        %383 = vmatpush.xpose.msra.mxu0 0.0
        %384 = vmatpush.xpose.msra.mxu0 0.0
        %385 = vmatpush.xpose.msra.mxu0 0.0
        %386 = vmatpush.xpose.msra.mxu0 0.0
        %387 = vmatpush.xpose.msra.mxu0 0.0
        %388 = vmatpush.xpose.msra.mxu0 0.0
        %389 = vmatpush.xpose.msra.mxu0 0.0
        %390 = vmatpush.xpose.msra.mxu0 0.0
        %391 = vmatpush.xpose.msra.mxu0 0.0
        %392 = vmatpush.xpose.msra.mxu0 0.0
        %393 = vmatpush.xpose.msra.mxu0 %v376
        %394 = vmatmul.f32.gmra.mxu0 %v373
        %v395 = vpop.f32.mrf.mxu0
        %v396 = vadd.f32 0.0, %v395
        %397 = vdwg.mxu0
        %v398 = vadd.f32 %v377, %v396
        %399 = vst.msk [vmem:[#allocation2] sm:$0x3] %vm304, %v398
        %s400 = scalar_lea.vmem %s245, 6
        %v401 = vld [vmem:[%s400] sm:$0x3]
        %403 = vset.pattern.permute.xlu0 0
        %404 = vperm.xlu0 %403, %v401
        %v405 = vpop.permute.xlu0 %404
        %v407 = vmul.f32 %v405, %v259
        %v408 = vadd.f32 %v407, 1e-05
        %v409 = vrsqrt.pop %v408
        %v410 = vmul.f32 %v409, %v408
        %v411 = vmul.f32 %v410, %v409
        %v412 = vmul.f32 0.5, %v411
        %v413 = vsub.f32 1.5, %v412
        %v414 = vmul.f32 %v409, %v413
        %v415 = vmul.f32 %v408, %v414
        %vm416 = vcmp.eq.f32.partialorder %v408, inf
        %v417 = vsel %vm416, %v408, %v415
        %vm418 = vcmp.eq.f32.partialorder %v408, 0.0
        %v419 = vand.u32 %v408, 2147483648
        %v420 = vsel %vm418, %v419, %v417
        %s421 = scalar_lea.vmem %s251, 12
        %v422 = vld [vmem:[%s421] sm:$0xf]
        %v423 = vunpack.c.l.bf16 %v422
        %v424 = vld [vmem:[#allocation2] sm:$0x3]
        %425 = vmatpush.xpose.msra.mxu0 0.0
        %426 = vmatpush.xpose.msra.mxu0 0.0
        %427 = vmatpush.xpose.msra.mxu0 0.0
        %428 = vmatpush.xpose.msra.mxu0 0.0
        %429 = vmatpush.xpose.msra.mxu0 0.0
        %430 = vmatpush.xpose.msra.mxu0 0.0
        %431 = vmatpush.xpose.msra.mxu0 0.0
        %432 = vmatpush.xpose.msra.mxu0 0.0
        %433 = vmatpush.xpose.msra.mxu0 0.0
        %434 = vmatpush.xpose.msra.mxu0 0.0
        %435 = vmatpush.xpose.msra.mxu0 0.0
        %436 = vmatpush.xpose.msra.mxu0 0.0
        %437 = vmatpush.xpose.msra.mxu0 0.0
        %438 = vmatpush.xpose.msra.mxu0 0.0
        %439 = vmatpush.xpose.msra.mxu0 0.0
        %440 = vmatpush.xpose.msra.mxu0 %v423
        %441 = vmatmul.f32.gmra.mxu0 %v420
        %v442 = vpop.f32.mrf.mxu0
        %v443 = vadd.f32 0.0, %v442
        %444 = vdwg.mxu0
        %v445 = vadd.f32 %v424, %v443
        %446 = vst.msk [vmem:[#allocation2] sm:$0x3] %vm304, %v445
        %s447 = scalar_lea.vmem %s245, 8
        %v448 = vld [vmem:[%s447] sm:$0x3]
        %450 = vset.pattern.permute.xlu0 0
        %451 = vperm.xlu0 %450, %v448
        %v452 = vpop.permute.xlu0 %451
        %v454 = vmul.f32 %v452, %v259
        %v455 = vadd.f32 %v454, 1e-05
        %v456 = vrsqrt.pop %v455
        %v457 = vmul.f32 %v456, %v455
        %v458 = vmul.f32 %v457, %v456
        %v459 = vmul.f32 0.5, %v458
        %v460 = vsub.f32 1.5, %v459
        %v461 = vmul.f32 %v456, %v460
        %v462 = vmul.f32 %v455, %v461
        %vm463 = vcmp.eq.f32.partialorder %v455, inf
        %v464 = vsel %vm463, %v455, %v462
        %vm465 = vcmp.eq.f32.partialorder %v455, 0.0
        %v466 = vand.u32 %v455, 2147483648
        %v467 = vsel %vm465, %v466, %v464
        %s468 = scalar_lea.vmem %s251, 16
        %v469 = vld [vmem:[%s468] sm:$0xf]
        %v470 = vunpack.c.l.bf16 %v469
        %v471 = vld [vmem:[#allocation2] sm:$0x3]
        %472 = vmatpush.xpose.msra.mxu0 0.0
        %473 = vmatpush.xpose.msra.mxu0 0.0
        %474 = vmatpush.xpose.msra.mxu0 0.0
        %475 = vmatpush.xpose.msra.mxu0 0.0
        %476 = vmatpush.xpose.msra.mxu0 0.0
        %477 = vmatpush.xpose.msra.mxu0 0.0
        %478 = vmatpush.xpose.msra.mxu0 0.0
        %479 = vmatpush.xpose.msra.mxu0 0.0
        %480 = vmatpush.xpose.msra.mxu0 0.0
        %481 = vmatpush.xpose.msra.mxu0 0.0
        %482 = vmatpush.xpose.msra.mxu0 0.0
        %483 = vmatpush.xpose.msra.mxu0 0.0
        %484 = vmatpush.xpose.msra.mxu0 0.0
        %485 = vmatpush.xpose.msra.mxu0 0.0
        %486 = vmatpush.xpose.msra.mxu0 0.0
        %487 = vmatpush.xpose.msra.mxu0 %v470
        %488 = vmatmul.f32.gmra.mxu0 %v467
        %v489 = vpop.f32.mrf.mxu0
        %v490 = vadd.f32 0.0, %v489
        %491 = vdwg.mxu0
        %v492 = vadd.f32 %v471, %v490
        %493 = vst.msk [vmem:[#allocation2] sm:$0x3] %vm304, %v492
        %s494 = scalar_lea.vmem %s245, 10
        %v495 = vld [vmem:[%s494] sm:$0x3]
        %497 = vset.pattern.permute.xlu0 0
        %498 = vperm.xlu0 %497, %v495
        %v499 = vpop.permute.xlu0 %498
        %v501 = vmul.f32 %v499, %v259
        %v502 = vadd.f32 %v501, 1e-05
        %v503 = vrsqrt.pop %v502
        %v504 = vmul.f32 %v503, %v502
        %v505 = vmul.f32 %v504, %v503
        %v506 = vmul.f32 0.5, %v505
        %v507 = vsub.f32 1.5, %v506
        %v508 = vmul.f32 %v503, %v507
        %v509 = vmul.f32 %v502, %v508
        %vm510 = vcmp.eq.f32.partialorder %v502, inf
        %v511 = vsel %vm510, %v502, %v509
        %vm512 = vcmp.eq.f32.partialorder %v502, 0.0
        %v513 = vand.u32 %v502, 2147483648
        %v514 = vsel %vm512, %v513, %v511
        %s515 = scalar_lea.vmem %s251, 20
        %v516 = vld [vmem:[%s515] sm:$0xf]
        %v517 = vunpack.c.l.bf16 %v516
        %v518 = vld [vmem:[#allocation2] sm:$0x3]
        %519 = vmatpush.xpose.msra.mxu0 0.0
        %520 = vmatpush.xpose.msra.mxu0 0.0
        %521 = vmatpush.xpose.msra.mxu0 0.0
        %522 = vmatpush.xpose.msra.mxu0 0.0
        %523 = vmatpush.xpose.msra.mxu0 0.0
        %524 = vmatpush.xpose.msra.mxu0 0.0
        %525 = vmatpush.xpose.msra.mxu0 0.0
        %526 = vmatpush.xpose.msra.mxu0 0.0
        %527 = vmatpush.xpose.msra.mxu0 0.0
        %528 = vmatpush.xpose.msra.mxu0 0.0
        %529 = vmatpush.xpose.msra.mxu0 0.0
        %530 = vmatpush.xpose.msra.mxu0 0.0
        %531 = vmatpush.xpose.msra.mxu0 0.0
        %532 = vmatpush.xpose.msra.mxu0 0.0
        %533 = vmatpush.xpose.msra.mxu0 0.0
        %534 = vmatpush.xpose.msra.mxu0 %v517
        %535 = vmatmul.f32.gmra.mxu0 %v514
        %v536 = vpop.f32.mrf.mxu0
        %v537 = vadd.f32 0.0, %v536
        %538 = vdwg.mxu0
        %v539 = vadd.f32 %v518, %v537
        %540 = vst.msk [vmem:[#allocation2] sm:$0x3] %vm304, %v539
        %s541 = scalar_lea.vmem %s245, 12
        %v542 = vld [vmem:[%s541] sm:$0x3]
        %544 = vset.pattern.permute.xlu0 0
        %545 = vperm.xlu0 %544, %v542
        %v546 = vpop.permute.xlu0 %545
        %v548 = vmul.f32 %v546, %v259
        %v549 = vadd.f32 %v548, 1e-05
        %v550 = vrsqrt.pop %v549
        %v551 = vmul.f32 %v550, %v549
        %v552 = vmul.f32 %v551, %v550
        %v553 = vmul.f32 0.5, %v552
        %v554 = vsub.f32 1.5, %v553
        %v555 = vmul.f32 %v550, %v554
        %v556 = vmul.f32 %v549, %v555
        %vm557 = vcmp.eq.f32.partialorder %v549, inf
        %v558 = vsel %vm557, %v549, %v556
        %vm559 = vcmp.eq.f32.partialorder %v549, 0.0
        %v560 = vand.u32 %v549, 2147483648
        %v561 = vsel %vm559, %v560, %v558
        %s562 = scalar_lea.vmem %s251, 24
        %v563 = vld [vmem:[%s562] sm:$0xf]
        %v564 = vunpack.c.l.bf16 %v563
        %v565 = vld [vmem:[#allocation2] sm:$0x3]
        %566 = vmatpush.xpose.msra.mxu0 0.0
        %567 = vmatpush.xpose.msra.mxu0 0.0
        %568 = vmatpush.xpose.msra.mxu0 0.0
        %569 = vmatpush.xpose.msra.mxu0 0.0
        %570 = vmatpush.xpose.msra.mxu0 0.0
        %571 = vmatpush.xpose.msra.mxu0 0.0
        %572 = vmatpush.xpose.msra.mxu0 0.0
        %573 = vmatpush.xpose.msra.mxu0 0.0
        %574 = vmatpush.xpose.msra.mxu0 0.0
        %575 = vmatpush.xpose.msra.mxu0 0.0
        %576 = vmatpush.xpose.msra.mxu0 0.0
        %577 = vmatpush.xpose.msra.mxu0 0.0
        %578 = vmatpush.xpose.msra.mxu0 0.0
        %579 = vmatpush.xpose.msra.mxu0 0.0
        %580 = vmatpush.xpose.msra.mxu0 0.0
        %581 = vmatpush.xpose.msra.mxu0 %v564
        %582 = vmatmul.f32.gmra.mxu0 %v561
        %v583 = vpop.f32.mrf.mxu0
        %v584 = vadd.f32 0.0, %v583
        %585 = vdwg.mxu0
        %v586 = vadd.f32 %v565, %v584
        %587 = vst.msk [vmem:[#allocation2] sm:$0x3] %vm304, %v586
        %s588 = scalar_lea.vmem %s245, 14
        %v589 = vld [vmem:[%s588] sm:$0x3]
        %591 = vset.pattern.permute.xlu0 0
        %592 = vperm.xlu0 %591, %v589
        %v593 = vpop.permute.xlu0 %592
        %v595 = vmul.f32 %v593, %v259
        %v596 = vadd.f32 %v595, 1e-05
        %v597 = vrsqrt.pop %v596
        %v598 = vmul.f32 %v597, %v596
        %v599 = vmul.f32 %v598, %v597
        %v600 = vmul.f32 0.5, %v599
        %v601 = vsub.f32 1.5, %v600
        %v602 = vmul.f32 %v597, %v601
        %v603 = vmul.f32 %v596, %v602
        %vm604 = vcmp.eq.f32.partialorder %v596, inf
        %v605 = vsel %vm604, %v596, %v603
        %vm606 = vcmp.eq.f32.partialorder %v596, 0.0
        %v607 = vand.u32 %v596, 2147483648
        %v608 = vsel %vm606, %v607, %v605
        %s609 = scalar_lea.vmem %s251, 28
        %v610 = vld [vmem:[%s609] sm:$0xf]
        %v611 = vunpack.c.l.bf16 %v610
        %v612 = vld [vmem:[#allocation2] sm:$0x3]
        %613 = vmatpush.xpose.msra.mxu0 0.0
        %614 = vmatpush.xpose.msra.mxu0 0.0
        %615 = vmatpush.xpose.msra.mxu0 0.0
        %616 = vmatpush.xpose.msra.mxu0 0.0
        %617 = vmatpush.xpose.msra.mxu0 0.0
        %618 = vmatpush.xpose.msra.mxu0 0.0
        %619 = vmatpush.xpose.msra.mxu0 0.0
        %620 = vmatpush.xpose.msra.mxu0 0.0
        %621 = vmatpush.xpose.msra.mxu0 0.0
        %622 = vmatpush.xpose.msra.mxu0 0.0
        %623 = vmatpush.xpose.msra.mxu0 0.0
        %624 = vmatpush.xpose.msra.mxu0 0.0
        %625 = vmatpush.xpose.msra.mxu0 0.0
        %626 = vmatpush.xpose.msra.mxu0 0.0
        %627 = vmatpush.xpose.msra.mxu0 0.0
        %628 = vmatpush.xpose.msra.mxu0 %v611
        %629 = vmatmul.f32.gmra.mxu0 %v608
        %v630 = vpop.f32.mrf.mxu0
        %v631 = vadd.f32 0.0, %v630
        %632 = vdwg.mxu0
        %v633 = vadd.f32 %v612, %v631
        %634 = vst.msk [vmem:[#allocation2] sm:$0x3] %vm304, %v633
        %s635 = scalar_lea.vmem %s245, 16
        %v636 = vld [vmem:[%s635] sm:$0x3]
        %638 = vset.pattern.permute.xlu0 0
        %639 = vperm.xlu0 %638, %v636
        %v640 = vpop.permute.xlu0 %639
        %v642 = vmul.f32 %v640, %v259
        %v643 = vadd.f32 %v642, 1e-05
        %v644 = vrsqrt.pop %v643
        %v645 = vmul.f32 %v644, %v643
        %v646 = vmul.f32 %v645, %v644
        %v647 = vmul.f32 0.5, %v646
        %v648 = vsub.f32 1.5, %v647
        %v649 = vmul.f32 %v644, %v648
        %v650 = vmul.f32 %v643, %v649
        %vm651 = vcmp.eq.f32.partialorder %v643, inf
        %v652 = vsel %vm651, %v643, %v650
        %vm653 = vcmp.eq.f32.partialorder %v643, 0.0
        %v654 = vand.u32 %v643, 2147483648
        %v655 = vsel %vm653, %v654, %v652
        %s656 = scalar_lea.vmem %s251, 32
        %v657 = vld [vmem:[%s656] sm:$0xf]
        %v658 = vunpack.c.l.bf16 %v657
        %v659 = vld [vmem:[#allocation2] sm:$0x3]
        %660 = vmatpush.xpose.msra.mxu0 0.0
        %661 = vmatpush.xpose.msra.mxu0 0.0
        %662 = vmatpush.xpose.msra.mxu0 0.0
        %663 = vmatpush.xpose.msra.mxu0 0.0
        %664 = vmatpush.xpose.msra.mxu0 0.0
        %665 = vmatpush.xpose.msra.mxu0 0.0
        %666 = vmatpush.xpose.msra.mxu0 0.0
        %667 = vmatpush.xpose.msra.mxu0 0.0
        %668 = vmatpush.xpose.msra.mxu0 0.0
        %669 = vmatpush.xpose.msra.mxu0 0.0
        %670 = vmatpush.xpose.msra.mxu0 0.0
        %671 = vmatpush.xpose.msra.mxu0 0.0
        %672 = vmatpush.xpose.msra.mxu0 0.0
        %673 = vmatpush.xpose.msra.mxu0 0.0
        %674 = vmatpush.xpose.msra.mxu0 0.0
        %675 = vmatpush.xpose.msra.mxu0 %v658
        %676 = vmatmul.f32.gmra.mxu0 %v655
        %v677 = vpop.f32.mrf.mxu0
        %v678 = vadd.f32 0.0, %v677
        %679 = vdwg.mxu0
        %v680 = vadd.f32 %v659, %v678
        %681 = vst.msk [vmem:[#allocation2] sm:$0x3] %vm304, %v680
        %s682 = scalar_lea.vmem %s245, 18
        %v683 = vld [vmem:[%s682] sm:$0x3]
        %685 = vset.pattern.permute.xlu0 0
        %686 = vperm.xlu0 %685, %v683
        %v687 = vpop.permute.xlu0 %686
        %v689 = vmul.f32 %v687, %v259
        %v690 = vadd.f32 %v689, 1e-05
        %v691 = vrsqrt.pop %v690
        %v692 = vmul.f32 %v691, %v690
        %v693 = vmul.f32 %v692, %v691
        %v694 = vmul.f32 0.5, %v693
        %v695 = vsub.f32 1.5, %v694
        %v696 = vmul.f32 %v691, %v695
        %v697 = vmul.f32 %v690, %v696
        %vm698 = vcmp.eq.f32.partialorder %v690, inf
        %v699 = vsel %vm698, %v690, %v697
        %vm700 = vcmp.eq.f32.partialorder %v690, 0.0
        %v701 = vand.u32 %v690, 2147483648
        %v702 = vsel %vm700, %v701, %v699
        %s703 = scalar_lea.vmem %s251, 36
        %v704 = vld [vmem:[%s703] sm:$0xf]
        %v705 = vunpack.c.l.bf16 %v704
        %v706 = vld [vmem:[#allocation2] sm:$0x3]
        %707 = vmatpush.xpose.msra.mxu0 0.0
        %708 = vmatpush.xpose.msra.mxu0 0.0
        %709 = vmatpush.xpose.msra.mxu0 0.0
        %710 = vmatpush.xpose.msra.mxu0 0.0
        %711 = vmatpush.xpose.msra.mxu0 0.0
        %712 = vmatpush.xpose.msra.mxu0 0.0
        %713 = vmatpush.xpose.msra.mxu0 0.0
        %714 = vmatpush.xpose.msra.mxu0 0.0
        %715 = vmatpush.xpose.msra.mxu0 0.0
        %716 = vmatpush.xpose.msra.mxu0 0.0
        %717 = vmatpush.xpose.msra.mxu0 0.0
        %718 = vmatpush.xpose.msra.mxu0 0.0
        %719 = vmatpush.xpose.msra.mxu0 0.0
        %720 = vmatpush.xpose.msra.mxu0 0.0
        %721 = vmatpush.xpose.msra.mxu0 0.0
        %722 = vmatpush.xpose.msra.mxu0 %v705
        %723 = vmatmul.f32.gmra.mxu0 %v702
        %v724 = vpop.f32.mrf.mxu0
        %v725 = vadd.f32 0.0, %v724
        %726 = vdwg.mxu0
        %v727 = vadd.f32 %v706, %v725
        %728 = vst.msk [vmem:[#allocation2] sm:$0x3] %vm304, %v727
        %s729 = scalar_lea.vmem %s245, 20
        %v730 = vld [vmem:[%s729] sm:$0x3]
        %732 = vset.pattern.permute.xlu0 0
        %733 = vperm.xlu0 %732, %v730
        %v734 = vpop.permute.xlu0 %733
        %v736 = vmul.f32 %v734, %v259
        %v737 = vadd.f32 %v736, 1e-05
        %v738 = vrsqrt.pop %v737
        %v739 = vmul.f32 %v738, %v737
        %v740 = vmul.f32 %v739, %v738
        %v741 = vmul.f32 0.5, %v740
        %v742 = vsub.f32 1.5, %v741
        %v743 = vmul.f32 %v738, %v742
        %v744 = vmul.f32 %v737, %v743
        %vm745 = vcmp.eq.f32.partialorder %v737, inf
        %v746 = vsel %vm745, %v737, %v744
        %vm747 = vcmp.eq.f32.partialorder %v737, 0.0
        %v748 = vand.u32 %v737, 2147483648
        %v749 = vsel %vm747, %v748, %v746
        %s750 = scalar_lea.vmem %s251, 40
        %v751 = vld [vmem:[%s750] sm:$0xf]
        %v752 = vunpack.c.l.bf16 %v751
        %v753 = vld [vmem:[#allocation2] sm:$0x3]
        %754 = vmatpush.xpose.msra.mxu0 0.0
        %755 = vmatpush.xpose.msra.mxu0 0.0
        %756 = vmatpush.xpose.msra.mxu0 0.0
        %757 = vmatpush.xpose.msra.mxu0 0.0
        %758 = vmatpush.xpose.msra.mxu0 0.0
        %759 = vmatpush.xpose.msra.mxu0 0.0
        %760 = vmatpush.xpose.msra.mxu0 0.0
        %761 = vmatpush.xpose.msra.mxu0 0.0
        %762 = vmatpush.xpose.msra.mxu0 0.0
        %763 = vmatpush.xpose.msra.mxu0 0.0
        %764 = vmatpush.xpose.msra.mxu0 0.0
        %765 = vmatpush.xpose.msra.mxu0 0.0
        %766 = vmatpush.xpose.msra.mxu0 0.0
        %767 = vmatpush.xpose.msra.mxu0 0.0
        %768 = vmatpush.xpose.msra.mxu0 0.0
        %769 = vmatpush.xpose.msra.mxu0 %v752
        %770 = vmatmul.f32.gmra.mxu0 %v749
        %v771 = vpop.f32.mrf.mxu0
        %v772 = vadd.f32 0.0, %v771
        %773 = vdwg.mxu0
        %v774 = vadd.f32 %v753, %v772
        %775 = vst.msk [vmem:[#allocation2] sm:$0x3] %vm304, %v774
        %s776 = scalar_lea.vmem %s245, 22
        %v777 = vld [vmem:[%s776] sm:$0x3]
        %779 = vset.pattern.permute.xlu0 0
        %780 = vperm.xlu0 %779, %v777
        %v781 = vpop.permute.xlu0 %780
        %v783 = vmul.f32 %v781, %v259
        %v784 = vadd.f32 %v783, 1e-05
        %v785 = vrsqrt.pop %v784
        %v786 = vmul.f32 %v785, %v784
        %v787 = vmul.f32 %v786, %v785
        %v788 = vmul.f32 0.5, %v787
        %v789 = vsub.f32 1.5, %v788
        %v790 = vmul.f32 %v785, %v789
        %v791 = vmul.f32 %v784, %v790
        %vm792 = vcmp.eq.f32.partialorder %v784, inf
        %v793 = vsel %vm792, %v784, %v791
        %vm794 = vcmp.eq.f32.partialorder %v784, 0.0
        %v795 = vand.u32 %v784, 2147483648
        %v796 = vsel %vm794, %v795, %v793
        %s797 = scalar_lea.vmem %s251, 44
        %v798 = vld [vmem:[%s797] sm:$0xf]
        %v799 = vunpack.c.l.bf16 %v798
        %v800 = vld [vmem:[#allocation2] sm:$0x3]
        %801 = vmatpush.xpose.msra.mxu0 0.0
        %802 = vmatpush.xpose.msra.mxu0 0.0
        %803 = vmatpush.xpose.msra.mxu0 0.0
        %804 = vmatpush.xpose.msra.mxu0 0.0
        %805 = vmatpush.xpose.msra.mxu0 0.0
        %806 = vmatpush.xpose.msra.mxu0 0.0
        %807 = vmatpush.xpose.msra.mxu0 0.0
        %808 = vmatpush.xpose.msra.mxu0 0.0
        %809 = vmatpush.xpose.msra.mxu0 0.0
        %810 = vmatpush.xpose.msra.mxu0 0.0
        %811 = vmatpush.xpose.msra.mxu0 0.0
        %812 = vmatpush.xpose.msra.mxu0 0.0
        %813 = vmatpush.xpose.msra.mxu0 0.0
        %814 = vmatpush.xpose.msra.mxu0 0.0
        %815 = vmatpush.xpose.msra.mxu0 0.0
        %816 = vmatpush.xpose.msra.mxu0 %v799
        %817 = vmatmul.f32.gmra.mxu0 %v796
        %v818 = vpop.f32.mrf.mxu0
        %v819 = vadd.f32 0.0, %v818
        %820 = vdwg.mxu0
        %v821 = vadd.f32 %v800, %v819
        %822 = vst.msk [vmem:[#allocation2] sm:$0x3] %vm304, %v821
        %s823 = scalar_lea.vmem %s245, 24
        %v824 = vld [vmem:[%s823] sm:$0x3]
        %826 = vset.pattern.permute.xlu0 0
        %827 = vperm.xlu0 %826, %v824
        %v828 = vpop.permute.xlu0 %827
        %v830 = vmul.f32 %v828, %v259
        %v831 = vadd.f32 %v830, 1e-05
        %v832 = vrsqrt.pop %v831
        %v833 = vmul.f32 %v832, %v831
        %v834 = vmul.f32 %v833, %v832
        %v835 = vmul.f32 0.5, %v834
        %v836 = vsub.f32 1.5, %v835
        %v837 = vmul.f32 %v832, %v836
        %v838 = vmul.f32 %v831, %v837
        %vm839 = vcmp.eq.f32.partialorder %v831, inf
        %v840 = vsel %vm839, %v831, %v838
        %vm841 = vcmp.eq.f32.partialorder %v831, 0.0
        %v842 = vand.u32 %v831, 2147483648
        %v843 = vsel %vm841, %v842, %v840
        %s844 = scalar_lea.vmem %s251, 48
        %v845 = vld [vmem:[%s844] sm:$0xf]
        %v846 = vunpack.c.l.bf16 %v845
        %v847 = vld [vmem:[#allocation2] sm:$0x3]
        %848 = vmatpush.xpose.msra.mxu0 0.0
        %849 = vmatpush.xpose.msra.mxu0 0.0
        %850 = vmatpush.xpose.msra.mxu0 0.0
        %851 = vmatpush.xpose.msra.mxu0 0.0
        %852 = vmatpush.xpose.msra.mxu0 0.0
        %853 = vmatpush.xpose.msra.mxu0 0.0
        %854 = vmatpush.xpose.msra.mxu0 0.0
        %855 = vmatpush.xpose.msra.mxu0 0.0
        %856 = vmatpush.xpose.msra.mxu0 0.0
        %857 = vmatpush.xpose.msra.mxu0 0.0
        %858 = vmatpush.xpose.msra.mxu0 0.0
        %859 = vmatpush.xpose.msra.mxu0 0.0
        %860 = vmatpush.xpose.msra.mxu0 0.0
        %861 = vmatpush.xpose.msra.mxu0 0.0
        %862 = vmatpush.xpose.msra.mxu0 0.0
        %863 = vmatpush.xpose.msra.mxu0 %v846
        %864 = vmatmul.f32.gmra.mxu0 %v843
        %v865 = vpop.f32.mrf.mxu0
        %v866 = vadd.f32 0.0, %v865
        %867 = vdwg.mxu0
        %v868 = vadd.f32 %v847, %v866
        %869 = vst.msk [vmem:[#allocation2] sm:$0x3] %vm304, %v868
        %s870 = scalar_lea.vmem %s245, 26
        %v871 = vld [vmem:[%s870] sm:$0x3]
        %873 = vset.pattern.permute.xlu0 0
        %874 = vperm.xlu0 %873, %v871
        %v875 = vpop.permute.xlu0 %874
        %v877 = vmul.f32 %v875, %v259
        %v878 = vadd.f32 %v877, 1e-05
        %v879 = vrsqrt.pop %v878
        %v880 = vmul.f32 %v879, %v878
        %v881 = vmul.f32 %v880, %v879
        %v882 = vmul.f32 0.5, %v881
        %v883 = vsub.f32 1.5, %v882
        %v884 = vmul.f32 %v879, %v883
        %v885 = vmul.f32 %v878, %v884
        %vm886 = vcmp.eq.f32.partialorder %v878, inf
        %v887 = vsel %vm886, %v878, %v885
        %vm888 = vcmp.eq.f32.partialorder %v878, 0.0
        %v889 = vand.u32 %v878, 2147483648
        %v890 = vsel %vm888, %v889, %v887
        %s891 = scalar_lea.vmem %s251, 52
        %v892 = vld [vmem:[%s891] sm:$0xf]
        %v893 = vunpack.c.l.bf16 %v892
        %v894 = vld [vmem:[#allocation2] sm:$0x3]
        %895 = vmatpush.xpose.msra.mxu0 0.0
        %896 = vmatpush.xpose.msra.mxu0 0.0
        %897 = vmatpush.xpose.msra.mxu0 0.0
        %898 = vmatpush.xpose.msra.mxu0 0.0
        %899 = vmatpush.xpose.msra.mxu0 0.0
        %900 = vmatpush.xpose.msra.mxu0 0.0
        %901 = vmatpush.xpose.msra.mxu0 0.0
        %902 = vmatpush.xpose.msra.mxu0 0.0
        %903 = vmatpush.xpose.msra.mxu0 0.0
        %904 = vmatpush.xpose.msra.mxu0 0.0
        %905 = vmatpush.xpose.msra.mxu0 0.0
        %906 = vmatpush.xpose.msra.mxu0 0.0
        %907 = vmatpush.xpose.msra.mxu0 0.0
        %908 = vmatpush.xpose.msra.mxu0 0.0
        %909 = vmatpush.xpose.msra.mxu0 0.0
        %910 = vmatpush.xpose.msra.mxu0 %v893
        %911 = vmatmul.f32.gmra.mxu0 %v890
        %v912 = vpop.f32.mrf.mxu0
        %v913 = vadd.f32 0.0, %v912
        %914 = vdwg.mxu0
        %v915 = vadd.f32 %v894, %v913
        %916 = vst.msk [vmem:[#allocation2] sm:$0x3] %vm304, %v915
        %s917 = scalar_lea.vmem %s245, 28
        %v918 = vld [vmem:[%s917] sm:$0x3]
        %920 = vset.pattern.permute.xlu0 0
        %921 = vperm.xlu0 %920, %v918
        %v922 = vpop.permute.xlu0 %921
        %v924 = vmul.f32 %v922, %v259
        %v925 = vadd.f32 %v924, 1e-05
        %v926 = vrsqrt.pop %v925
        %v927 = vmul.f32 %v926, %v925
        %v928 = vmul.f32 %v927, %v926
        %v929 = vmul.f32 0.5, %v928
        %v930 = vsub.f32 1.5, %v929
        %v931 = vmul.f32 %v926, %v930
        %v932 = vmul.f32 %v925, %v931
        %vm933 = vcmp.eq.f32.partialorder %v925, inf
        %v934 = vsel %vm933, %v925, %v932
        %vm935 = vcmp.eq.f32.partialorder %v925, 0.0
        %v936 = vand.u32 %v925, 2147483648
        %v937 = vsel %vm935, %v936, %v934
        %s938 = scalar_lea.vmem %s251, 56
        %v939 = vld [vmem:[%s938] sm:$0xf]
        %v940 = vunpack.c.l.bf16 %v939
        %v941 = vld [vmem:[#allocation2] sm:$0x3]
        %942 = vmatpush.xpose.msra.mxu0 0.0
        %943 = vmatpush.xpose.msra.mxu0 0.0
        %944 = vmatpush.xpose.msra.mxu0 0.0
        %945 = vmatpush.xpose.msra.mxu0 0.0
        %946 = vmatpush.xpose.msra.mxu0 0.0
        %947 = vmatpush.xpose.msra.mxu0 0.0
        %948 = vmatpush.xpose.msra.mxu0 0.0
        %949 = vmatpush.xpose.msra.mxu0 0.0
        %950 = vmatpush.xpose.msra.mxu0 0.0
        %951 = vmatpush.xpose.msra.mxu0 0.0
        %952 = vmatpush.xpose.msra.mxu0 0.0
        %953 = vmatpush.xpose.msra.mxu0 0.0
        %954 = vmatpush.xpose.msra.mxu0 0.0
        %955 = vmatpush.xpose.msra.mxu0 0.0
        %956 = vmatpush.xpose.msra.mxu0 0.0
        %957 = vmatpush.xpose.msra.mxu0 %v940
        %958 = vmatmul.f32.gmra.mxu0 %v937
        %v959 = vpop.f32.mrf.mxu0
        %v960 = vadd.f32 0.0, %v959
        %961 = vdwg.mxu0
        %v962 = vadd.f32 %v941, %v960
        %963 = vst.msk [vmem:[#allocation2] sm:$0x3] %vm304, %v962
        %s964 = scalar_lea.vmem %s245, 30
        %v965 = vld [vmem:[%s964] sm:$0x3]
        %967 = vset.pattern.permute.xlu0 0
        %968 = vperm.xlu0 %967, %v965
        %v969 = vpop.permute.xlu0 %968
        %v971 = vmul.f32 %v969, %v259
        %v972 = vadd.f32 %v971, 1e-05
        %v973 = vrsqrt.pop %v972
        %v974 = vmul.f32 %v973, %v972
        %v975 = vmul.f32 %v974, %v973
        %v976 = vmul.f32 0.5, %v975
        %v977 = vsub.f32 1.5, %v976
        %v978 = vmul.f32 %v973, %v977
        %v979 = vmul.f32 %v972, %v978
        %vm980 = vcmp.eq.f32.partialorder %v972, inf
        %v981 = vsel %vm980, %v972, %v979
        %vm982 = vcmp.eq.f32.partialorder %v972, 0.0
        %v983 = vand.u32 %v972, 2147483648
        %v984 = vsel %vm982, %v983, %v981
        %s985 = scalar_lea.vmem %s251, 60
        %v986 = vld [vmem:[%s985] sm:$0xf]
        %v987 = vunpack.c.l.bf16 %v986
        %v988 = vld [vmem:[#allocation2] sm:$0x3]
        %989 = vmatpush.xpose.msra.mxu0 0.0
        %990 = vmatpush.xpose.msra.mxu0 0.0
        %991 = vmatpush.xpose.msra.mxu0 0.0
        %992 = vmatpush.xpose.msra.mxu0 0.0
        %993 = vmatpush.xpose.msra.mxu0 0.0
        %994 = vmatpush.xpose.msra.mxu0 0.0
        %995 = vmatpush.xpose.msra.mxu0 0.0
        %996 = vmatpush.xpose.msra.mxu0 0.0
        %997 = vmatpush.xpose.msra.mxu0 0.0
        %998 = vmatpush.xpose.msra.mxu0 0.0
        %999 = vmatpush.xpose.msra.mxu0 0.0
        %1000 = vmatpush.xpose.msra.mxu0 0.0
        %1001 = vmatpush.xpose.msra.mxu0 0.0
        %1002 = vmatpush.xpose.msra.mxu0 0.0
        %1003 = vmatpush.xpose.msra.mxu0 0.0
        %1004 = vmatpush.xpose.msra.mxu0 %v987
        %1005 = vmatmul.f32.gmra.mxu0 %v984
        %v1006 = vpop.f32.mrf.mxu0
        %v1007 = vadd.f32 0.0, %v1006
        %1008 = vdwg.mxu0
        %v1009 = vadd.f32 %v988, %v1007
        %1010 = vst.msk [vmem:[#allocation2] sm:$0x3] %vm304, %v1009
        %s1011 = scalar_lea.vmem %s245, 32
        %v1012 = vld [vmem:[%s1011] sm:$0x3]
        %1014 = vset.pattern.permute.xlu0 0
        %1015 = vperm.xlu0 %1014, %v1012
        %v1016 = vpop.permute.xlu0 %1015
        %v1018 = vmul.f32 %v1016, %v259
        %v1019 = vadd.f32 %v1018, 1e-05
        %v1020 = vrsqrt.pop %v1019
        %v1021 = vmul.f32 %v1020, %v1019
        %v1022 = vmul.f32 %v1021, %v1020
        %v1023 = vmul.f32 0.5, %v1022
        %v1024 = vsub.f32 1.5, %v1023
        %v1025 = vmul.f32 %v1020, %v1024
        %v1026 = vmul.f32 %v1019, %v1025
        %vm1027 = vcmp.eq.f32.partialorder %v1019, inf
        %v1028 = vsel %vm1027, %v1019, %v1026
        %vm1029 = vcmp.eq.f32.partialorder %v1019, 0.0
        %v1030 = vand.u32 %v1019, 2147483648
        %v1031 = vsel %vm1029, %v1030, %v1028
        %s1032 = scalar_lea.vmem %s251, 64
        %v1033 = vld [vmem:[%s1032] sm:$0xf]
        %v1034 = vunpack.c.l.bf16 %v1033
        %v1035 = vld [vmem:[#allocation2] sm:$0x3]
        %1036 = vmatpush.xpose.msra.mxu0 0.0
        %1037 = vmatpush.xpose.msra.mxu0 0.0
        %1038 = vmatpush.xpose.msra.mxu0 0.0
        %1039 = vmatpush.xpose.msra.mxu0 0.0
        %1040 = vmatpush.xpose.msra.mxu0 0.0
        %1041 = vmatpush.xpose.msra.mxu0 0.0
        %1042 = vmatpush.xpose.msra.mxu0 0.0
        %1043 = vmatpush.xpose.msra.mxu0 0.0
        %1044 = vmatpush.xpose.msra.mxu0 0.0
        %1045 = vmatpush.xpose.msra.mxu0 0.0
        %1046 = vmatpush.xpose.msra.mxu0 0.0
        %1047 = vmatpush.xpose.msra.mxu0 0.0
        %1048 = vmatpush.xpose.msra.mxu0 0.0
        %1049 = vmatpush.xpose.msra.mxu0 0.0
        %1050 = vmatpush.xpose.msra.mxu0 0.0
        %1051 = vmatpush.xpose.msra.mxu0 %v1034
        %1052 = vmatmul.f32.gmra.mxu0 %v1031
        %v1053 = vpop.f32.mrf.mxu0
        %v1054 = vadd.f32 0.0, %v1053
        %1055 = vdwg.mxu0
        %v1056 = vadd.f32 %v1035, %v1054
        %1057 = vst.msk [vmem:[#allocation2] sm:$0x3] %vm304, %v1056
        %s1058 = scalar_lea.vmem %s245, 34
        %v1059 = vld [vmem:[%s1058] sm:$0x3]
        %1061 = vset.pattern.permute.xlu0 0
        %1062 = vperm.xlu0 %1061, %v1059
        %v1063 = vpop.permute.xlu0 %1062
        %v1065 = vmul.f32 %v1063, %v259
        %v1066 = vadd.f32 %v1065, 1e-05
        %v1067 = vrsqrt.pop %v1066
        %v1068 = vmul.f32 %v1067, %v1066
        %v1069 = vmul.f32 %v1068, %v1067
        %v1070 = vmul.f32 0.5, %v1069
        %v1071 = vsub.f32 1.5, %v1070
        %v1072 = vmul.f32 %v1067, %v1071
        %v1073 = vmul.f32 %v1066, %v1072
        %vm1074 = vcmp.eq.f32.partialorder %v1066, inf
        %v1075 = vsel %vm1074, %v1066, %v1073
        %vm1076 = vcmp.eq.f32.partialorder %v1066, 0.0
        %v1077 = vand.u32 %v1066, 2147483648
        %v1078 = vsel %vm1076, %v1077, %v1075
        %s1079 = scalar_lea.vmem %s251, 68
        %v1080 = vld [vmem:[%s1079] sm:$0xf]
        %v1081 = vunpack.c.l.bf16 %v1080
        %v1082 = vld [vmem:[#allocation2] sm:$0x3]
        %1083 = vmatpush.xpose.msra.mxu0 0.0
        %1084 = vmatpush.xpose.msra.mxu0 0.0
        %1085 = vmatpush.xpose.msra.mxu0 0.0
        %1086 = vmatpush.xpose.msra.mxu0 0.0
        %1087 = vmatpush.xpose.msra.mxu0 0.0
        %1088 = vmatpush.xpose.msra.mxu0 0.0
        %1089 = vmatpush.xpose.msra.mxu0 0.0
        %1090 = vmatpush.xpose.msra.mxu0 0.0
        %1091 = vmatpush.xpose.msra.mxu0 0.0
        %1092 = vmatpush.xpose.msra.mxu0 0.0
        %1093 = vmatpush.xpose.msra.mxu0 0.0
        %1094 = vmatpush.xpose.msra.mxu0 0.0
        %1095 = vmatpush.xpose.msra.mxu0 0.0
        %1096 = vmatpush.xpose.msra.mxu0 0.0
        %1097 = vmatpush.xpose.msra.mxu0 0.0
        %1098 = vmatpush.xpose.msra.mxu0 %v1081
        %1099 = vmatmul.f32.gmra.mxu0 %v1078
        %v1100 = vpop.f32.mrf.mxu0
        %v1101 = vadd.f32 0.0, %v1100
        %1102 = vdwg.mxu0
        %v1103 = vadd.f32 %v1082, %v1101
        %1104 = vst.msk [vmem:[#allocation2] sm:$0x3] %vm304, %v1103
        %s1105 = scalar_lea.vmem %s245, 36
        %v1106 = vld [vmem:[%s1105] sm:$0x3]
        %1108 = vset.pattern.permute.xlu0 0
        %1109 = vperm.xlu0 %1108, %v1106
        %v1110 = vpop.permute.xlu0 %1109
        %v1112 = vmul.f32 %v1110, %v259
        %v1113 = vadd.f32 %v1112, 1e-05
        %v1114 = vrsqrt.pop %v1113
        %v1115 = vmul.f32 %v1114, %v1113
        %v1116 = vmul.f32 %v1115, %v1114
        %v1117 = vmul.f32 0.5, %v1116
        %v1118 = vsub.f32 1.5, %v1117
        %v1119 = vmul.f32 %v1114, %v1118
        %v1120 = vmul.f32 %v1113, %v1119
        %vm1121 = vcmp.eq.f32.partialorder %v1113, inf
        %v1122 = vsel %vm1121, %v1113, %v1120
        %vm1123 = vcmp.eq.f32.partialorder %v1113, 0.0
        %v1124 = vand.u32 %v1113, 2147483648
        %v1125 = vsel %vm1123, %v1124, %v1122
        %s1126 = scalar_lea.vmem %s251, 72
        %v1127 = vld [vmem:[%s1126] sm:$0xf]
        %v1128 = vunpack.c.l.bf16 %v1127
        %v1129 = vld [vmem:[#allocation2] sm:$0x3]
        %1130 = vmatpush.xpose.msra.mxu0 0.0
        %1131 = vmatpush.xpose.msra.mxu0 0.0
        %1132 = vmatpush.xpose.msra.mxu0 0.0
        %1133 = vmatpush.xpose.msra.mxu0 0.0
        %1134 = vmatpush.xpose.msra.mxu0 0.0
        %1135 = vmatpush.xpose.msra.mxu0 0.0
        %1136 = vmatpush.xpose.msra.mxu0 0.0
        %1137 = vmatpush.xpose.msra.mxu0 0.0
        %1138 = vmatpush.xpose.msra.mxu0 0.0
        %1139 = vmatpush.xpose.msra.mxu0 0.0
        %1140 = vmatpush.xpose.msra.mxu0 0.0
        %1141 = vmatpush.xpose.msra.mxu0 0.0
        %1142 = vmatpush.xpose.msra.mxu0 0.0
        %1143 = vmatpush.xpose.msra.mxu0 0.0
        %1144 = vmatpush.xpose.msra.mxu0 0.0
        %1145 = vmatpush.xpose.msra.mxu0 %v1128
        %1146 = vmatmul.f32.gmra.mxu0 %v1125
        %v1147 = vpop.f32.mrf.mxu0
        %v1148 = vadd.f32 0.0, %v1147
        %1149 = vdwg.mxu0
        %v1150 = vadd.f32 %v1129, %v1148
        %1151 = vst.msk [vmem:[#allocation2] sm:$0x3] %vm304, %v1150
        %s1152 = scalar_lea.vmem %s245, 38
        %v1153 = vld [vmem:[%s1152] sm:$0x3]
        %1155 = vset.pattern.permute.xlu0 0
        %1156 = vperm.xlu0 %1155, %v1153
        %v1157 = vpop.permute.xlu0 %1156
        %v1159 = vmul.f32 %v1157, %v259
        %v1160 = vadd.f32 %v1159, 1e-05
        %v1161 = vrsqrt.pop %v1160
        %v1162 = vmul.f32 %v1161, %v1160
        %v1163 = vmul.f32 %v1162, %v1161
        %v1164 = vmul.f32 0.5, %v1163
        %v1165 = vsub.f32 1.5, %v1164
        %v1166 = vmul.f32 %v1161, %v1165
        %v1167 = vmul.f32 %v1160, %v1166
        %vm1168 = vcmp.eq.f32.partialorder %v1160, inf
        %v1169 = vsel %vm1168, %v1160, %v1167
        %vm1170 = vcmp.eq.f32.partialorder %v1160, 0.0
        %v1171 = vand.u32 %v1160, 2147483648
        %v1172 = vsel %vm1170, %v1171, %v1169
        %s1173 = scalar_lea.vmem %s251, 76
        %v1174 = vld [vmem:[%s1173] sm:$0xf]
        %v1175 = vunpack.c.l.bf16 %v1174
        %v1176 = vld [vmem:[#allocation2] sm:$0x3]
        %1177 = vmatpush.xpose.msra.mxu0 0.0
        %1178 = vmatpush.xpose.msra.mxu0 0.0
        %1179 = vmatpush.xpose.msra.mxu0 0.0
        %1180 = vmatpush.xpose.msra.mxu0 0.0
        %1181 = vmatpush.xpose.msra.mxu0 0.0
        %1182 = vmatpush.xpose.msra.mxu0 0.0
        %1183 = vmatpush.xpose.msra.mxu0 0.0
        %1184 = vmatpush.xpose.msra.mxu0 0.0
        %1185 = vmatpush.xpose.msra.mxu0 0.0
        %1186 = vmatpush.xpose.msra.mxu0 0.0
        %1187 = vmatpush.xpose.msra.mxu0 0.0
        %1188 = vmatpush.xpose.msra.mxu0 0.0
        %1189 = vmatpush.xpose.msra.mxu0 0.0
        %1190 = vmatpush.xpose.msra.mxu0 0.0
        %1191 = vmatpush.xpose.msra.mxu0 0.0
        %1192 = vmatpush.xpose.msra.mxu0 %v1175
        %1193 = vmatmul.f32.gmra.mxu0 %v1172
        %v1194 = vpop.f32.mrf.mxu0
        %v1195 = vadd.f32 0.0, %v1194
        %1196 = vdwg.mxu0
        %v1197 = vadd.f32 %v1176, %v1195
        %1198 = vst.msk [vmem:[#allocation2] sm:$0x3] %vm304, %v1197
        %s1199 = scalar_lea.vmem %s245, 40
        %v1200 = vld [vmem:[%s1199] sm:$0x3]
        %1202 = vset.pattern.permute.xlu0 0
        %1203 = vperm.xlu0 %1202, %v1200
        %v1204 = vpop.permute.xlu0 %1203
        %v1206 = vmul.f32 %v1204, %v259
        %v1207 = vadd.f32 %v1206, 1e-05
        %v1208 = vrsqrt.pop %v1207
        %v1209 = vmul.f32 %v1208, %v1207
        %v1210 = vmul.f32 %v1209, %v1208
        %v1211 = vmul.f32 0.5, %v1210
        %v1212 = vsub.f32 1.5, %v1211
        %v1213 = vmul.f32 %v1208, %v1212
        %v1214 = vmul.f32 %v1207, %v1213
        %vm1215 = vcmp.eq.f32.partialorder %v1207, inf
        %v1216 = vsel %vm1215, %v1207, %v1214
        %vm1217 = vcmp.eq.f32.partialorder %v1207, 0.0
        %v1218 = vand.u32 %v1207, 2147483648
        %v1219 = vsel %vm1217, %v1218, %v1216
        %s1220 = scalar_lea.vmem %s251, 80
        %v1221 = vld [vmem:[%s1220] sm:$0xf]
        %v1222 = vunpack.c.l.bf16 %v1221
        %v1223 = vld [vmem:[#allocation2] sm:$0x3]
        %1224 = vmatpush.xpose.msra.mxu0 0.0
        %1225 = vmatpush.xpose.msra.mxu0 0.0
        %1226 = vmatpush.xpose.msra.mxu0 0.0
        %1227 = vmatpush.xpose.msra.mxu0 0.0
        %1228 = vmatpush.xpose.msra.mxu0 0.0
        %1229 = vmatpush.xpose.msra.mxu0 0.0
        %1230 = vmatpush.xpose.msra.mxu0 0.0
        %1231 = vmatpush.xpose.msra.mxu0 0.0
        %1232 = vmatpush.xpose.msra.mxu0 0.0
        %1233 = vmatpush.xpose.msra.mxu0 0.0
        %1234 = vmatpush.xpose.msra.mxu0 0.0
        %1235 = vmatpush.xpose.msra.mxu0 0.0
        %1236 = vmatpush.xpose.msra.mxu0 0.0
        %1237 = vmatpush.xpose.msra.mxu0 0.0
        %1238 = vmatpush.xpose.msra.mxu0 0.0
        %1239 = vmatpush.xpose.msra.mxu0 %v1222
        %1240 = vmatmul.f32.gmra.mxu0 %v1219
        %v1241 = vpop.f32.mrf.mxu0
        %v1242 = vadd.f32 0.0, %v1241
        %1243 = vdwg.mxu0
        %v1244 = vadd.f32 %v1223, %v1242
        %1245 = vst.msk [vmem:[#allocation2] sm:$0x3] %vm304, %v1244
        %s1246 = scalar_lea.vmem %s245, 42
        %v1247 = vld [vmem:[%s1246] sm:$0x3]
        %1249 = vset.pattern.permute.xlu0 0
        %1250 = vperm.xlu0 %1249, %v1247
        %v1251 = vpop.permute.xlu0 %1250
        %v1253 = vmul.f32 %v1251, %v259
        %v1254 = vadd.f32 %v1253, 1e-05
        %v1255 = vrsqrt.pop %v1254
        %v1256 = vmul.f32 %v1255, %v1254
        %v1257 = vmul.f32 %v1256, %v1255
        %v1258 = vmul.f32 0.5, %v1257
        %v1259 = vsub.f32 1.5, %v1258
        %v1260 = vmul.f32 %v1255, %v1259
        %v1261 = vmul.f32 %v1254, %v1260
        %vm1262 = vcmp.eq.f32.partialorder %v1254, inf
        %v1263 = vsel %vm1262, %v1254, %v1261
        %vm1264 = vcmp.eq.f32.partialorder %v1254, 0.0
        %v1265 = vand.u32 %v1254, 2147483648
        %v1266 = vsel %vm1264, %v1265, %v1263
        %s1267 = scalar_lea.vmem %s251, 84
        %v1268 = vld [vmem:[%s1267] sm:$0xf]
        %v1269 = vunpack.c.l.bf16 %v1268
        %v1270 = vld [vmem:[#allocation2] sm:$0x3]
        %1271 = vmatpush.xpose.msra.mxu0 0.0
        %1272 = vmatpush.xpose.msra.mxu0 0.0
        %1273 = vmatpush.xpose.msra.mxu0 0.0
        %1274 = vmatpush.xpose.msra.mxu0 0.0
        %1275 = vmatpush.xpose.msra.mxu0 0.0
        %1276 = vmatpush.xpose.msra.mxu0 0.0
        %1277 = vmatpush.xpose.msra.mxu0 0.0
        %1278 = vmatpush.xpose.msra.mxu0 0.0
        %1279 = vmatpush.xpose.msra.mxu0 0.0
        %1280 = vmatpush.xpose.msra.mxu0 0.0
        %1281 = vmatpush.xpose.msra.mxu0 0.0
        %1282 = vmatpush.xpose.msra.mxu0 0.0
        %1283 = vmatpush.xpose.msra.mxu0 0.0
        %1284 = vmatpush.xpose.msra.mxu0 0.0
        %1285 = vmatpush.xpose.msra.mxu0 0.0
        %1286 = vmatpush.xpose.msra.mxu0 %v1269
        %1287 = vmatmul.f32.gmra.mxu0 %v1266
        %v1288 = vpop.f32.mrf.mxu0
        %v1289 = vadd.f32 0.0, %v1288
        %1290 = vdwg.mxu0
        %v1291 = vadd.f32 %v1270, %v1289
        %1292 = vst.msk [vmem:[#allocation2] sm:$0x3] %vm304, %v1291
        %s1293 = scalar_lea.vmem %s245, 44
        %v1294 = vld [vmem:[%s1293] sm:$0x3]
        %1296 = vset.pattern.permute.xlu0 0
        %1297 = vperm.xlu0 %1296, %v1294
        %v1298 = vpop.permute.xlu0 %1297
        %v1300 = vmul.f32 %v1298, %v259
        %v1301 = vadd.f32 %v1300, 1e-05
        %v1302 = vrsqrt.pop %v1301
        %v1303 = vmul.f32 %v1302, %v1301
        %v1304 = vmul.f32 %v1303, %v1302
        %v1305 = vmul.f32 0.5, %v1304
        %v1306 = vsub.f32 1.5, %v1305
        %v1307 = vmul.f32 %v1302, %v1306
        %v1308 = vmul.f32 %v1301, %v1307
        %vm1309 = vcmp.eq.f32.partialorder %v1301, inf
        %v1310 = vsel %vm1309, %v1301, %v1308
        %vm1311 = vcmp.eq.f32.partialorder %v1301, 0.0
        %v1312 = vand.u32 %v1301, 2147483648
        %v1313 = vsel %vm1311, %v1312, %v1310
        %s1314 = scalar_lea.vmem %s251, 88
        %v1315 = vld [vmem:[%s1314] sm:$0xf]
        %v1316 = vunpack.c.l.bf16 %v1315
        %v1317 = vld [vmem:[#allocation2] sm:$0x3]
        %1318 = vmatpush.xpose.msra.mxu0 0.0
        %1319 = vmatpush.xpose.msra.mxu0 0.0
        %1320 = vmatpush.xpose.msra.mxu0 0.0
        %1321 = vmatpush.xpose.msra.mxu0 0.0
        %1322 = vmatpush.xpose.msra.mxu0 0.0
        %1323 = vmatpush.xpose.msra.mxu0 0.0
        %1324 = vmatpush.xpose.msra.mxu0 0.0
        %1325 = vmatpush.xpose.msra.mxu0 0.0
        %1326 = vmatpush.xpose.msra.mxu0 0.0
        %1327 = vmatpush.xpose.msra.mxu0 0.0
        %1328 = vmatpush.xpose.msra.mxu0 0.0
        %1329 = vmatpush.xpose.msra.mxu0 0.0
        %1330 = vmatpush.xpose.msra.mxu0 0.0
        %1331 = vmatpush.xpose.msra.mxu0 0.0
        %1332 = vmatpush.xpose.msra.mxu0 0.0
        %1333 = vmatpush.xpose.msra.mxu0 %v1316
        %1334 = vmatmul.f32.gmra.mxu0 %v1313
        %v1335 = vpop.f32.mrf.mxu0
        %v1336 = vadd.f32 0.0, %v1335
        %1337 = vdwg.mxu0
        %v1338 = vadd.f32 %v1317, %v1336
        %1339 = vst.msk [vmem:[#allocation2] sm:$0x3] %vm304, %v1338
        %s1340 = scalar_lea.vmem %s245, 46
        %v1341 = vld [vmem:[%s1340] sm:$0x3]
        %1343 = vset.pattern.permute.xlu0 0
        %1344 = vperm.xlu0 %1343, %v1341
        %v1345 = vpop.permute.xlu0 %1344
        %v1347 = vmul.f32 %v1345, %v259
        %v1348 = vadd.f32 %v1347, 1e-05
        %v1349 = vrsqrt.pop %v1348
        %v1350 = vmul.f32 %v1349, %v1348
        %v1351 = vmul.f32 %v1350, %v1349
        %v1352 = vmul.f32 0.5, %v1351
        %v1353 = vsub.f32 1.5, %v1352
        %v1354 = vmul.f32 %v1349, %v1353
        %v1355 = vmul.f32 %v1348, %v1354
        %vm1356 = vcmp.eq.f32.partialorder %v1348, inf
        %v1357 = vsel %vm1356, %v1348, %v1355
        %vm1358 = vcmp.eq.f32.partialorder %v1348, 0.0
        %v1359 = vand.u32 %v1348, 2147483648
        %v1360 = vsel %vm1358, %v1359, %v1357
        %s1361 = scalar_lea.vmem %s251, 92
        %v1362 = vld [vmem:[%s1361] sm:$0xf]
        %v1363 = vunpack.c.l.bf16 %v1362
        %v1364 = vld [vmem:[#allocation2] sm:$0x3]
        %1365 = vmatpush.xpose.msra.mxu0 0.0
        %1366 = vmatpush.xpose.msra.mxu0 0.0
        %1367 = vmatpush.xpose.msra.mxu0 0.0
        %1368 = vmatpush.xpose.msra.mxu0 0.0
        %1369 = vmatpush.xpose.msra.mxu0 0.0
        %1370 = vmatpush.xpose.msra.mxu0 0.0
        %1371 = vmatpush.xpose.msra.mxu0 0.0
        %1372 = vmatpush.xpose.msra.mxu0 0.0
        %1373 = vmatpush.xpose.msra.mxu0 0.0
        %1374 = vmatpush.xpose.msra.mxu0 0.0
        %1375 = vmatpush.xpose.msra.mxu0 0.0
        %1376 = vmatpush.xpose.msra.mxu0 0.0
        %1377 = vmatpush.xpose.msra.mxu0 0.0
        %1378 = vmatpush.xpose.msra.mxu0 0.0
        %1379 = vmatpush.xpose.msra.mxu0 0.0
        %1380 = vmatpush.xpose.msra.mxu0 %v1363
        %1381 = vmatmul.f32.gmra.mxu0 %v1360
        %v1382 = vpop.f32.mrf.mxu0
        %v1383 = vadd.f32 0.0, %v1382
        %1384 = vdwg.mxu0
        %v1385 = vadd.f32 %v1364, %v1383
        %1386 = vst.msk [vmem:[#allocation2] sm:$0x3] %vm304, %v1385
        %s1387 = scalar_lea.vmem %s245, 48
        %v1388 = vld [vmem:[%s1387] sm:$0x3]
        %1390 = vset.pattern.permute.xlu0 0
        %1391 = vperm.xlu0 %1390, %v1388
        %v1392 = vpop.permute.xlu0 %1391
        %v1394 = vmul.f32 %v1392, %v259
        %v1395 = vadd.f32 %v1394, 1e-05
        %v1396 = vrsqrt.pop %v1395
        %v1397 = vmul.f32 %v1396, %v1395
        %v1398 = vmul.f32 %v1397, %v1396
        %v1399 = vmul.f32 0.5, %v1398
        %v1400 = vsub.f32 1.5, %v1399
        %v1401 = vmul.f32 %v1396, %v1400
        %v1402 = vmul.f32 %v1395, %v1401
        %vm1403 = vcmp.eq.f32.partialorder %v1395, inf
        %v1404 = vsel %vm1403, %v1395, %v1402
        %vm1405 = vcmp.eq.f32.partialorder %v1395, 0.0
        %v1406 = vand.u32 %v1395, 2147483648
        %v1407 = vsel %vm1405, %v1406, %v1404
        %s1408 = scalar_lea.vmem %s251, 96
        %v1409 = vld [vmem:[%s1408] sm:$0xf]
        %v1410 = vunpack.c.l.bf16 %v1409
        %v1411 = vld [vmem:[#allocation2] sm:$0x3]
        %1412 = vmatpush.xpose.msra.mxu0 0.0
        %1413 = vmatpush.xpose.msra.mxu0 0.0
        %1414 = vmatpush.xpose.msra.mxu0 0.0
        %1415 = vmatpush.xpose.msra.mxu0 0.0
        %1416 = vmatpush.xpose.msra.mxu0 0.0
        %1417 = vmatpush.xpose.msra.mxu0 0.0
        %1418 = vmatpush.xpose.msra.mxu0 0.0
        %1419 = vmatpush.xpose.msra.mxu0 0.0
        %1420 = vmatpush.xpose.msra.mxu0 0.0
        %1421 = vmatpush.xpose.msra.mxu0 0.0
        %1422 = vmatpush.xpose.msra.mxu0 0.0
        %1423 = vmatpush.xpose.msra.mxu0 0.0
        %1424 = vmatpush.xpose.msra.mxu0 0.0
        %1425 = vmatpush.xpose.msra.mxu0 0.0
        %1426 = vmatpush.xpose.msra.mxu0 0.0
        %1427 = vmatpush.xpose.msra.mxu0 %v1410
        %1428 = vmatmul.f32.gmra.mxu0 %v1407
        %v1429 = vpop.f32.mrf.mxu0
        %v1430 = vadd.f32 0.0, %v1429
        %1431 = vdwg.mxu0
        %v1432 = vadd.f32 %v1411, %v1430
        %1433 = vst.msk [vmem:[#allocation2] sm:$0x3] %vm304, %v1432
        %s1434 = scalar_lea.vmem %s245, 50
        %v1435 = vld [vmem:[%s1434] sm:$0x3]
        %1437 = vset.pattern.permute.xlu0 0
        %1438 = vperm.xlu0 %1437, %v1435
        %v1439 = vpop.permute.xlu0 %1438
        %v1441 = vmul.f32 %v1439, %v259
        %v1442 = vadd.f32 %v1441, 1e-05
        %v1443 = vrsqrt.pop %v1442
        %v1444 = vmul.f32 %v1443, %v1442
        %v1445 = vmul.f32 %v1444, %v1443
        %v1446 = vmul.f32 0.5, %v1445
        %v1447 = vsub.f32 1.5, %v1446
        %v1448 = vmul.f32 %v1443, %v1447
        %v1449 = vmul.f32 %v1442, %v1448
        %vm1450 = vcmp.eq.f32.partialorder %v1442, inf
        %v1451 = vsel %vm1450, %v1442, %v1449
        %vm1452 = vcmp.eq.f32.partialorder %v1442, 0.0
        %v1453 = vand.u32 %v1442, 2147483648
        %v1454 = vsel %vm1452, %v1453, %v1451
        %s1455 = scalar_lea.vmem %s251, 100
        %v1456 = vld [vmem:[%s1455] sm:$0xf]
        %v1457 = vunpack.c.l.bf16 %v1456
        %v1458 = vld [vmem:[#allocation2] sm:$0x3]
        %1459 = vmatpush.xpose.msra.mxu0 0.0
        %1460 = vmatpush.xpose.msra.mxu0 0.0
        %1461 = vmatpush.xpose.msra.mxu0 0.0
        %1462 = vmatpush.xpose.msra.mxu0 0.0
        %1463 = vmatpush.xpose.msra.mxu0 0.0
        %1464 = vmatpush.xpose.msra.mxu0 0.0
        %1465 = vmatpush.xpose.msra.mxu0 0.0
        %1466 = vmatpush.xpose.msra.mxu0 0.0
        %1467 = vmatpush.xpose.msra.mxu0 0.0
        %1468 = vmatpush.xpose.msra.mxu0 0.0
        %1469 = vmatpush.xpose.msra.mxu0 0.0
        %1470 = vmatpush.xpose.msra.mxu0 0.0
        %1471 = vmatpush.xpose.msra.mxu0 0.0
        %1472 = vmatpush.xpose.msra.mxu0 0.0
        %1473 = vmatpush.xpose.msra.mxu0 0.0
        %1474 = vmatpush.xpose.msra.mxu0 %v1457
        %1475 = vmatmul.f32.gmra.mxu0 %v1454
        %v1476 = vpop.f32.mrf.mxu0
        %v1477 = vadd.f32 0.0, %v1476
        %1478 = vdwg.mxu0
        %v1479 = vadd.f32 %v1458, %v1477
        %1480 = vst.msk [vmem:[#allocation2] sm:$0x3] %vm304, %v1479
        %s1481 = scalar_lea.vmem %s245, 52
        %v1482 = vld [vmem:[%s1481] sm:$0x3]
        %1484 = vset.pattern.permute.xlu0 0
        %1485 = vperm.xlu0 %1484, %v1482
        %v1486 = vpop.permute.xlu0 %1485
        %v1488 = vmul.f32 %v1486, %v259
        %v1489 = vadd.f32 %v1488, 1e-05
        %v1490 = vrsqrt.pop %v1489
        %v1491 = vmul.f32 %v1490, %v1489
        %v1492 = vmul.f32 %v1491, %v1490
        %v1493 = vmul.f32 0.5, %v1492
        %v1494 = vsub.f32 1.5, %v1493
        %v1495 = vmul.f32 %v1490, %v1494
        %v1496 = vmul.f32 %v1489, %v1495
        %vm1497 = vcmp.eq.f32.partialorder %v1489, inf
        %v1498 = vsel %vm1497, %v1489, %v1496
        %vm1499 = vcmp.eq.f32.partialorder %v1489, 0.0
        %v1500 = vand.u32 %v1489, 2147483648
        %v1501 = vsel %vm1499, %v1500, %v1498
        %s1502 = scalar_lea.vmem %s251, 104
        %v1503 = vld [vmem:[%s1502] sm:$0xf]
        %v1504 = vunpack.c.l.bf16 %v1503
        %v1505 = vld [vmem:[#allocation2] sm:$0x3]
        %1506 = vmatpush.xpose.msra.mxu0 0.0
        %1507 = vmatpush.xpose.msra.mxu0 0.0
        %1508 = vmatpush.xpose.msra.mxu0 0.0
        %1509 = vmatpush.xpose.msra.mxu0 0.0
        %1510 = vmatpush.xpose.msra.mxu0 0.0
        %1511 = vmatpush.xpose.msra.mxu0 0.0
        %1512 = vmatpush.xpose.msra.mxu0 0.0
        %1513 = vmatpush.xpose.msra.mxu0 0.0
        %1514 = vmatpush.xpose.msra.mxu0 0.0
        %1515 = vmatpush.xpose.msra.mxu0 0.0
        %1516 = vmatpush.xpose.msra.mxu0 0.0
        %1517 = vmatpush.xpose.msra.mxu0 0.0
        %1518 = vmatpush.xpose.msra.mxu0 0.0
        %1519 = vmatpush.xpose.msra.mxu0 0.0
        %1520 = vmatpush.xpose.msra.mxu0 0.0
        %1521 = vmatpush.xpose.msra.mxu0 %v1504
        %1522 = vmatmul.f32.gmra.mxu0 %v1501
        %v1523 = vpop.f32.mrf.mxu0
        %v1524 = vadd.f32 0.0, %v1523
        %1525 = vdwg.mxu0
        %v1526 = vadd.f32 %v1505, %v1524
        %1527 = vst.msk [vmem:[#allocation2] sm:$0x3] %vm304, %v1526
        %s1528 = scalar_lea.vmem %s245, 54
        %v1529 = vld [vmem:[%s1528] sm:$0x3]
        %1531 = vset.pattern.permute.xlu0 0
        %1532 = vperm.xlu0 %1531, %v1529
        %v1533 = vpop.permute.xlu0 %1532
        %v1535 = vmul.f32 %v1533, %v259
        %v1536 = vadd.f32 %v1535, 1e-05
        %v1537 = vrsqrt.pop %v1536
        %v1538 = vmul.f32 %v1537, %v1536
        %v1539 = vmul.f32 %v1538, %v1537
        %v1540 = vmul.f32 0.5, %v1539
        %v1541 = vsub.f32 1.5, %v1540
        %v1542 = vmul.f32 %v1537, %v1541
        %v1543 = vmul.f32 %v1536, %v1542
        %vm1544 = vcmp.eq.f32.partialorder %v1536, inf
        %v1545 = vsel %vm1544, %v1536, %v1543
        %vm1546 = vcmp.eq.f32.partialorder %v1536, 0.0
        %v1547 = vand.u32 %v1536, 2147483648
        %v1548 = vsel %vm1546, %v1547, %v1545
        %s1549 = scalar_lea.vmem %s251, 108
        %v1550 = vld [vmem:[%s1549] sm:$0xf]
        %v1551 = vunpack.c.l.bf16 %v1550
        %v1552 = vld [vmem:[#allocation2] sm:$0x3]
        %1553 = vmatpush.xpose.msra.mxu0 0.0
        %1554 = vmatpush.xpose.msra.mxu0 0.0
        %1555 = vmatpush.xpose.msra.mxu0 0.0
        %1556 = vmatpush.xpose.msra.mxu0 0.0
        %1557 = vmatpush.xpose.msra.mxu0 0.0
        %1558 = vmatpush.xpose.msra.mxu0 0.0
        %1559 = vmatpush.xpose.msra.mxu0 0.0
        %1560 = vmatpush.xpose.msra.mxu0 0.0
        %1561 = vmatpush.xpose.msra.mxu0 0.0
        %1562 = vmatpush.xpose.msra.mxu0 0.0
        %1563 = vmatpush.xpose.msra.mxu0 0.0
        %1564 = vmatpush.xpose.msra.mxu0 0.0
        %1565 = vmatpush.xpose.msra.mxu0 0.0
        %1566 = vmatpush.xpose.msra.mxu0 0.0
        %1567 = vmatpush.xpose.msra.mxu0 0.0
        %1568 = vmatpush.xpose.msra.mxu0 %v1551
        %1569 = vmatmul.f32.gmra.mxu0 %v1548
        %v1570 = vpop.f32.mrf.mxu0
        %v1571 = vadd.f32 0.0, %v1570
        %1572 = vdwg.mxu0
        %v1573 = vadd.f32 %v1552, %v1571
        %1574 = vst.msk [vmem:[#allocation2] sm:$0x3] %vm304, %v1573
        %s1575 = scalar_lea.vmem %s245, 56
        %v1576 = vld [vmem:[%s1575] sm:$0x3]
        %1578 = vset.pattern.permute.xlu0 0
        %1579 = vperm.xlu0 %1578, %v1576
        %v1580 = vpop.permute.xlu0 %1579
        %v1582 = vmul.f32 %v1580, %v259
        %v1583 = vadd.f32 %v1582, 1e-05
        %v1584 = vrsqrt.pop %v1583
        %v1585 = vmul.f32 %v1584, %v1583
        %v1586 = vmul.f32 %v1585, %v1584
        %v1587 = vmul.f32 0.5, %v1586
        %v1588 = vsub.f32 1.5, %v1587
        %v1589 = vmul.f32 %v1584, %v1588
        %v1590 = vmul.f32 %v1583, %v1589
        %vm1591 = vcmp.eq.f32.partialorder %v1583, inf
        %v1592 = vsel %vm1591, %v1583, %v1590
        %vm1593 = vcmp.eq.f32.partialorder %v1583, 0.0
        %v1594 = vand.u32 %v1583, 2147483648
        %v1595 = vsel %vm1593, %v1594, %v1592
        %s1596 = scalar_lea.vmem %s251, 112
        %v1597 = vld [vmem:[%s1596] sm:$0xf]
        %v1598 = vunpack.c.l.bf16 %v1597
        %v1599 = vld [vmem:[#allocation2] sm:$0x3]
        %1600 = vmatpush.xpose.msra.mxu0 0.0
        %1601 = vmatpush.xpose.msra.mxu0 0.0
        %1602 = vmatpush.xpose.msra.mxu0 0.0
        %1603 = vmatpush.xpose.msra.mxu0 0.0
        %1604 = vmatpush.xpose.msra.mxu0 0.0
        %1605 = vmatpush.xpose.msra.mxu0 0.0
        %1606 = vmatpush.xpose.msra.mxu0 0.0
        %1607 = vmatpush.xpose.msra.mxu0 0.0
        %1608 = vmatpush.xpose.msra.mxu0 0.0
        %1609 = vmatpush.xpose.msra.mxu0 0.0
        %1610 = vmatpush.xpose.msra.mxu0 0.0
        %1611 = vmatpush.xpose.msra.mxu0 0.0
        %1612 = vmatpush.xpose.msra.mxu0 0.0
        %1613 = vmatpush.xpose.msra.mxu0 0.0
        %1614 = vmatpush.xpose.msra.mxu0 0.0
        %1615 = vmatpush.xpose.msra.mxu0 %v1598
        %1616 = vmatmul.f32.gmra.mxu0 %v1595
        %v1617 = vpop.f32.mrf.mxu0
        %v1618 = vadd.f32 0.0, %v1617
        %1619 = vdwg.mxu0
        %v1620 = vadd.f32 %v1599, %v1618
        %1621 = vst.msk [vmem:[#allocation2] sm:$0x3] %vm304, %v1620
        %s1622 = scalar_lea.vmem %s245, 58
        %v1623 = vld [vmem:[%s1622] sm:$0x3]
        %1625 = vset.pattern.permute.xlu0 0
        %1626 = vperm.xlu0 %1625, %v1623
        %v1627 = vpop.permute.xlu0 %1626
        %v1629 = vmul.f32 %v1627, %v259
        %v1630 = vadd.f32 %v1629, 1e-05
        %v1631 = vrsqrt.pop %v1630
        %v1632 = vmul.f32 %v1631, %v1630
        %v1633 = vmul.f32 %v1632, %v1631
        %v1634 = vmul.f32 0.5, %v1633
        %v1635 = vsub.f32 1.5, %v1634
        %v1636 = vmul.f32 %v1631, %v1635
        %v1637 = vmul.f32 %v1630, %v1636
        %vm1638 = vcmp.eq.f32.partialorder %v1630, inf
        %v1639 = vsel %vm1638, %v1630, %v1637
        %vm1640 = vcmp.eq.f32.partialorder %v1630, 0.0
        %v1641 = vand.u32 %v1630, 2147483648
        %v1642 = vsel %vm1640, %v1641, %v1639
        %s1643 = scalar_lea.vmem %s251, 116
        %v1644 = vld [vmem:[%s1643] sm:$0xf]
        %v1645 = vunpack.c.l.bf16 %v1644
        %v1646 = vld [vmem:[#allocation2] sm:$0x3]
        %1647 = vmatpush.xpose.msra.mxu0 0.0
        %1648 = vmatpush.xpose.msra.mxu0 0.0
        %1649 = vmatpush.xpose.msra.mxu0 0.0
        %1650 = vmatpush.xpose.msra.mxu0 0.0
        %1651 = vmatpush.xpose.msra.mxu0 0.0
        %1652 = vmatpush.xpose.msra.mxu0 0.0
        %1653 = vmatpush.xpose.msra.mxu0 0.0
        %1654 = vmatpush.xpose.msra.mxu0 0.0
        %1655 = vmatpush.xpose.msra.mxu0 0.0
        %1656 = vmatpush.xpose.msra.mxu0 0.0
        %1657 = vmatpush.xpose.msra.mxu0 0.0
        %1658 = vmatpush.xpose.msra.mxu0 0.0
        %1659 = vmatpush.xpose.msra.mxu0 0.0
        %1660 = vmatpush.xpose.msra.mxu0 0.0
        %1661 = vmatpush.xpose.msra.mxu0 0.0
        %1662 = vmatpush.xpose.msra.mxu0 %v1645
        %1663 = vmatmul.f32.gmra.mxu0 %v1642
        %v1664 = vpop.f32.mrf.mxu0
        %v1665 = vadd.f32 0.0, %v1664
        %1666 = vdwg.mxu0
        %v1667 = vadd.f32 %v1646, %v1665
        %1668 = vst.msk [vmem:[#allocation2] sm:$0x3] %vm304, %v1667
        %s1669 = scalar_lea.vmem %s245, 60
        %v1670 = vld [vmem:[%s1669] sm:$0x3]
        %1672 = vset.pattern.permute.xlu0 0
        %1673 = vperm.xlu0 %1672, %v1670
        %v1674 = vpop.permute.xlu0 %1673
        %v1676 = vmul.f32 %v1674, %v259
        %v1677 = vadd.f32 %v1676, 1e-05
        %v1678 = vrsqrt.pop %v1677
        %v1679 = vmul.f32 %v1678, %v1677
        %v1680 = vmul.f32 %v1679, %v1678
        %v1681 = vmul.f32 0.5, %v1680
        %v1682 = vsub.f32 1.5, %v1681
        %v1683 = vmul.f32 %v1678, %v1682
        %v1684 = vmul.f32 %v1677, %v1683
        %vm1685 = vcmp.eq.f32.partialorder %v1677, inf
        %v1686 = vsel %vm1685, %v1677, %v1684
        %vm1687 = vcmp.eq.f32.partialorder %v1677, 0.0
        %v1688 = vand.u32 %v1677, 2147483648
        %v1689 = vsel %vm1687, %v1688, %v1686
        %s1690 = scalar_lea.vmem %s251, 120
        %v1691 = vld [vmem:[%s1690] sm:$0xf]
        %v1692 = vunpack.c.l.bf16 %v1691
        %v1693 = vld [vmem:[#allocation2] sm:$0x3]
        %1694 = vmatpush.xpose.msra.mxu0 0.0
        %1695 = vmatpush.xpose.msra.mxu0 0.0
        %1696 = vmatpush.xpose.msra.mxu0 0.0
        %1697 = vmatpush.xpose.msra.mxu0 0.0
        %1698 = vmatpush.xpose.msra.mxu0 0.0
        %1699 = vmatpush.xpose.msra.mxu0 0.0
        %1700 = vmatpush.xpose.msra.mxu0 0.0
        %1701 = vmatpush.xpose.msra.mxu0 0.0
        %1702 = vmatpush.xpose.msra.mxu0 0.0
        %1703 = vmatpush.xpose.msra.mxu0 0.0
        %1704 = vmatpush.xpose.msra.mxu0 0.0
        %1705 = vmatpush.xpose.msra.mxu0 0.0
        %1706 = vmatpush.xpose.msra.mxu0 0.0
        %1707 = vmatpush.xpose.msra.mxu0 0.0
        %1708 = vmatpush.xpose.msra.mxu0 0.0
        %1709 = vmatpush.xpose.msra.mxu0 %v1692
        %1710 = vmatmul.f32.gmra.mxu0 %v1689
        %v1711 = vpop.f32.mrf.mxu0
        %v1712 = vadd.f32 0.0, %v1711
        %1713 = vdwg.mxu0
        %v1714 = vadd.f32 %v1693, %v1712
        %1715 = vst.msk [vmem:[#allocation2] sm:$0x3] %vm304, %v1714
        %s1716 = scalar_lea.vmem %s245, 62
        %v1717 = vld [vmem:[%s1716] sm:$0x3]
        %1719 = vset.pattern.permute.xlu0 0
        %1720 = vperm.xlu0 %1719, %v1717
        %v1721 = vpop.permute.xlu0 %1720
        %v1723 = vmul.f32 %v1721, %v259
        %v1724 = vadd.f32 %v1723, 1e-05
        %v1725 = vrsqrt.pop %v1724
        %v1726 = vmul.f32 %v1725, %v1724
        %v1727 = vmul.f32 %v1726, %v1725
        %v1728 = vmul.f32 0.5, %v1727
        %v1729 = vsub.f32 1.5, %v1728
        %v1730 = vmul.f32 %v1725, %v1729
        %v1731 = vmul.f32 %v1724, %v1730
        %vm1732 = vcmp.eq.f32.partialorder %v1724, inf
        %v1733 = vsel %vm1732, %v1724, %v1731
        %vm1734 = vcmp.eq.f32.partialorder %v1724, 0.0
        %v1735 = vand.u32 %v1724, 2147483648
        %v1736 = vsel %vm1734, %v1735, %v1733
        %s1737 = scalar_lea.vmem %s251, 124
        %v1738 = vld [vmem:[%s1737] sm:$0xf]
        %v1739 = vunpack.c.l.bf16 %v1738
        %v1740 = vld [vmem:[#allocation2] sm:$0x3]
        %1741 = vmatpush.xpose.msra.mxu0 0.0
        %1742 = vmatpush.xpose.msra.mxu0 0.0
        %1743 = vmatpush.xpose.msra.mxu0 0.0
        %1744 = vmatpush.xpose.msra.mxu0 0.0
        %1745 = vmatpush.xpose.msra.mxu0 0.0
        %1746 = vmatpush.xpose.msra.mxu0 0.0
        %1747 = vmatpush.xpose.msra.mxu0 0.0
        %1748 = vmatpush.xpose.msra.mxu0 0.0
        %1749 = vmatpush.xpose.msra.mxu0 0.0
        %1750 = vmatpush.xpose.msra.mxu0 0.0
        %1751 = vmatpush.xpose.msra.mxu0 0.0
        %1752 = vmatpush.xpose.msra.mxu0 0.0
        %1753 = vmatpush.xpose.msra.mxu0 0.0
        %1754 = vmatpush.xpose.msra.mxu0 0.0
        %1755 = vmatpush.xpose.msra.mxu0 0.0
        %1756 = vmatpush.xpose.msra.mxu0 %v1739
        %1757 = vmatmul.f32.gmra.mxu0 %v1736
        %v1758 = vpop.f32.mrf.mxu0
        %v1759 = vadd.f32 0.0, %v1758
        %1760 = vdwg.mxu0
        %v1761 = vadd.f32 %v1740, %v1759
        %1762 = vst.msk [vmem:[#allocation2] sm:$0x3] %vm304, %v1761
        %p1763 = scmp.eq.s32.totalorder %s21, 3
        // Predicated region
        $region41: #{classifier_forward.3} parent=35 // pred_check
          %p1764 = pneg %p1763
        $region42: #{classifier_forward.3} parent=35 // pred_check_branch
          %1766 = sbr.rel (%p1764) target = $region44
        $region43: #{classifier_forward.3} parent=35 // pred_region
          %vm1767 = vcmask 1041408
          %v1768 = vsel %vm1767, %v259, 0.0
          %1769 = vadd.xlane.f32.xlu0 %v1768
          %v1770 = vpop.xlane.xlu0 %1769
          %v1771 = vmul.f32 %v1770, %v1770
          %v1772 = vadd.f32 %v1771, 0.16384
          %v1773 = vrsqrt.pop %v1772
          %v1774 = vmul.f32 %v1773, %v1772
          %v1775 = vmul.f32 %v1774, %v1773
          %v1776 = vmul.f32 0.5, %v1775
          %v1777 = vsub.f32 1.5, %v1776
          %v1778 = vmul.f32 %v1773, %v1777
          %v1779 = vmul.f32 %v1772, %v1778
          %vm1780 = vcmp.eq.f32.partialorder %v1772, inf
          %v1781 = vsel %vm1780, %v1772, %v1779
          %vm1782 = vcmp.eq.f32.partialorder %v1772, 0.0
          %v1783 = vand.u32 %v1772, 2147483648
          %v1784 = vsel %vm1782, %v1783, %v1781
          %v1785 = vmax.f32 %v1784, 1e-12
          %v1786 = vrcp.pop %v1785
          %v1787 = vld [vmem:[#allocation2] sm:$0x3]
          %v1788 = vmul.f32 %v1787, %v1786
          %v1789 = vld [vmem:[%s3] sm:$0x1]
          %v1791 = vperm.slane %v1789, 0
          %v1793 = vadd.f32 %v1788, %v1791
          %1794 = vst.msk [vmem:[#allocation3] sm:$0x3] %vm304, %v1793
        $region44: #{classifier_forward.3} parent=35 // pred_fallthru
          _
        // Predicated region
        $region45: #{classifier_forward.3} parent=35 // pred_check
          %p1795 = pneg %p147
        $region46: #{classifier_forward.3} parent=35 // pred_check_branch
          %1797 = sbr.rel (%p1795) target = $region48
        $region47: #{classifier_forward.3} parent=35 // pred_region
          %1799 = vsyncadd [#allocation4], 0
          %s1800 = smul.addr %s20, 2
          %s1801 = scalar_lea.hbm %s4, %s1800
          %s1803 = sshll.u32 [#allocation3], 4
          %s1804 = int_to_ptr.vmem [resolvable:$true] %s1803
          %s1805 = sshll.u32 %s1801, 4
          %s1806 = int_to_ptr.hbm [resolvable:$true] %s1805
          %1808 = dma.vmem_to_hbm [thread:$0]  %s1804, 32, %s1806, [#allocation4]
        $region48: #{classifier_forward.3} parent=35 // pred_fallthru
          _
        // Predicated region
        $region49: #{classifier_forward.3} parent=35 // pred_check
          %p1809 = pneg %p147
        $region50: #{classifier_forward.3} parent=35 // pred_check_branch
          %1811 = sbr.rel (%p1809) target = $region52
        $region51: #{classifier_forward.3} parent=35 // pred_region
          %1813 = dma.done [#allocation4], 32
        $region52: #{classifier_forward.3} parent=35 // pred_fallthru
          _
      $region36: #{classifier_forward.3} parent=5 // pred_fallthru
        _
      %p1814 = scmp.le.s32.totalorder 2, %s11
      // Predicated region
      $region53: #{classifier_forward.3} parent=5 // pred_check
        %p1815 = pneg %p1814
      $region54: #{classifier_forward.3} parent=5 // pred_check_branch
        %1817 = sbr.rel (%p1815) target = $region56
      $region55: #{classifier_forward.3} parent=5 // pred_region
        %s1818 = ssub.s32 %s11, 2
      $region56: #{classifier_forward.3} parent=5 // pred_fallthru
        _
    $region6: #{classifier_forward.3} parent=1 // loop_footer
      %s15 = sadd.s32 1, %s11
    $region7: #{classifier_forward.3} parent=1 // loop_footer_branch
      %10 = sbr.rel target = $region3
    $region8: #{classifier_forward.3} parent=1 // loop_exit
      _
    %1819 = vsyncpa [#allocation4], 1
    %s1820 = scalar_lea.sflag [#allocation4], 1
    %1821 = vsyncpa %s1820, 1

</llo_original>
